<compile_context>
chip_gen: v7x
topology: tpu7x:2x2x1
jax: 0.10.0
libtpu: 0.0.40
codegen_flags: <defaults>
</compile_context>

<pallas_src>
import functools
import numpy as np
import jax
import jax.numpy as jnp
from jax.experimental import pallas as pl
from jax.experimental.pallas import tpu as pltpu

VMEM = pltpu.MemorySpace.VMEM
WEIGHT_DTYPE = jnp.bfloat16      # matmul-operand dtype (accumulation stays f32)
NUM_PROJ = 50                    # SWAE random projections used by the loss
PROJ_PAD = 64                    # padded projection count (lane-friendlier stores)


def _vspec():
    # Whole-array block, resident in VMEM (tensors here are tiny).
    return pl.BlockSpec(memory_space=VMEM)


# TODO(synk): PyTorch F.gelu defaults to the exact erf formulation; the tanh approximation is
# used in-kernel because erf is not guaranteed to lower through Mosaic on every build.
def _gelu(x):
    return jax.nn.gelu(x, approximate=True)


@functools.lru_cache(maxsize=None)
def _conv3x3_meta(B, H, W, mid):
    """Static per-resolution metadata for the flattened-row 3x3 conv.

    offsets[k] : row offset of tap k (k = ky*3 + kx) on the (B*H*W, C) slab.
    tap_mask   : (N, 9*mid) {0,1} mask, zero where tap k would cross an image-row /
                 image / batch boundary (implements padding=1 zero padding).
    """
    N = B * H * W
    r = np.arange(N)
    y = (r // W) % H
    x = r % W
    offsets = []
    mask = np.zeros((N, 9), np.float32)
    for k, (ky, kx) in enumerate([(a, b) for a in range(3) for b in range(3)]):
        dy, dx = ky - 1, kx - 1
        offsets.append(dy * W + dx)
        ok = (y + dy >= 0) & (y + dy < H) & (x + dx >= 0) & (x + dx < W)
        mask[:, k] = ok.astype(np.float32)
    mask = np.repeat(mask, mid, axis=1)            # (N, 9*mid), matches the tap-slab layout
    return tuple(offsets), jnp.asarray(mask)


# ----------------------------- Pallas kernels -----------------------------

def decblock_kernel(
        # per-call data
        x_ref, acts_ref, e_ref, projt_ref, maskb_ref, drop_ref, tapm_ref,
        # enc Block weights (c1 is split across the [x, acts] channel concat)
        ew1x_ref, ew1a_ref, eb1_ref, ew2_ref, eb2_ref, ew3_ref, eb3_ref, ew4_ref, eb4_ref,
        # prior Block weights (c4 restricted to its xpp output slice)
        pw1_ref, pb1_ref, pw2_ref, pb2_ref, pw3_ref, pb3_ref, pw4_ref, pb4_ref,
        # z_proj 1x1
        zw_ref, zb_ref,
        # resnet Block weights
        rw1_ref, rb1_ref, rw2_ref, rb2_ref, rw3_ref, rb3_ref, rw4_ref, rb4_ref,
        # outputs
        xnew_ref, zp_ref, ep_ref,
        # scratch
        pad_ref, taps_ref,
        *, use_3x3, offsets, nrows, mid, padr):
    f32 = jnp.float32

    def mm(a, w_ref, b_ref):
        # matmul in the weight dtype (bf16), f32 accumulation, f32 bias add.
        return jnp.dot(a.astype(w_ref.dtype), w_ref[...],
                       preferred_element_type=f32) + b_ref[...]

    if use_3x3:
        pad_ref[...] = jnp.zeros_like(pad_ref)   # zero halo rows once; interior rewritten per conv
        tapm = tapm_ref[...]                     # (N, 9*mid) boundary mask

    def conv_mid(h, w_ref, b_ref):
        """Block.c2 / Block.c3 applied to gelu(h): 3x3 conv (padding=1) or 1x1 conv."""
        gh = _gelu(h)                            # gelu applied once, not per tap
        if not use_3x3:
            return mm(gh, w_ref, b_ref)
        pad_ref[pl.ds(padr, nrows), :] = gh
        for k, off in enumerate(offsets):        # gather the 9 shifted taps from VMEM
            taps_ref[:, k * mid:(k + 1) * mid] = pad_ref[pl.ds(padr + off, nrows), :]
        # single (N, 9*mid) x (9*mid, mid) MXU contraction (boundary taps zeroed by the mask)
        return mm(taps_ref[...] * tapm, w_ref, b_ref)

    x = x_ref[...]
    gx = _gelu(x)

    # ------- enc Block: c1(gelu(concat[x, acts])) -> c2 -> c3 -> c4, keep only the z half -------
    h = (jnp.dot(gx.astype(ew1x_ref.dtype), ew1x_ref[...], preferred_element_type=f32)
         + jnp.dot(_gelu(acts_ref[...]).astype(ew1a_ref.dtype), ew1a_ref[...],
                   preferred_element_type=f32)
         + eb1_ref[...])
    h = conv_mid(h, ew2_ref, eb2_ref)
    h = conv_mid(h, ew3_ref, eb3_ref)
    z = mm(_gelu(h), ew4_ref, eb4_ref)                       # (N, zdim) == enc_out.chunk(2)[0]

    # ------- prior Block: only the xpp output slice of c4 is needed -------
    h = mm(gx, pw1_ref, pb1_ref)
    h = conv_mid(h, pw2_ref, pb2_ref)
    h = conv_mid(h, pw3_ref, pb3_ref)
    xpp = mm(_gelu(h), pw4_ref, pb4_ref)                     # (N, width)

    # ------- SWAE projections of z and the gaussian noise e -------
    p = projt_ref[...]                                       # (zdim, PROJ_PAD) f32
    zp_ref[...] = jnp.dot(z, p, preferred_element_type=f32)
    ep_ref[...] = jnp.dot(e_ref[...], p, preferred_element_type=f32)

    # ------- x = x + xpp + z_proj(z * sigmoid(mask) * drop) -------
    zm = z * jax.nn.sigmoid(maskb_ref[...]) * drop_ref[...]
    xr = x + xpp + mm(zm, zw_ref, zb_ref)

    # ------- resnet Block (residual=True) -------
    h = mm(_gelu(xr), rw1_ref, rb1_ref)
    h = conv_mid(h, rw2_ref, rb2_ref)
    h = conv_mid(h, rw3_ref, rb3_ref)
    xnew_ref[...] = xr + mm(_gelu(h), rw4_ref, rb4_ref)


def final_kernel(x_ref, g_ref, b_ref, o_ref):
    o_ref[...] = x_ref[...] * g_ref[...] + b_ref[...]


def final_apply(x, gain, bias):
    B, Hh, Ww, C = x.shape
    x2 = x.reshape(B * Hh * Ww, C)
    out = pl.pallas_call(final_kernel,
                         out_shape=jax.ShapeDtypeStruct(x2.shape, jnp.float32),
                         in_specs=[_vspec()] * 3, out_specs=_vspec())(x2, gain, bias)
    return out.reshape(B, Hh, Ww, C)


# ----------------------------- module plumbing (glue) -----------------------------

def parse_layer_string(s):
    layers = []
    for ss in s.split(','):
        if 'x' in ss:
            res, num = ss.split('x')
            layers += [(int(res), None)] * int(num)
        elif 'm' in ss:
            res, mixin = [int(a) for a in ss.split('m')]
            layers.append((res, mixin))
        elif 'd' in ss:
            res, down = [int(a) for a in ss.split('d')]
            layers.append((res, down))
        else:
            layers.append((int(ss), None))
    return layers


def get_width_settings(width, s):
    mapping = {}
    if s:
        for ss in s.split(','):
            k, v = ss.split(':')
            mapping[int(k)] = int(v)
    return lambda r: mapping.get(r, width)


def rand_projections(key, embedding_dim, num_samples=50):
    u = jax.random.normal(key, (num_samples, embedding_dim), jnp.float32)
    return u / jnp.linalg.norm(u, axis=1, keepdims=True)


def init_conv1x1(key, cin, cout, zero_w=False, scale=1.0):
    w = jax.random.normal(key, (cin, cout), jnp.float32) * (scale / np.sqrt(cin))
    if zero_w:
        w = jnp.zeros_like(w)
    return {'w': w.astype(WEIGHT_DTYPE), 'b': jnp.zeros((1, cout), jnp.float32)}


def init_conv3x3(key, cin, cout):
    # stored pre-flattened as (9*cin, cout) matching the in-kernel tap-slab layout (ky, kx, cin)
    w = jax.random.normal(key, (9 * cin, cout), jnp.float32) / np.sqrt(9 * cin)
    return {'w': w.astype(WEIGHT_DTYPE), 'b': jnp.zeros((1, cout), jnp.float32)}


def init_block(key, cin, mid, cout, use_3x3, zero_last=False, last_scale=1.0):
    ks = jax.random.split(key, 4)
    p = {'c1': init_conv1x1(ks[0], cin, mid)}
    if use_3x3:
        p['c2'] = init_conv3x3(ks[1], mid, mid)
        p['c3'] = init_conv3x3(ks[2], mid, mid)
    else:
        p['c2'] = init_conv1x1(ks[1], mid, mid)
        p['c3'] = init_conv1x1(ks[2], mid, mid)
    p['c4'] = init_conv1x1(ks[3], mid, cout, zero_w=zero_last, scale=last_scale)
    return p


def init_decblock(key, res, width, zdim, cond_width, n_blocks):
    use_3x3 = res > 2
    ks = jax.random.split(key, 4)
    return {
        'enc': init_block(ks[0], width * 2, cond_width, zdim * 2, use_3x3),
        'prior': init_block(ks[1], width, cond_width, zdim * 2 + width, use_3x3, zero_last=True),
        'z_proj': init_conv1x1(ks[2], zdim, width, scale=float(np.sqrt(1.0 / n_blocks))),
        'resnet': init_block(ks[3], width, cond_width, width, use_3x3,
                             last_scale=float(np.sqrt(1.0 / n_blocks))),
        'mask': jnp.full((1, res, res, zdim), -10.0, jnp.float32),
    }


def init_decoder_params(key, cfg):
    blocks = parse_layer_string(cfg['dec_blocks'])
    widths = get_width_settings(cfg['width'], cfg['custom_width_str'])
    n_blocks = len(blocks)
    resolutions = sorted({r for r, _ in blocks})
    cond = lambda r: int(widths(r) * cfg['bottleneck_multiple'])
    params = {
        'dec_blocks': [init_decblock(jax.random.fold_in(key, i), res, widths(res),
                                     cfg['zdim'], cond(res), n_blocks)
                       for i, (res, _) in enumerate(blocks)],
        'bias_xs': {res: jnp.zeros((1, res, res, widths(res)), jnp.float32)
                    for res in resolutions if res <= cfg['no_bias_above']},
        'gain': jnp.ones((1, cfg['width']), jnp.float32),
        'bias': jnp.zeros((1, cfg['width']), jnp.float32),
    }
    return params, blocks


def dec_block_forward(p, cfg, res, mixin, xs, acts_dict, drop, key):
    zdim = cfg['zdim']
    acts = acts_dict[res]
    x = xs.get(res)
    if x is None:
        x = jnp.zeros_like(acts)
    if x.shape[0] != acts.shape[0]:
        x = jnp.broadcast_to(x, acts.shape)
    if mixin is not None:
        f = res // mixin
        up = xs[mixin][..., :x.shape[-1]]
        up = jnp.repeat(jnp.repeat(up, f, axis=1), f, axis=2)   # nearest upsample
        x = x + up
    B, Hh, Ww, width = x.shape
    use_3x3 = res > 2
    N = B * Hh * Ww
    hw = Hh * Ww

    enc, prior, resnet, zproj = p['enc'], p['prior'], p['resnet'], p['z_proj']
    mid = resnet['c1']['w'].shape[1]
    assert enc['c1']['w'].shape[1] == mid and prior['c1']['w'].shape[1] == mid
    padr = Ww + 1
    offsets, tapm = _conv3x3_meta(B, Hh, Ww, mid)

    # --- per-call randomness / broadcast inputs (tiny, prepared in plain JAX) ---
    k_e, k_p = jax.random.split(key)
    e = jax.random.normal(k_e, (N, zdim), jnp.float32)
    proj = rand_projections(k_p, zdim, NUM_PROJ)                              # (50, zdim)
    projt = jnp.pad(jnp.transpose(proj), ((0, 0), (0, PROJ_PAD - NUM_PROJ)))  # (zdim, 64)
    maskb = jnp.broadcast_to(p['mask'], (B, Hh, Ww, zdim)).reshape(N, zdim)
    dropb = jnp.repeat(drop.astype(jnp.float32), hw)[:, None]                 # (N, 1)

    ew1 = enc['c1']['w']
    args = (x.reshape(N, width), acts.reshape(N, width), e, projt, maskb, dropb, tapm,
            ew1[:width], ew1[width:], enc['c1']['b'],
            enc['c2']['w'], enc['c2']['b'], enc['c3']['w'], enc['c3']['b'],
            enc['c4']['w'][:, :zdim], enc['c4']['b'][:, :zdim],
            prior['c1']['w'], prior['c1']['b'],
            prior['c2']['w'], prior['c2']['b'], prior['c3']['w'], prior['c3']['b'],
            prior['c4']['w'][:, 2 * zdim:], prior['c4']['b'][:, 2 * zdim:],
            zproj['w'], zproj['b'],
            resnet['c1']['w'], resnet['c1']['b'],
            resnet['c2']['w'], resnet['c2']['b'], resnet['c3']['w'], resnet['c3']['b'],
            resnet['c4']['w'], resnet['c4']['b'])

    kern = functools.partial(decblock_kernel, use_3x3=use_3x3, offsets=offsets,
                             nrows=N, mid=mid, padr=padr)
    # TODO(synk): whole-array VMEM residency is sized for this toy config; scaling B/res/width
    # (esp. on v7x's 64 MiB VMEM) needs a row-tiled grid with halo handling for the 3x3 taps.
    xnew2, zp, ep = pl.pallas_call(
        kern,
        out_shape=(jax.ShapeDtypeStruct((N, width), jnp.float32),
                   jax.ShapeDtypeStruct((N, PROJ_PAD), jnp.float32),
                   jax.ShapeDtypeStruct((N, PROJ_PAD), jnp.float32)),
        in_specs=[_vspec()] * len(args),
        out_specs=(_vspec(), _vspec(), _vspec()),
        scratch_shapes=[pltpu.VMEM((N + 2 * padr, mid), jnp.float32),   # zero-halo conv buffer
                        pltpu.VMEM((N, 9 * mid), jnp.float32)],         # packed 9-tap slab
    )(*args)

    # SWAE sliced-Wasserstein statistic.
    # TODO(synk): torch.sort along the batch axis has no Pallas/Mosaic lowering; done in plain JAX.
    zp3 = jnp.transpose(zp[:, :NUM_PROJ].reshape(B, hw, NUM_PROJ), (1, 0, 2))
    ep3 = jnp.transpose(ep[:, :NUM_PROJ].reshape(B, hw, NUM_PROJ), (1, 0, 2))
    swae = jnp.mean(jnp.abs(jnp.sort(zp3, axis=1) - jnp.sort(ep3, axis=1)) ** 2, axis=(1, 2))
    mask_loss = jnp.mean(jax.nn.sigmoid(p['mask']))

    xs = dict(xs)
    xs[res] = xnew2.reshape(B, Hh, Ww, width)
    return xs, {'swae': swae, 'mask_loss': mask_loss}


def decoder_forward(params, cfg, blocks, data, rng):
    acts = {r: jnp.transpose(a, (0, 2, 3, 1)).astype(jnp.float32)
            for r, a in data['activations'].items()}
    B = data['x'].shape[0]
    n_blocks = len(blocks)
    xs = dict(params['bias_xs'])
    k_drop, k_blk = jax.random.split(rng)
    drop_layer = jax.random.randint(k_drop, (B,), 0, n_blocks)
    stats = []
    for i, (res, mixin) in enumerate(blocks):
        drop = (i < drop_layer).astype(jnp.float32)
        xs, st = dec_block_forward(params['dec_blocks'][i], cfg, res, mixin, xs, acts,
                                   drop, jax.random.fold_in(k_blk, i))
        stats.append(st)
    y_nhwc = final_apply(xs[cfg['image_size']], params['gain'], params['bias'])
    out = dict(data)
    out['y'] = jnp.transpose(y_nhwc, (0, 3, 1, 2))   # back to NCHW like PyTorch
    out['stats'] = stats
    return out


if __name__ == "__main__":
    key = jax.random.PRNGKey(0)
    cfg = dict(width=16, zdim=8, bottleneck_multiple=0.25, dec_blocks="4x1,8m4,8x1",
               no_bias_above=64, image_size=8, custom_width_str='')
    params, blocks = init_decoder_params(jax.random.fold_in(key, 1), cfg)

    B = 2
    kx, ka4, ka8, krun = jax.random.split(jax.random.fold_in(key, 2), 4)
    data = {
        'x': jax.random.normal(kx, (B, 3, 8, 8), jnp.float32),                   # only len(x) used
        'activations': {4: jax.random.normal(ka4, (B, 16, 4, 4), jnp.float32),   # NCHW, like PyTorch
                        8: jax.random.normal(ka8, (B, 16, 8, 8), jnp.float32)},
    }

    out = decoder_forward(params, cfg, blocks, data, krun)
    jax.block_until_ready(out['y'])
    for st in out['stats']:
        jax.block_until_ready(st['swae'])
        jax.block_until_ready(st['mask_loss'])
    assert out['y'].shape == (B, cfg['width'], cfg['image_size'], cfg['image_size'])
    assert all(bool(jnp.all(jnp.isfinite(st['swae']))) for st in out['stats'])
    print("KERNEL_OK")
</pallas_src>

<mosaic_0001>
module attributes {stable_mosaic.version = 11 : i64} {
  func.func @decblock_kernel(%arg0: memref<32x16xf32, #tpu.memory_space<vmem>>, %arg1: memref<32x16xf32, #tpu.memory_space<vmem>>, %arg2: memref<32x8xf32, #tpu.memory_space<vmem>>, %arg3: memref<8x64xf32, #tpu.memory_space<vmem>>, %arg4: memref<32x8xf32, #tpu.memory_space<vmem>>, %arg5: memref<32x1xf32, #tpu.memory_space<vmem>>, %arg6: memref<32x36xf32, #tpu.memory_space<vmem>>, %arg7: memref<16x4xbf16, #tpu.memory_space<vmem>>, %arg8: memref<16x4xbf16, #tpu.memory_space<vmem>>, %arg9: memref<1x4xf32, #tpu.memory_space<vmem>>, %arg10: memref<36x4xbf16, #tpu.memory_space<vmem>>, %arg11: memref<1x4xf32, #tpu.memory_space<vmem>>, %arg12: memref<36x4xbf16, #tpu.memory_space<vmem>>, %arg13: memref<1x4xf32, #tpu.memory_space<vmem>>, %arg14: memref<4x8xbf16, #tpu.memory_space<vmem>>, %arg15: memref<1x8xf32, #tpu.memory_space<vmem>>, %arg16: memref<16x4xbf16, #tpu.memory_space<vmem>>, %arg17: memref<1x4xf32, #tpu.memory_space<vmem>>, %arg18: memref<36x4xbf16, #tpu.memory_space<vmem>>, %arg19: memref<1x4xf32, #tpu.memory_space<vmem>>, %arg20: memref<36x4xbf16, #tpu.memory_space<vmem>>, %arg21: memref<1x4xf32, #tpu.memory_space<vmem>>, %arg22: memref<4x16xbf16, #tpu.memory_space<vmem>>, %arg23: memref<1x16xf32, #tpu.memory_space<vmem>>, %arg24: memref<8x16xbf16, #tpu.memory_space<vmem>>, %arg25: memref<1x16xf32, #tpu.memory_space<vmem>>, %arg26: memref<16x4xbf16, #tpu.memory_space<vmem>>, %arg27: memref<1x4xf32, #tpu.memory_space<vmem>>, %arg28: memref<36x4xbf16, #tpu.memory_space<vmem>>, %arg29: memref<1x4xf32, #tpu.memory_space<vmem>>, %arg30: memref<36x4xbf16, #tpu.memory_space<vmem>>, %arg31: memref<1x4xf32, #tpu.memory_space<vmem>>, %arg32: memref<4x16xbf16, #tpu.memory_space<vmem>>, %arg33: memref<1x16xf32, #tpu.memory_space<vmem>>, %arg34: memref<32x16xf32, #tpu.memory_space<vmem>>, %arg35: memref<32x64xf32, #tpu.memory_space<vmem>>, %arg36: memref<32x64xf32, #tpu.memory_space<vmem>>, %arg37: memref<42x4xf32, #tpu.memory_space<vmem>>, %arg38: memref<32x36xf32, #tpu.memory_space<vmem>>) attributes {dimension_semantics = [], scalar_prefetch = 0 : i64, scratch_operands = 2 : i64, tpu.core_type = #tpu.core_type<tc>} {
    %cst = arith.constant 0.000000e+00 : f32
    %0 = vector.broadcast %cst : f32 to vector<42x4xf32>
    %c0 = arith.constant 0 : index
    %c0_0 = arith.constant 0 : index
    %1 = vector.load %arg37[%c0, %c0_0] : memref<42x4xf32, #tpu.memory_space<vmem>>, vector<42x4xf32>
    tpu.vector_store %arg37[%c0, %c0_0], %0 {strides = array<i32>} : memref<42x4xf32, #tpu.memory_space<vmem>>, vector<42x4xf32>,
    %c0_1 = arith.constant 0 : index
    %c0_2 = arith.constant 0 : index
    %2 = vector.load %arg6[%c0_1, %c0_2] : memref<32x36xf32, #tpu.memory_space<vmem>>, vector<32x36xf32>
    %c0_3 = arith.constant 0 : index
    %c0_4 = arith.constant 0 : index
    %3 = vector.load %arg0[%c0_3, %c0_4] : memref<32x16xf32, #tpu.memory_space<vmem>>, vector<32x16xf32>
    %4 = arith.mulf %3, %3 : vector<32x16xf32>
    %5 = arith.mulf %3, %4 : vector<32x16xf32>
    %cst_5 = arith.constant 4.471500e-02 : f32
    %6 = vector.broadcast %cst_5 : f32 to vector<32x16xf32>
    %7 = arith.mulf %6, %5 : vector<32x16xf32>
    %8 = arith.addf %3, %7 : vector<32x16xf32>
    %cst_6 = arith.constant 0.797884583 : f32
    %9 = vector.broadcast %cst_6 : f32 to vector<32x16xf32>
    %10 = arith.mulf %9, %8 : vector<32x16xf32>
    %11 = math.tanh %10 : vector<32x16xf32>
    %cst_7 = arith.constant 1.000000e+00 : f32
    %12 = vector.broadcast %cst_7 : f32 to vector<32x16xf32>
    %13 = arith.addf %12, %11 : vector<32x16xf32>
    %cst_8 = arith.constant 5.000000e-01 : f32
    %14 = vector.broadcast %cst_8 : f32 to vector<32x16xf32>
    %15 = arith.mulf %14, %13 : vector<32x16xf32>
    %16 = arith.mulf %3, %15 : vector<32x16xf32>
    %17 = arith.truncf %16 : vector<32x16xf32> to vector<32x16xbf16>
    %c0_9 = arith.constant 0 : index
    %c0_10 = arith.constant 0 : index
    %18 = vector.load %arg7[%c0_9, %c0_10] : memref<16x4xbf16, #tpu.memory_space<vmem>>, vector<16x4xbf16>
    %cst_11 = arith.constant dense<0.000000e+00> : vector<32x4xf32>
    %19 = tpu.matmul %17, %18, %cst_11 {dimension_numbers = #tpu.dot_dimension_numbers<[1], [0], [0], [1], [0, 0, 1, 1], [], []>} : vector<32x16xbf16>, vector<16x4xbf16>, vector<32x4xf32> -> vector<32x4xf32>
    %c0_12 = arith.constant 0 : index
    %c0_13 = arith.constant 0 : index
    %20 = vector.load %arg1[%c0_12, %c0_13] : memref<32x16xf32, #tpu.memory_space<vmem>>, vector<32x16xf32>
    %21 = arith.mulf %20, %20 : vector<32x16xf32>
    %22 = arith.mulf %20, %21 : vector<32x16xf32>
    %cst_14 = arith.constant 4.471500e-02 : f32
    %23 = vector.broadcast %cst_14 : f32 to vector<32x16xf32>
    %24 = arith.mulf %23, %22 : vector<32x16xf32>
    %25 = arith.addf %20, %24 : vector<32x16xf32>
    %cst_15 = arith.constant 0.797884583 : f32
    %26 = vector.broadcast %cst_15 : f32 to vector<32x16xf32>
    %27 = arith.mulf %26, %25 : vector<32x16xf32>
    %28 = math.tanh %27 : vector<32x16xf32>
    %cst_16 = arith.constant 1.000000e+00 : f32
    %29 = vector.broadcast %cst_16 : f32 to vector<32x16xf32>
    %30 = arith.addf %29, %28 : vector<32x16xf32>
    %cst_17 = arith.constant 5.000000e-01 : f32
    %31 = vector.broadcast %cst_17 : f32 to vector<32x16xf32>
    %32 = arith.mulf %31, %30 : vector<32x16xf32>
    %33 = arith.mulf %20, %32 : vector<32x16xf32>
    %34 = arith.truncf %33 : vector<32x16xf32> to vector<32x16xbf16>
    %c0_18 = arith.constant 0 : index
    %c0_19 = arith.constant 0 : index
    %35 = vector.load %arg8[%c0_18, %c0_19] : memref<16x4xbf16, #tpu.memory_space<vmem>>, vector<16x4xbf16>
    %cst_20 = arith.constant dense<0.000000e+00> : vector<32x4xf32>
    %36 = tpu.matmul %34, %35, %cst_20 {dimension_numbers = #tpu.dot_dimension_numbers<[1], [0], [0], [1], [0, 0, 1, 1], [], []>} : vector<32x16xbf16>, vector<16x4xbf16>, vector<32x4xf32> -> vector<32x4xf32>
    %37 = arith.addf %19, %36 : vector<32x4xf32>
    %c0_21 = arith.constant 0 : index
    %c0_22 = arith.constant 0 : index
    %38 = vector.load %arg9[%c0_21, %c0_22] : memref<1x4xf32, #tpu.memory_space<vmem>>, vector<1x4xf32>
    %39 = vector.broadcast %38 : vector<1x4xf32> to vector<32x4xf32>
    %40 = arith.addf %37, %39 : vector<32x4xf32>
    %41 = arith.mulf %40, %40 : vector<32x4xf32>
    %42 = arith.mulf %40, %41 : vector<32x4xf32>
    %cst_23 = arith.constant 4.471500e-02 : f32
    %43 = vector.broadcast %cst_23 : f32 to vector<32x4xf32>
    %44 = arith.mulf %43, %42 : vector<32x4xf32>
    %45 = arith.addf %40, %44 : vector<32x4xf32>
    %cst_24 = arith.constant 0.797884583 : f32
    %46 = vector.broadcast %cst_24 : f32 to vector<32x4xf32>
    %47 = arith.mulf %46, %45 : vector<32x4xf32>
    %48 = math.tanh %47 : vector<32x4xf32>
    %cst_25 = arith.constant 1.000000e+00 : f32
    %49 = vector.broadcast %cst_25 : f32 to vector<32x4xf32>
    %50 = arith.addf %49, %48 : vector<32x4xf32>
    %cst_26 = arith.constant 5.000000e-01 : f32
    %51 = vector.broadcast %cst_26 : f32 to vector<32x4xf32>
    %52 = arith.mulf %51, %50 : vector<32x4xf32>
    %53 = arith.mulf %40, %52 : vector<32x4xf32>
    %c5 = arith.constant 5 : index
    %c0_27 = arith.constant 0 : index
    %54 = vector.load %arg37[%c5, %c0_27] : memref<42x4xf32, #tpu.memory_space<vmem>>, vector<32x4xf32>
    tpu.vector_store %arg37[%c5, %c0_27], %53 {strides = array<i32>} : memref<42x4xf32, #tpu.memory_space<vmem>>, vector<32x4xf32>,
    %c0_28 = arith.constant 0 : index
    %c0_29 = arith.constant 0 : index
    %55 = vector.load %arg37[%c0_28, %c0_29] : memref<42x4xf32, #tpu.memory_space<vmem>>, vector<32x4xf32>
    %c0_30 = arith.constant 0 : index
    %c0_31 = arith.constant 0 : index
    %56 = vector.load %arg38[%c0_30, %c0_31] : memref<32x36xf32, #tpu.memory_space<vmem>>, vector<32x4xf32>
    tpu.vector_store %arg38[%c0_30, %c0_31], %55 {strides = array<i32>} : memref<32x36xf32, #tpu.memory_space<vmem>>, vector<32x4xf32>,
    %c1 = arith.constant 1 : index
    %c0_32 = arith.constant 0 : index
    %57 = vector.load %arg37[%c1, %c0_32] : memref<42x4xf32, #tpu.memory_space<vmem>>, vector<32x4xf32>
    %c0_33 = arith.constant 0 : index
    %c4 = arith.constant 4 : index
    %58 = vector.load %arg38[%c0_33, %c4] : memref<32x36xf32, #tpu.memory_space<vmem>>, vector<32x4xf32>
    tpu.vector_store %arg38[%c0_33, %c4], %57 {strides = array<i32>} : memref<32x36xf32, #tpu.memory_space<vmem>>, vector<32x4xf32>,
    %c2 = arith.constant 2 : index
    %c0_34 = arith.constant 0 : index
    %59 = vector.load %arg37[%c2, %c0_34] : memref<42x4xf32, #tpu.memory_space<vmem>>, vector<32x4xf32>
    %c0_35 = arith.constant 0 : index
    %c8 = arith.constant 8 : index
    %60 = vector.load %arg38[%c0_35, %c8] : memref<32x36xf32, #tpu.memory_space<vmem>>, vector<32x4xf32>
    tpu.vector_store %arg38[%c0_35, %c8], %59 {strides = array<i32>} : memref<32x36xf32, #tpu.memory_space<vmem>>, vector<32x4xf32>,
    %c4_36 = arith.constant 4 : index
    %c0_37 = arith.constant 0 : index
    %61 = vector.load %arg37[%c4_36, %c0_37] : memref<42x4xf32, #tpu.memory_space<vmem>>, vector<32x4xf32>
    %c0_38 = arith.constant 0 : index
    %c12 = arith.constant 12 : index
    %62 = vector.load %arg38[%c0_38, %c12] : memref<32x36xf32, #tpu.memory_space<vmem>>, vector<32x4xf32>
    tpu.vector_store %arg38[%c0_38, %c12], %61 {strides = array<i32>} : memref<32x36xf32, #tpu.memory_space<vmem>>, vector<32x4xf32>,
    %c5_39 = arith.constant 5 : index
    %c0_40 = arith.constant 0 : index
    %63 = vector.load %arg37[%c5_39, %c0_40] : memref<42x4xf32, #tpu.memory_space<vmem>>, vector<32x4xf32>
    %c0_41 = arith.constant 0 : index
    %c16 = arith.constant 16 : index
    %64 = vector.load %arg38[%c0_41, %c16] : memref<32x36xf32, #tpu.memory_space<vmem>>, vector<32x4xf32>
    tpu.vector_store %arg38[%c0_41, %c16], %63 {strides = array<i32>} : memref<32x36xf32, #tpu.memory_space<vmem>>, vector<32x4xf32>,
    %c6 = arith.constant 6 : index
    %c0_42 = arith.constant 0 : index
    %65 = vector.load %arg37[%c6, %c0_42] : memref<42x4xf32, #tpu.memory_space<vmem>>, vector<32x4xf32>
    %c0_43 = arith.constant 0 : index
    %c20 = arith.constant 20 : index
    %66 = vector.load %arg38[%c0_43, %c20] : memref<32x36xf32, #tpu.memory_space<vmem>>, vector<32x4xf32>
    tpu.vector_store %arg38[%c0_43, %c20], %65 {strides = array<i32>} : memref<32x36xf32, #tpu.memory_space<vmem>>, vector<32x4xf32>,
    %c8_44 = arith.constant 8 : index
    %c0_45 = arith.constant 0 : index
    %67 = vector.load %arg37[%c8_44, %c0_45] : memref<42x4xf32, #tpu.memory_space<vmem>>, vector<32x4xf32>
    %c0_46 = arith.constant 0 : index
    %c24 = arith.constant 24 : index
    %68 = vector.load %arg38[%c0_46, %c24] : memref<32x36xf32, #tpu.memory_space<vmem>>, vector<32x4xf32>
    tpu.vector_store %arg38[%c0_46, %c24], %67 {strides = array<i32>} : memref<32x36xf32, #tpu.memory_space<vmem>>, vector<32x4xf32>,
    %c9 = arith.constant 9 : index
    %c0_47 = arith.constant 0 : index
    %69 = vector.load %arg37[%c9, %c0_47] : memref<42x4xf32, #tpu.memory_space<vmem>>, vector<32x4xf32>
    %c0_48 = arith.constant 0 : index
    %c28 = arith.constant 28 : index
    %70 = vector.load %arg38[%c0_48, %c28] : memref<32x36xf32, #tpu.memory_space<vmem>>, vector<32x4xf32>
    tpu.vector_store %arg38[%c0_48, %c28], %69 {strides = array<i32>} : memref<32x36xf32, #tpu.memory_space<vmem>>, vector<32x4xf32>,
    %c10 = arith.constant 10 : index
    %c0_49 = arith.constant 0 : index
    %71 = vector.load %arg37[%c10, %c0_49] : memref<42x4xf32, #tpu.memory_space<vmem>>, vector<32x4xf32>
    %c0_50 = arith.constant 0 : index
    %c32 = arith.constant 32 : index
    %72 = vector.load %arg38[%c0_50, %c32] : memref<32x36xf32, #tpu.memory_space<vmem>>, vector<32x4xf32>
    tpu.vector_store %arg38[%c0_50, %c32], %71 {strides = array<i32>} : memref<32x36xf32, #tpu.memory_space<vmem>>, vector<32x4xf32>,
    %c0_51 = arith.constant 0 : index
    %c0_52 = arith.constant 0 : index
    %73 = vector.load %arg38[%c0_51, %c0_52] : memref<32x36xf32, #tpu.memory_space<vmem>>, vector<32x36xf32>
    %74 = arith.mulf %73, %2 : vector<32x36xf32>
    %75 = arith.truncf %74 : vector<32x36xf32> to vector<32x36xbf16>
    %c0_53 = arith.constant 0 : index
    %c0_54 = arith.constant 0 : index
    %76 = vector.load %arg10[%c0_53, %c0_54] : memref<36x4xbf16, #tpu.memory_space<vmem>>, vector<36x4xbf16>
    %cst_55 = arith.constant dense<0.000000e+00> : vector<32x4xf32>
    %77 = tpu.matmul %75, %76, %cst_55 {dimension_numbers = #tpu.dot_dimension_numbers<[1], [0], [0], [1], [0, 0, 1, 1], [], []>} : vector<32x36xbf16>, vector<36x4xbf16>, vector<32x4xf32> -> vector<32x4xf32>
    %c0_56 = arith.constant 0 : index
    %c0_57 = arith.constant 0 : index
    %78 = vector.load %arg11[%c0_56, %c0_57] : memref<1x4xf32, #tpu.memory_space<vmem>>, vector<1x4xf32>
    %79 = vector.broadcast %78 : vector<1x4xf32> to vector<32x4xf32>
    %80 = arith.addf %77, %79 : vector<32x4xf32>
    %81 = arith.mulf %80, %80 : vector<32x4xf32>
    %82 = arith.mulf %80, %81 : vector<32x4xf32>
    %cst_58 = arith.constant 4.471500e-02 : f32
    %83 = vector.broadcast %cst_58 : f32 to vector<32x4xf32>
    %84 = arith.mulf %83, %82 : vector<32x4xf32>
    %85 = arith.addf %80, %84 : vector<32x4xf32>
    %cst_59 = arith.constant 0.797884583 : f32
    %86 = vector.broadcast %cst_59 : f32 to vector<32x4xf32>
    %87 = arith.mulf %86, %85 : vector<32x4xf32>
    %88 = math.tanh %87 : vector<32x4xf32>
    %cst_60 = arith.constant 1.000000e+00 : f32
    %89 = vector.broadcast %cst_60 : f32 to vector<32x4xf32>
    %90 = arith.addf %89, %88 : vector<32x4xf32>
    %cst_61 = arith.constant 5.000000e-01 : f32
    %91 = vector.broadcast %cst_61 : f32 to vector<32x4xf32>
    %92 = arith.mulf %91, %90 : vector<32x4xf32>
    %93 = arith.mulf %80, %92 : vector<32x4xf32>
    %c5_62 = arith.constant 5 : index
    %c0_63 = arith.constant 0 : index
    %94 = vector.load %arg37[%c5_62, %c0_63] : memref<42x4xf32, #tpu.memory_space<vmem>>, vector<32x4xf32>
    tpu.vector_store %arg37[%c5_62, %c0_63], %93 {strides = array<i32>} : memref<42x4xf32, #tpu.memory_space<vmem>>, vector<32x4xf32>,
    %c0_64 = arith.constant 0 : index
    %c0_65 = arith.constant 0 : index
    %95 = vector.load %arg37[%c0_64, %c0_65] : memref<42x4xf32, #tpu.memory_space<vmem>>, vector<32x4xf32>
    %c0_66 = arith.constant 0 : index
    %c0_67 = arith.constant 0 : index
    %96 = vector.load %arg38[%c0_66, %c0_67] : memref<32x36xf32, #tpu.memory_space<vmem>>, vector<32x4xf32>
    tpu.vector_store %arg38[%c0_66, %c0_67], %95 {strides = array<i32>} : memref<32x36xf32, #tpu.memory_space<vmem>>, vector<32x4xf32>,
    %c1_68 = arith.constant 1 : index
    %c0_69 = arith.constant 0 : index
    %97 = vector.load %arg37[%c1_68, %c0_69] : memref<42x4xf32, #tpu.memory_space<vmem>>, vector<32x4xf32>
    %c0_70 = arith.constant 0 : index
    %c4_71 = arith.constant 4 : index
    %98 = vector.load %arg38[%c0_70, %c4_71] : memref<32x36xf32, #tpu.memory_space<vmem>>, vector<32x4xf32>
    tpu.vector_store %arg38[%c0_70, %c4_71], %97 {strides = array<i32>} : memref<32x36xf32, #tpu.memory_space<vmem>>, vector<32x4xf32>,
    %c2_72 = arith.constant 2 : index
    %c0_73 = arith.constant 0 : index
    %99 = vector.load %arg37[%c2_72, %c0_73] : memref<42x4xf32, #tpu.memory_space<vmem>>, vector<32x4xf32>
    %c0_74 = arith.constant 0 : index
    %c8_75 = arith.constant 8 : index
    %100 = vector.load %arg38[%c0_74, %c8_75] : memref<32x36xf32, #tpu.memory_space<vmem>>, vector<32x4xf32>
    tpu.vector_store %arg38[%c0_74, %c8_75], %99 {strides = array<i32>} : memref<32x36xf32, #tpu.memory_space<vmem>>, vector<32x4xf32>,
    %c4_76 = arith.constant 4 : index
    %c0_77 = arith.constant 0 : index
    %101 = vector.load %arg37[%c4_76, %c0_77] : memref<42x4xf32, #tpu.memory_space<vmem>>, vector<32x4xf32>
    %c0_78 = arith.constant 0 : index
    %c12_79 = arith.constant 12 : index
    %102 = vector.load %arg38[%c0_78, %c12_79] : memref<32x36xf32, #tpu.memory_space<vmem>>, vector<32x4xf32>
    tpu.vector_store %arg38[%c0_78, %c12_79], %101 {strides = array<i32>} : memref<32x36xf32, #tpu.memory_space<vmem>>, vector<32x4xf32>,
    %c5_80 = arith.constant 5 : index
    %c0_81 = arith.constant 0 : index
    %103 = vector.load %arg37[%c5_80, %c0_81] : memref<42x4xf32, #tpu.memory_space<vmem>>, vector<32x4xf32>
    %c0_82 = arith.constant 0 : index
    %c16_83 = arith.constant 16 : index
    %104 = vector.load %arg38[%c0_82, %c16_83] : memref<32x36xf32, #tpu.memory_space<vmem>>, vector<32x4xf32>
    tpu.vector_store %arg38[%c0_82, %c16_83], %103 {strides = array<i32>} : memref<32x36xf32, #tpu.memory_space<vmem>>, vector<32x4xf32>,
    %c6_84 = arith.constant 6 : index
    %c0_85 = arith.constant 0 : index
    %105 = vector.load %arg37[%c6_84, %c0_85] : memref<42x4xf32, #tpu.memory_space<vmem>>, vector<32x4xf32>
    %c0_86 = arith.constant 0 : index
    %c20_87 = arith.constant 20 : index
    %106 = vector.load %arg38[%c0_86, %c20_87] : memref<32x36xf32, #tpu.memory_space<vmem>>, vector<32x4xf32>
    tpu.vector_store %arg38[%c0_86, %c20_87], %105 {strides = array<i32>} : memref<32x36xf32, #tpu.memory_space<vmem>>, vector<32x4xf32>,
    %c8_88 = arith.constant 8 : index
    %c0_89 = arith.constant 0 : index
    %107 = vector.load %arg37[%c8_88, %c0_89] : memref<42x4xf32, #tpu.memory_space<vmem>>, vector<32x4xf32>
    %c0_90 = arith.constant 0 : index
    %c24_91 = arith.constant 24 : index
    %108 = vector.load %arg38[%c0_90, %c24_91] : memref<32x36xf32, #tpu.memory_space<vmem>>, vector<32x4xf32>
    tpu.vector_store %arg38[%c0_90, %c24_91], %107 {strides = array<i32>} : memref<32x36xf32, #tpu.memory_space<vmem>>, vector<32x4xf32>,
    %c9_92 = arith.constant 9 : index
    %c0_93 = arith.constant 0 : index
    %109 = vector.load %arg37[%c9_92, %c0_93] : memref<42x4xf32, #tpu.memory_space<vmem>>, vector<32x4xf32>
    %c0_94 = arith.constant 0 : index
    %c28_95 = arith.constant 28 : index
    %110 = vector.load %arg38[%c0_94, %c28_95] : memref<32x36xf32, #tpu.memory_space<vmem>>, vector<32x4xf32>
    tpu.vector_store %arg38[%c0_94, %c28_95], %109 {strides = array<i32>} : memref<32x36xf32, #tpu.memory_space<vmem>>, vector<32x4xf32>,
    %c10_96 = arith.constant 10 : index
    %c0_97 = arith.constant 0 : index
    %111 = vector.load %arg37[%c10_96, %c0_97] : memref<42x4xf32, #tpu.memory_space<vmem>>, vector<32x4xf32>
    %c0_98 = arith.constant 0 : index
    %c32_99 = arith.constant 32 : index
    %112 = vector.load %arg38[%c0_98, %c32_99] : memref<32x36xf32, #tpu.memory_space<vmem>>, vector<32x4xf32>
    tpu.vector_store %arg38[%c0_98, %c32_99], %111 {strides = array<i32>} : memref<32x36xf32, #tpu.memory_space<vmem>>, vector<32x4xf32>,
    %c0_100 = arith.constant 0 : index
    %c0_101 = arith.constant 0 : index
    %113 = vector.load %arg38[%c0_100, %c0_101] : memref<32x36xf32, #tpu.memory_space<vmem>>, vector<32x36xf32>
    %114 = arith.mulf %113, %2 : vector<32x36xf32>
    %115 = arith.truncf %114 : vector<32x36xf32> to vector<32x36xbf16>
    %c0_102 = arith.constant 0 : index
    %c0_103 = arith.constant 0 : index
    %116 = vector.load %arg12[%c0_102, %c0_103] : memref<36x4xbf16, #tpu.memory_space<vmem>>, vector<36x4xbf16>
    %cst_104 = arith.constant dense<0.000000e+00> : vector<32x4xf32>
    %117 = tpu.matmul %115, %116, %cst_104 {dimension_numbers = #tpu.dot_dimension_numbers<[1], [0], [0], [1], [0, 0, 1, 1], [], []>} : vector<32x36xbf16>, vector<36x4xbf16>, vector<32x4xf32> -> vector<32x4xf32>
    %c0_105 = arith.constant 0 : index
    %c0_106 = arith.constant 0 : index
    %118 = vector.load %arg13[%c0_105, %c0_106] : memref<1x4xf32, #tpu.memory_space<vmem>>, vector<1x4xf32>
    %119 = vector.broadcast %118 : vector<1x4xf32> to vector<32x4xf32>
    %120 = arith.addf %117, %119 : vector<32x4xf32>
    %121 = arith.mulf %120, %120 : vector<32x4xf32>
    %122 = arith.mulf %120, %121 : vector<32x4xf32>
    %cst_107 = arith.constant 4.471500e-02 : f32
    %123 = vector.broadcast %cst_107 : f32 to vector<32x4xf32>
    %124 = arith.mulf %123, %122 : vector<32x4xf32>
    %125 = arith.addf %120, %124 : vector<32x4xf32>
    %cst_108 = arith.constant 0.797884583 : f32
    %126 = vector.broadcast %cst_108 : f32 to vector<32x4xf32>
    %127 = arith.mulf %126, %125 : vector<32x4xf32>
    %128 = math.tanh %127 : vector<32x4xf32>
    %cst_109 = arith.constant 1.000000e+00 : f32
    %129 = vector.broadcast %cst_109 : f32 to vector<32x4xf32>
    %130 = arith.addf %129, %128 : vector<32x4xf32>
    %cst_110 = arith.constant 5.000000e-01 : f32
    %131 = vector.broadcast %cst_110 : f32 to vector<32x4xf32>
    %132 = arith.mulf %131, %130 : vector<32x4xf32>
    %133 = arith.mulf %120, %132 : vector<32x4xf32>
    %134 = arith.truncf %133 : vector<32x4xf32> to vector<32x4xbf16>
    %c0_111 = arith.constant 0 : index
    %c0_112 = arith.constant 0 : index
    %135 = vector.load %arg14[%c0_111, %c0_112] : memref<4x8xbf16, #tpu.memory_space<vmem>>, vector<4x8xbf16>
    %cst_113 = arith.constant dense<0.000000e+00> : vector<32x8xf32>
    %136 = tpu.matmul %134, %135, %cst_113 {dimension_numbers = #tpu.dot_dimension_numbers<[1], [0], [0], [1], [0, 0, 1, 1], [], []>} : vector<32x4xbf16>, vector<4x8xbf16>, vector<32x8xf32> -> vector<32x8xf32>
    %c0_114 = arith.constant 0 : index
    %c0_115 = arith.constant 0 : index
    %137 = vector.load %arg15[%c0_114, %c0_115] : memref<1x8xf32, #tpu.memory_space<vmem>>, vector<1x8xf32>
    %138 = vector.broadcast %137 : vector<1x8xf32> to vector<32x8xf32>
    %139 = arith.addf %136, %138 : vector<32x8xf32>
    %140 = arith.truncf %16 : vector<32x16xf32> to vector<32x16xbf16>
    %c0_116 = arith.constant 0 : index
    %c0_117 = arith.constant 0 : index
    %141 = vector.load %arg16[%c0_116, %c0_117] : memref<16x4xbf16, #tpu.memory_space<vmem>>, vector<16x4xbf16>
    %cst_118 = arith.constant dense<0.000000e+00> : vector<32x4xf32>
    %142 = tpu.matmul %140, %141, %cst_118 {dimension_numbers = #tpu.dot_dimension_numbers<[1], [0], [0], [1], [0, 0, 1, 1], [], []>} : vector<32x16xbf16>, vector<16x4xbf16>, vector<32x4xf32> -> vector<32x4xf32>
    %c0_119 = arith.constant 0 : index
    %c0_120 = arith.constant 0 : index
    %143 = vector.load %arg17[%c0_119, %c0_120] : memref<1x4xf32, #tpu.memory_space<vmem>>, vector<1x4xf32>
    %144 = vector.broadcast %143 : vector<1x4xf32> to vector<32x4xf32>
    %145 = arith.addf %142, %144 : vector<32x4xf32>
    %146 = arith.mulf %145, %145 : vector<32x4xf32>
    %147 = arith.mulf %145, %146 : vector<32x4xf32>
    %cst_121 = arith.constant 4.471500e-02 : f32
    %148 = vector.broadcast %cst_121 : f32 to vector<32x4xf32>
    %149 = arith.mulf %148, %147 : vector<32x4xf32>
    %150 = arith.addf %145, %149 : vector<32x4xf32>
    %cst_122 = arith.constant 0.797884583 : f32
    %151 = vector.broadcast %cst_122 : f32 to vector<32x4xf32>
    %152 = arith.mulf %151, %150 : vector<32x4xf32>
    %153 = math.tanh %152 : vector<32x4xf32>
    %cst_123 = arith.constant 1.000000e+00 : f32
    %154 = vector.broadcast %cst_123 : f32 to vector<32x4xf32>
    %155 = arith.addf %154, %153 : vector<32x4xf32>
    %cst_124 = arith.constant 5.000000e-01 : f32
    %156 = vector.broadcast %cst_124 : f32 to vector<32x4xf32>
    %157 = arith.mulf %156, %155 : vector<32x4xf32>
    %158 = arith.mulf %145, %157 : vector<32x4xf32>
    %c5_125 = arith.constant 5 : index
    %c0_126 = arith.constant 0 : index
    %159 = vector.load %arg37[%c5_125, %c0_126] : memref<42x4xf32, #tpu.memory_space<vmem>>, vector<32x4xf32>
    tpu.vector_store %arg37[%c5_125, %c0_126], %158 {strides = array<i32>} : memref<42x4xf32, #tpu.memory_space<vmem>>, vector<32x4xf32>,
    %c0_127 = arith.constant 0 : index
    %c0_128 = arith.constant 0 : index
    %160 = vector.load %arg37[%c0_127, %c0_128] : memref<42x4xf32, #tpu.memory_space<vmem>>, vector<32x4xf32>
    %c0_129 = arith.constant 0 : index
    %c0_130 = arith.constant 0 : index
    %161 = vector.load %arg38[%c0_129, %c0_130] : memref<32x36xf32, #tpu.memory_space<vmem>>, vector<32x4xf32>
    tpu.vector_store %arg38[%c0_129, %c0_130], %160 {strides = array<i32>} : memref<32x36xf32, #tpu.memory_space<vmem>>, vector<32x4xf32>,
    %c1_131 = arith.constant 1 : index
    %c0_132 = arith.constant 0 : index
    %162 = vector.load %arg37[%c1_131, %c0_132] : memref<42x4xf32, #tpu.memory_space<vmem>>, vector<32x4xf32>
    %c0_133 = arith.constant 0 : index
    %c4_134 = arith.constant 4 : index
    %163 = vector.load %arg38[%c0_133, %c4_134] : memref<32x36xf32, #tpu.memory_space<vmem>>, vector<32x4xf32>
    tpu.vector_store %arg38[%c0_133, %c4_134], %162 {strides = array<i32>} : memref<32x36xf32, #tpu.memory_space<vmem>>, vector<32x4xf32>,
    %c2_135 = arith.constant 2 : index
    %c0_136 = arith.constant 0 : index
    %164 = vector.load %arg37[%c2_135, %c0_136] : memref<42x4xf32, #tpu.memory_space<vmem>>, vector<32x4xf32>
    %c0_137 = arith.constant 0 : index
    %c8_138 = arith.constant 8 : index
    %165 = vector.load %arg38[%c0_137, %c8_138] : memref<32x36xf32, #tpu.memory_space<vmem>>, vector<32x4xf32>
    tpu.vector_store %arg38[%c0_137, %c8_138], %164 {strides = array<i32>} : memref<32x36xf32, #tpu.memory_space<vmem>>, vector<32x4xf32>,
    %c4_139 = arith.constant 4 : index
    %c0_140 = arith.constant 0 : index
    %166 = vector.load %arg37[%c4_139, %c0_140] : memref<42x4xf32, #tpu.memory_space<vmem>>, vector<32x4xf32>
    %c0_141 = arith.constant 0 : index
    %c12_142 = arith.constant 12 : index
    %167 = vector.load %arg38[%c0_141, %c12_142] : memref<32x36xf32, #tpu.memory_space<vmem>>, vector<32x4xf32>
    tpu.vector_store %arg38[%c0_141, %c12_142], %166 {strides = array<i32>} : memref<32x36xf32, #tpu.memory_space<vmem>>, vector<32x4xf32>,
    %c5_143 = arith.constant 5 : index
    %c0_144 = arith.constant 0 : index
    %168 = vector.load %arg37[%c5_143, %c0_144] : memref<42x4xf32, #tpu.memory_space<vmem>>, vector<32x4xf32>
    %c0_145 = arith.constant 0 : index
    %c16_146 = arith.constant 16 : index
    %169 = vector.load %arg38[%c0_145, %c16_146] : memref<32x36xf32, #tpu.memory_space<vmem>>, vector<32x4xf32>
    tpu.vector_store %arg38[%c0_145, %c16_146], %168 {strides = array<i32>} : memref<32x36xf32, #tpu.memory_space<vmem>>, vector<32x4xf32>,
    %c6_147 = arith.constant 6 : index
    %c0_148 = arith.constant 0 : index
    %170 = vector.load %arg37[%c6_147, %c0_148] : memref<42x4xf32, #tpu.memory_space<vmem>>, vector<32x4xf32>
    %c0_149 = arith.constant 0 : index
    %c20_150 = arith.constant 20 : index
    %171 = vector.load %arg38[%c0_149, %c20_150] : memref<32x36xf32, #tpu.memory_space<vmem>>, vector<32x4xf32>
    tpu.vector_store %arg38[%c0_149, %c20_150], %170 {strides = array<i32>} : memref<32x36xf32, #tpu.memory_space<vmem>>, vector<32x4xf32>,
    %c8_151 = arith.constant 8 : index
    %c0_152 = arith.constant 0 : index
    %172 = vector.load %arg37[%c8_151, %c0_152] : memref<42x4xf32, #tpu.memory_space<vmem>>, vector<32x4xf32>
    %c0_153 = arith.constant 0 : index
    %c24_154 = arith.constant 24 : index
    %173 = vector.load %arg38[%c0_153, %c24_154] : memref<32x36xf32, #tpu.memory_space<vmem>>, vector<32x4xf32>
    tpu.vector_store %arg38[%c0_153, %c24_154], %172 {strides = array<i32>} : memref<32x36xf32, #tpu.memory_space<vmem>>, vector<32x4xf32>,
    %c9_155 = arith.constant 9 : index
    %c0_156 = arith.constant 0 : index
    %174 = vector.load %arg37[%c9_155, %c0_156] : memref<42x4xf32, #tpu.memory_space<vmem>>, vector<32x4xf32>
    %c0_157 = arith.constant 0 : index
    %c28_158 = arith.constant 28 : index
    %175 = vector.load %arg38[%c0_157, %c28_158] : memref<32x36xf32, #tpu.memory_space<vmem>>, vector<32x4xf32>
    tpu.vector_store %arg38[%c0_157, %c28_158], %174 {strides = array<i32>} : memref<32x36xf32, #tpu.memory_space<vmem>>, vector<32x4xf32>,
    %c10_159 = arith.constant 10 : index
    %c0_160 = arith.constant 0 : index
    %176 = vector.load %arg37[%c10_159, %c0_160] : memref<42x4xf32, #tpu.memory_space<vmem>>, vector<32x4xf32>
    %c0_161 = arith.constant 0 : index
    %c32_162 = arith.constant 32 : index
    %177 = vector.load %arg38[%c0_161, %c32_162] : memref<32x36xf32, #tpu.memory_space<vmem>>, vector<32x4xf32>
    tpu.vector_store %arg38[%c0_161, %c32_162], %176 {strides = array<i32>} : memref<32x36xf32, #tpu.memory_space<vmem>>, vector<32x4xf32>,
    %c0_163 = arith.constant 0 : index
    %c0_164 = arith.constant 0 : index
    %178 = vector.load %arg38[%c0_163, %c0_164] : memref<32x36xf32, #tpu.memory_space<vmem>>, vector<32x36xf32>
    %179 = arith.mulf %178, %2 : vector<32x36xf32>
    %180 = arith.truncf %179 : vector<32x36xf32> to vector<32x36xbf16>
    %c0_165 = arith.constant 0 : index
    %c0_166 = arith.constant 0 : index
    %181 = vector.load %arg18[%c0_165, %c0_166] : memref<36x4xbf16, #tpu.memory_space<vmem>>, vector<36x4xbf16>
    %cst_167 = arith.constant dense<0.000000e+00> : vector<32x4xf32>
    %182 = tpu.matmul %180, %181, %cst_167 {dimension_numbers = #tpu.dot_dimension_numbers<[1], [0], [0], [1], [0, 0, 1, 1], [], []>} : vector<32x36xbf16>, vector<36x4xbf16>, vector<32x4xf32> -> vector<32x4xf32>
    %c0_168 = arith.constant 0 : index
    %c0_169 = arith.constant 0 : index
    %183 = vector.load %arg19[%c0_168, %c0_169] : memref<1x4xf32, #tpu.memory_space<vmem>>, vector<1x4xf32>
    %184 = vector.broadcast %183 : vector<1x4xf32> to vector<32x4xf32>
    %185 = arith.addf %182, %184 : vector<32x4xf32>
    %186 = arith.mulf %185, %185 : vector<32x4xf32>
    %187 = arith.mulf %185, %186 : vector<32x4xf32>
    %cst_170 = arith.constant 4.471500e-02 : f32
    %188 = vector.broadcast %cst_170 : f32 to vector<32x4xf32>
    %189 = arith.mulf %188, %187 : vector<32x4xf32>
    %190 = arith.addf %185, %189 : vector<32x4xf32>
    %cst_171 = arith.constant 0.797884583 : f32
    %191 = vector.broadcast %cst_171 : f32 to vector<32x4xf32>
    %192 = arith.mulf %191, %190 : vector<32x4xf32>
    %193 = math.tanh %192 : vector<32x4xf32>
    %cst_172 = arith.constant 1.000000e+00 : f32
    %194 = vector.broadcast %cst_172 : f32 to vector<32x4xf32>
    %195 = arith.addf %194, %193 : vector<32x4xf32>
    %cst_173 = arith.constant 5.000000e-01 : f32
    %196 = vector.broadcast %cst_173 : f32 to vector<32x4xf32>
    %197 = arith.mulf %196, %195 : vector<32x4xf32>
    %198 = arith.mulf %185, %197 : vector<32x4xf32>
    %c5_174 = arith.constant 5 : index
    %c0_175 = arith.constant 0 : index
    %199 = vector.load %arg37[%c5_174, %c0_175] : memref<42x4xf32, #tpu.memory_space<vmem>>, vector<32x4xf32>
    tpu.vector_store %arg37[%c5_174, %c0_175], %198 {strides = array<i32>} : memref<42x4xf32, #tpu.memory_space<vmem>>, vector<32x4xf32>,
    %c0_176 = arith.constant 0 : index
    %c0_177 = arith.constant 0 : index
    %200 = vector.load %arg37[%c0_176, %c0_177] : memref<42x4xf32, #tpu.memory_space<vmem>>, vector<32x4xf32>
    %c0_178 = arith.constant 0 : index
    %c0_179 = arith.constant 0 : index
    %201 = vector.load %arg38[%c0_178, %c0_179] : memref<32x36xf32, #tpu.memory_space<vmem>>, vector<32x4xf32>
    tpu.vector_store %arg38[%c0_178, %c0_179], %200 {strides = array<i32>} : memref<32x36xf32, #tpu.memory_space<vmem>>, vector<32x4xf32>,
    %c1_180 = arith.constant 1 : index
    %c0_181 = arith.constant 0 : index
    %202 = vector.load %arg37[%c1_180, %c0_181] : memref<42x4xf32, #tpu.memory_space<vmem>>, vector<32x4xf32>
    %c0_182 = arith.constant 0 : index
    %c4_183 = arith.constant 4 : index
    %203 = vector.load %arg38[%c0_182, %c4_183] : memref<32x36xf32, #tpu.memory_space<vmem>>, vector<32x4xf32>
    tpu.vector_store %arg38[%c0_182, %c4_183], %202 {strides = array<i32>} : memref<32x36xf32, #tpu.memory_space<vmem>>, vector<32x4xf32>,
    %c2_184 = arith.constant 2 : index
    %c0_185 = arith.constant 0 : index
    %204 = vector.load %arg37[%c2_184, %c0_185] : memref<42x4xf32, #tpu.memory_space<vmem>>, vector<32x4xf32>
    %c0_186 = arith.constant 0 : index
    %c8_187 = arith.constant 8 : index
    %205 = vector.load %arg38[%c0_186, %c8_187] : memref<32x36xf32, #tpu.memory_space<vmem>>, vector<32x4xf32>
    tpu.vector_store %arg38[%c0_186, %c8_187], %204 {strides = array<i32>} : memref<32x36xf32, #tpu.memory_space<vmem>>, vector<32x4xf32>,
    %c4_188 = arith.constant 4 : index
    %c0_189 = arith.constant 0 : index
    %206 = vector.load %arg37[%c4_188, %c0_189] : memref<42x4xf32, #tpu.memory_space<vmem>>, vector<32x4xf32>
    %c0_190 = arith.constant 0 : index
    %c12_191 = arith.constant 12 : index
    %207 = vector.load %arg38[%c0_190, %c12_191] : memref<32x36xf32, #tpu.memory_space<vmem>>, vector<32x4xf32>
    tpu.vector_store %arg38[%c0_190, %c12_191], %206 {strides = array<i32>} : memref<32x36xf32, #tpu.memory_space<vmem>>, vector<32x4xf32>,
    %c5_192 = arith.constant 5 : index
    %c0_193 = arith.constant 0 : index
    %208 = vector.load %arg37[%c5_192, %c0_193] : memref<42x4xf32, #tpu.memory_space<vmem>>, vector<32x4xf32>
    %c0_194 = arith.constant 0 : index
    %c16_195 = arith.constant 16 : index
    %209 = vector.load %arg38[%c0_194, %c16_195] : memref<32x36xf32, #tpu.memory_space<vmem>>, vector<32x4xf32>
    tpu.vector_store %arg38[%c0_194, %c16_195], %208 {strides = array<i32>} : memref<32x36xf32, #tpu.memory_space<vmem>>, vector<32x4xf32>,
    %c6_196 = arith.constant 6 : index
    %c0_197 = arith.constant 0 : index
    %210 = vector.load %arg37[%c6_196, %c0_197] : memref<42x4xf32, #tpu.memory_space<vmem>>, vector<32x4xf32>
    %c0_198 = arith.constant 0 : index
    %c20_199 = arith.constant 20 : index
    %211 = vector.load %arg38[%c0_198, %c20_199] : memref<32x36xf32, #tpu.memory_space<vmem>>, vector<32x4xf32>
    tpu.vector_store %arg38[%c0_198, %c20_199], %210 {strides = array<i32>} : memref<32x36xf32, #tpu.memory_space<vmem>>, vector<32x4xf32>,
    %c8_200 = arith.constant 8 : index
    %c0_201 = arith.constant 0 : index
    %212 = vector.load %arg37[%c8_200, %c0_201] : memref<42x4xf32, #tpu.memory_space<vmem>>, vector<32x4xf32>
    %c0_202 = arith.constant 0 : index
    %c24_203 = arith.constant 24 : index
    %213 = vector.load %arg38[%c0_202, %c24_203] : memref<32x36xf32, #tpu.memory_space<vmem>>, vector<32x4xf32>
    tpu.vector_store %arg38[%c0_202, %c24_203], %212 {strides = array<i32>} : memref<32x36xf32, #tpu.memory_space<vmem>>, vector<32x4xf32>,
    %c9_204 = arith.constant 9 : index
    %c0_205 = arith.constant 0 : index
    %214 = vector.load %arg37[%c9_204, %c0_205] : memref<42x4xf32, #tpu.memory_space<vmem>>, vector<32x4xf32>
    %c0_206 = arith.constant 0 : index
    %c28_207 = arith.constant 28 : index
    %215 = vector.load %arg38[%c0_206, %c28_207] : memref<32x36xf32, #tpu.memory_space<vmem>>, vector<32x4xf32>
    tpu.vector_store %arg38[%c0_206, %c28_207], %214 {strides = array<i32>} : memref<32x36xf32, #tpu.memory_space<vmem>>, vector<32x4xf32>,
    %c10_208 = arith.constant 10 : index
    %c0_209 = arith.constant 0 : index
    %216 = vector.load %arg37[%c10_208, %c0_209] : memref<42x4xf32, #tpu.memory_space<vmem>>, vector<32x4xf32>
    %c0_210 = arith.constant 0 : index
    %c32_211 = arith.constant 32 : index
    %217 = vector.load %arg38[%c0_210, %c32_211] : memref<32x36xf32, #tpu.memory_space<vmem>>, vector<32x4xf32>
    tpu.vector_store %arg38[%c0_210, %c32_211], %216 {strides = array<i32>} : memref<32x36xf32, #tpu.memory_space<vmem>>, vector<32x4xf32>,
    %c0_212 = arith.constant 0 : index
    %c0_213 = arith.constant 0 : index
    %218 = vector.load %arg38[%c0_212, %c0_213] : memref<32x36xf32, #tpu.memory_space<vmem>>, vector<32x36xf32>
    %219 = arith.mulf %218, %2 : vector<32x36xf32>
    %220 = arith.truncf %219 : vector<32x36xf32> to vector<32x36xbf16>
    %c0_214 = arith.constant 0 : index
    %c0_215 = arith.constant 0 : index
    %221 = vector.load %arg20[%c0_214, %c0_215] : memref<36x4xbf16, #tpu.memory_space<vmem>>, vector<36x4xbf16>
    %cst_216 = arith.constant dense<0.000000e+00> : vector<32x4xf32>
    %222 = tpu.matmul %220, %221, %cst_216 {dimension_numbers = #tpu.dot_dimension_numbers<[1], [0], [0], [1], [0, 0, 1, 1], [], []>} : vector<32x36xbf16>, vector<36x4xbf16>, vector<32x4xf32> -> vector<32x4xf32>
    %c0_217 = arith.constant 0 : index
    %c0_218 = arith.constant 0 : index
    %223 = vector.load %arg21[%c0_217, %c0_218] : memref<1x4xf32, #tpu.memory_space<vmem>>, vector<1x4xf32>
    %224 = vector.broadcast %223 : vector<1x4xf32> to vector<32x4xf32>
    %225 = arith.addf %222, %224 : vector<32x4xf32>
    %226 = arith.mulf %225, %225 : vector<32x4xf32>
    %227 = arith.mulf %225, %226 : vector<32x4xf32>
    %cst_219 = arith.constant 4.471500e-02 : f32
    %228 = vector.broadcast %cst_219 : f32 to vector<32x4xf32>
    %229 = arith.mulf %228, %227 : vector<32x4xf32>
    %230 = arith.addf %225, %229 : vector<32x4xf32>
    %cst_220 = arith.constant 0.797884583 : f32
    %231 = vector.broadcast %cst_220 : f32 to vector<32x4xf32>
    %232 = arith.mulf %231, %230 : vector<32x4xf32>
    %233 = math.tanh %232 : vector<32x4xf32>
    %cst_221 = arith.constant 1.000000e+00 : f32
    %234 = vector.broadcast %cst_221 : f32 to vector<32x4xf32>
    %235 = arith.addf %234, %233 : vector<32x4xf32>
    %cst_222 = arith.constant 5.000000e-01 : f32
    %236 = vector.broadcast %cst_222 : f32 to vector<32x4xf32>
    %237 = arith.mulf %236, %235 : vector<32x4xf32>
    %238 = arith.mulf %225, %237 : vector<32x4xf32>
    %239 = arith.truncf %238 : vector<32x4xf32> to vector<32x4xbf16>
    %c0_223 = arith.constant 0 : index
    %c0_224 = arith.constant 0 : index
    %240 = vector.load %arg22[%c0_223, %c0_224] : memref<4x16xbf16, #tpu.memory_space<vmem>>, vector<4x16xbf16>
    %cst_225 = arith.constant dense<0.000000e+00> : vector<32x16xf32>
    %241 = tpu.matmul %239, %240, %cst_225 {dimension_numbers = #tpu.dot_dimension_numbers<[1], [0], [0], [1], [0, 0, 1, 1], [], []>} : vector<32x4xbf16>, vector<4x16xbf16>, vector<32x16xf32> -> vector<32x16xf32>
    %c0_226 = arith.constant 0 : index
    %c0_227 = arith.constant 0 : index
    %242 = vector.load %arg23[%c0_226, %c0_227] : memref<1x16xf32, #tpu.memory_space<vmem>>, vector<1x16xf32>
    %243 = vector.broadcast %242 : vector<1x16xf32> to vector<32x16xf32>
    %244 = arith.addf %241, %243 : vector<32x16xf32>
    %c0_228 = arith.constant 0 : index
    %c0_229 = arith.constant 0 : index
    %245 = vector.load %arg3[%c0_228, %c0_229] : memref<8x64xf32, #tpu.memory_space<vmem>>, vector<8x64xf32>
    %cst_230 = arith.constant dense<0.000000e+00> : vector<32x64xf32>
    %246 = tpu.matmul %139, %245, %cst_230 {dimension_numbers = #tpu.dot_dimension_numbers<[1], [0], [0], [1], [0, 0, 1, 1], [], []>} : vector<32x8xf32>, vector<8x64xf32>, vector<32x64xf32> -> vector<32x64xf32>
    %c0_231 = arith.constant 0 : index
    %c0_232 = arith.constant 0 : index
    %247 = vector.load %arg35[%c0_231, %c0_232] : memref<32x64xf32, #tpu.memory_space<vmem>>, vector<32x64xf32>
    tpu.vector_store %arg35[%c0_231, %c0_232], %246 {strides = array<i32>} : memref<32x64xf32, #tpu.memory_space<vmem>>, vector<32x64xf32>,
    %c0_233 = arith.constant 0 : index
    %c0_234 = arith.constant 0 : index
    %248 = vector.load %arg2[%c0_233, %c0_234] : memref<32x8xf32, #tpu.memory_space<vmem>>, vector<32x8xf32>
    %cst_235 = arith.constant dense<0.000000e+00> : vector<32x64xf32>
    %249 = tpu.matmul %248, %245, %cst_235 {dimension_numbers = #tpu.dot_dimension_numbers<[1], [0], [0], [1], [0, 0, 1, 1], [], []>} : vector<32x8xf32>, vector<8x64xf32>, vector<32x64xf32> -> vector<32x64xf32>
    %c0_236 = arith.constant 0 : index
    %c0_237 = arith.constant 0 : index
    %250 = vector.load %arg36[%c0_236, %c0_237] : memref<32x64xf32, #tpu.memory_space<vmem>>, vector<32x64xf32>
    tpu.vector_store %arg36[%c0_236, %c0_237], %249 {strides = array<i32>} : memref<32x64xf32, #tpu.memory_space<vmem>>, vector<32x64xf32>,
    %c0_238 = arith.constant 0 : index
    %c0_239 = arith.constant 0 : index
    %251 = vector.load %arg4[%c0_238, %c0_239] : memref<32x8xf32, #tpu.memory_space<vmem>>, vector<32x8xf32>
    %252 = arith.negf %251 : vector<32x8xf32>
    %253 = math.exp %252 : vector<32x8xf32>
    %cst_240 = arith.constant 1.000000e+00 : f32
    %254 = vector.broadcast %cst_240 : f32 to vector<32x8xf32>
    %255 = arith.addf %254, %253 : vector<32x8xf32>
    %256 = arith.divf %254, %255 : vector<32x8xf32>
    %257 = arith.mulf %139, %256 : vector<32x8xf32>
    %c0_241 = arith.constant 0 : index
    %c0_242 = arith.constant 0 : index
    %258 = vector.load %arg5[%c0_241, %c0_242] : memref<32x1xf32, #tpu.memory_space<vmem>>, vector<32x1xf32>
    %259 = vector.broadcast %258 : vector<32x1xf32> to vector<32x8xf32>
    %260 = arith.mulf %257, %259 : vector<32x8xf32>
    %261 = arith.addf %3, %244 : vector<32x16xf32>
    %262 = arith.truncf %260 : vector<32x8xf32> to vector<32x8xbf16>
    %c0_243 = arith.constant 0 : index
    %c0_244 = arith.constant 0 : index
    %263 = vector.load %arg24[%c0_243, %c0_244] : memref<8x16xbf16, #tpu.memory_space<vmem>>, vector<8x16xbf16>
    %cst_245 = arith.constant dense<0.000000e+00> : vector<32x16xf32>
    %264 = tpu.matmul %262, %263, %cst_245 {dimension_numbers = #tpu.dot_dimension_numbers<[1], [0], [0], [1], [0, 0, 1, 1], [], []>} : vector<32x8xbf16>, vector<8x16xbf16>, vector<32x16xf32> -> vector<32x16xf32>
    %c0_246 = arith.constant 0 : index
    %c0_247 = arith.constant 0 : index
    %265 = vector.load %arg25[%c0_246, %c0_247] : memref<1x16xf32, #tpu.memory_space<vmem>>, vector<1x16xf32>
    %266 = vector.broadcast %265 : vector<1x16xf32> to vector<32x16xf32>
    %267 = arith.addf %264, %266 : vector<32x16xf32>
    %268 = arith.addf %261, %267 : vector<32x16xf32>
    %269 = arith.mulf %268, %268 : vector<32x16xf32>
    %270 = arith.mulf %268, %269 : vector<32x16xf32>
    %cst_248 = arith.constant 4.471500e-02 : f32
    %271 = vector.broadcast %cst_248 : f32 to vector<32x16xf32>
    %272 = arith.mulf %271, %270 : vector<32x16xf32>
    %273 = arith.addf %268, %272 : vector<32x16xf32>
    %cst_249 = arith.constant 0.797884583 : f32
    %274 = vector.broadcast %cst_249 : f32 to vector<32x16xf32>
    %275 = arith.mulf %274, %273 : vector<32x16xf32>
    %276 = math.tanh %275 : vector<32x16xf32>
    %cst_250 = arith.constant 1.000000e+00 : f32
    %277 = vector.broadcast %cst_250 : f32 to vector<32x16xf32>
    %278 = arith.addf %277, %276 : vector<32x16xf32>
    %cst_251 = arith.constant 5.000000e-01 : f32
    %279 = vector.broadcast %cst_251 : f32 to vector<32x16xf32>
    %280 = arith.mulf %279, %278 : vector<32x16xf32>
    %281 = arith.mulf %268, %280 : vector<32x16xf32>
    %282 = arith.truncf %281 : vector<32x16xf32> to vector<32x16xbf16>
    %c0_252 = arith.constant 0 : index
    %c0_253 = arith.constant 0 : index
    %283 = vector.load %arg26[%c0_252, %c0_253] : memref<16x4xbf16, #tpu.memory_space<vmem>>, vector<16x4xbf16>
    %cst_254 = arith.constant dense<0.000000e+00> : vector<32x4xf32>
    %284 = tpu.matmul %282, %283, %cst_254 {dimension_numbers = #tpu.dot_dimension_numbers<[1], [0], [0], [1], [0, 0, 1, 1], [], []>} : vector<32x16xbf16>, vector<16x4xbf16>, vector<32x4xf32> -> vector<32x4xf32>
    %c0_255 = arith.constant 0 : index
    %c0_256 = arith.constant 0 : index
    %285 = vector.load %arg27[%c0_255, %c0_256] : memref<1x4xf32, #tpu.memory_space<vmem>>, vector<1x4xf32>
    %286 = vector.broadcast %285 : vector<1x4xf32> to vector<32x4xf32>
    %287 = arith.addf %284, %286 : vector<32x4xf32>
    %288 = arith.mulf %287, %287 : vector<32x4xf32>
    %289 = arith.mulf %287, %288 : vector<32x4xf32>
    %cst_257 = arith.constant 4.471500e-02 : f32
    %290 = vector.broadcast %cst_257 : f32 to vector<32x4xf32>
    %291 = arith.mulf %290, %289 : vector<32x4xf32>
    %292 = arith.addf %287, %291 : vector<32x4xf32>
    %cst_258 = arith.constant 0.797884583 : f32
    %293 = vector.broadcast %cst_258 : f32 to vector<32x4xf32>
    %294 = arith.mulf %293, %292 : vector<32x4xf32>
    %295 = math.tanh %294 : vector<32x4xf32>
    %cst_259 = arith.constant 1.000000e+00 : f32
    %296 = vector.broadcast %cst_259 : f32 to vector<32x4xf32>
    %297 = arith.addf %296, %295 : vector<32x4xf32>
    %cst_260 = arith.constant 5.000000e-01 : f32
    %298 = vector.broadcast %cst_260 : f32 to vector<32x4xf32>
    %299 = arith.mulf %298, %297 : vector<32x4xf32>
    %300 = arith.mulf %287, %299 : vector<32x4xf32>
    %c5_261 = arith.constant 5 : index
    %c0_262 = arith.constant 0 : index
    %301 = vector.load %arg37[%c5_261, %c0_262] : memref<42x4xf32, #tpu.memory_space<vmem>>, vector<32x4xf32>
    tpu.vector_store %arg37[%c5_261, %c0_262], %300 {strides = array<i32>} : memref<42x4xf32, #tpu.memory_space<vmem>>, vector<32x4xf32>,
    %c0_263 = arith.constant 0 : index
    %c0_264 = arith.constant 0 : index
    %302 = vector.load %arg37[%c0_263, %c0_264] : memref<42x4xf32, #tpu.memory_space<vmem>>, vector<32x4xf32>
    %c0_265 = arith.constant 0 : index
    %c0_266 = arith.constant 0 : index
    %303 = vector.load %arg38[%c0_265, %c0_266] : memref<32x36xf32, #tpu.memory_space<vmem>>, vector<32x4xf32>
    tpu.vector_store %arg38[%c0_265, %c0_266], %302 {strides = array<i32>} : memref<32x36xf32, #tpu.memory_space<vmem>>, vector<32x4xf32>,
    %c1_267 = arith.constant 1 : index
    %c0_268 = arith.constant 0 : index
    %304 = vector.load %arg37[%c1_267, %c0_268] : memref<42x4xf32, #tpu.memory_space<vmem>>, vector<32x4xf32>
    %c0_269 = arith.constant 0 : index
    %c4_270 = arith.constant 4 : index
    %305 = vector.load %arg38[%c0_269, %c4_270] : memref<32x36xf32, #tpu.memory_space<vmem>>, vector<32x4xf32>
    tpu.vector_store %arg38[%c0_269, %c4_270], %304 {strides = array<i32>} : memref<32x36xf32, #tpu.memory_space<vmem>>, vector<32x4xf32>,
    %c2_271 = arith.constant 2 : index
    %c0_272 = arith.constant 0 : index
    %306 = vector.load %arg37[%c2_271, %c0_272] : memref<42x4xf32, #tpu.memory_space<vmem>>, vector<32x4xf32>
    %c0_273 = arith.constant 0 : index
    %c8_274 = arith.constant 8 : index
    %307 = vector.load %arg38[%c0_273, %c8_274] : memref<32x36xf32, #tpu.memory_space<vmem>>, vector<32x4xf32>
    tpu.vector_store %arg38[%c0_273, %c8_274], %306 {strides = array<i32>} : memref<32x36xf32, #tpu.memory_space<vmem>>, vector<32x4xf32>,
    %c4_275 = arith.constant 4 : index
    %c0_276 = arith.constant 0 : index
    %308 = vector.load %arg37[%c4_275, %c0_276] : memref<42x4xf32, #tpu.memory_space<vmem>>, vector<32x4xf32>
    %c0_277 = arith.constant 0 : index
    %c12_278 = arith.constant 12 : index
    %309 = vector.load %arg38[%c0_277, %c12_278] : memref<32x36xf32, #tpu.memory_space<vmem>>, vector<32x4xf32>
    tpu.vector_store %arg38[%c0_277, %c12_278], %308 {strides = array<i32>} : memref<32x36xf32, #tpu.memory_space<vmem>>, vector<32x4xf32>,
    %c5_279 = arith.constant 5 : index
    %c0_280 = arith.constant 0 : index
    %310 = vector.load %arg37[%c5_279, %c0_280] : memref<42x4xf32, #tpu.memory_space<vmem>>, vector<32x4xf32>
    %c0_281 = arith.constant 0 : index
    %c16_282 = arith.constant 16 : index
    %311 = vector.load %arg38[%c0_281, %c16_282] : memref<32x36xf32, #tpu.memory_space<vmem>>, vector<32x4xf32>
    tpu.vector_store %arg38[%c0_281, %c16_282], %310 {strides = array<i32>} : memref<32x36xf32, #tpu.memory_space<vmem>>, vector<32x4xf32>,
    %c6_283 = arith.constant 6 : index
    %c0_284 = arith.constant 0 : index
    %312 = vector.load %arg37[%c6_283, %c0_284] : memref<42x4xf32, #tpu.memory_space<vmem>>, vector<32x4xf32>
    %c0_285 = arith.constant 0 : index
    %c20_286 = arith.constant 20 : index
    %313 = vector.load %arg38[%c0_285, %c20_286] : memref<32x36xf32, #tpu.memory_space<vmem>>, vector<32x4xf32>
    tpu.vector_store %arg38[%c0_285, %c20_286], %312 {strides = array<i32>} : memref<32x36xf32, #tpu.memory_space<vmem>>, vector<32x4xf32>,
    %c8_287 = arith.constant 8 : index
    %c0_288 = arith.constant 0 : index
    %314 = vector.load %arg37[%c8_287, %c0_288] : memref<42x4xf32, #tpu.memory_space<vmem>>, vector<32x4xf32>
    %c0_289 = arith.constant 0 : index
    %c24_290 = arith.constant 24 : index
    %315 = vector.load %arg38[%c0_289, %c24_290] : memref<32x36xf32, #tpu.memory_space<vmem>>, vector<32x4xf32>
    tpu.vector_store %arg38[%c0_289, %c24_290], %314 {strides = array<i32>} : memref<32x36xf32, #tpu.memory_space<vmem>>, vector<32x4xf32>,
    %c9_291 = arith.constant 9 : index
    %c0_292 = arith.constant 0 : index
    %316 = vector.load %arg37[%c9_291, %c0_292] : memref<42x4xf32, #tpu.memory_space<vmem>>, vector<32x4xf32>
    %c0_293 = arith.constant 0 : index
    %c28_294 = arith.constant 28 : index
    %317 = vector.load %arg38[%c0_293, %c28_294] : memref<32x36xf32, #tpu.memory_space<vmem>>, vector<32x4xf32>
    tpu.vector_store %arg38[%c0_293, %c28_294], %316 {strides = array<i32>} : memref<32x36xf32, #tpu.memory_space<vmem>>, vector<32x4xf32>,
    %c10_295 = arith.constant 10 : index
    %c0_296 = arith.constant 0 : index
    %318 = vector.load %arg37[%c10_295, %c0_296] : memref<42x4xf32, #tpu.memory_space<vmem>>, vector<32x4xf32>
    %c0_297 = arith.constant 0 : index
    %c32_298 = arith.constant 32 : index
    %319 = vector.load %arg38[%c0_297, %c32_298] : memref<32x36xf32, #tpu.memory_space<vmem>>, vector<32x4xf32>
    tpu.vector_store %arg38[%c0_297, %c32_298], %318 {strides = array<i32>} : memref<32x36xf32, #tpu.memory_space<vmem>>, vector<32x4xf32>,
    %c0_299 = arith.constant 0 : index
    %c0_300 = arith.constant 0 : index
    %320 = vector.load %arg38[%c0_299, %c0_300] : memref<32x36xf32, #tpu.memory_space<vmem>>, vector<32x36xf32>
    %321 = arith.mulf %320, %2 : vector<32x36xf32>
    %322 = arith.truncf %321 : vector<32x36xf32> to vector<32x36xbf16>
    %c0_301 = arith.constant 0 : index
    %c0_302 = arith.constant 0 : index
    %323 = vector.load %arg28[%c0_301, %c0_302] : memref<36x4xbf16, #tpu.memory_space<vmem>>, vector<36x4xbf16>
    %cst_303 = arith.constant dense<0.000000e+00> : vector<32x4xf32>
    %324 = tpu.matmul %322, %323, %cst_303 {dimension_numbers = #tpu.dot_dimension_numbers<[1], [0], [0], [1], [0, 0, 1, 1], [], []>} : vector<32x36xbf16>, vector<36x4xbf16>, vector<32x4xf32> -> vector<32x4xf32>
    %c0_304 = arith.constant 0 : index
    %c0_305 = arith.constant 0 : index
    %325 = vector.load %arg29[%c0_304, %c0_305] : memref<1x4xf32, #tpu.memory_space<vmem>>, vector<1x4xf32>
    %326 = vector.broadcast %325 : vector<1x4xf32> to vector<32x4xf32>
    %327 = arith.addf %324, %326 : vector<32x4xf32>
    %328 = arith.mulf %327, %327 : vector<32x4xf32>
    %329 = arith.mulf %327, %328 : vector<32x4xf32>
    %cst_306 = arith.constant 4.471500e-02 : f32
    %330 = vector.broadcast %cst_306 : f32 to vector<32x4xf32>
    %331 = arith.mulf %330, %329 : vector<32x4xf32>
    %332 = arith.addf %327, %331 : vector<32x4xf32>
    %cst_307 = arith.constant 0.797884583 : f32
    %333 = vector.broadcast %cst_307 : f32 to vector<32x4xf32>
    %334 = arith.mulf %333, %332 : vector<32x4xf32>
    %335 = math.tanh %334 : vector<32x4xf32>
    %cst_308 = arith.constant 1.000000e+00 : f32
    %336 = vector.broadcast %cst_308 : f32 to vector<32x4xf32>
    %337 = arith.addf %336, %335 : vector<32x4xf32>
    %cst_309 = arith.constant 5.000000e-01 : f32
    %338 = vector.broadcast %cst_309 : f32 to vector<32x4xf32>
    %339 = arith.mulf %338, %337 : vector<32x4xf32>
    %340 = arith.mulf %327, %339 : vector<32x4xf32>
    %c5_310 = arith.constant 5 : index
    %c0_311 = arith.constant 0 : index
    %341 = vector.load %arg37[%c5_310, %c0_311] : memref<42x4xf32, #tpu.memory_space<vmem>>, vector<32x4xf32>
    tpu.vector_store %arg37[%c5_310, %c0_311], %340 {strides = array<i32>} : memref<42x4xf32, #tpu.memory_space<vmem>>, vector<32x4xf32>,
    %c0_312 = arith.constant 0 : index
    %c0_313 = arith.constant 0 : index
    %342 = vector.load %arg37[%c0_312, %c0_313] : memref<42x4xf32, #tpu.memory_space<vmem>>, vector<32x4xf32>
    %c0_314 = arith.constant 0 : index
    %c0_315 = arith.constant 0 : index
    %343 = vector.load %arg38[%c0_314, %c0_315] : memref<32x36xf32, #tpu.memory_space<vmem>>, vector<32x4xf32>
    tpu.vector_store %arg38[%c0_314, %c0_315], %342 {strides = array<i32>} : memref<32x36xf32, #tpu.memory_space<vmem>>, vector<32x4xf32>,
    %c1_316 = arith.constant 1 : index
    %c0_317 = arith.constant 0 : index
    %344 = vector.load %arg37[%c1_316, %c0_317] : memref<42x4xf32, #tpu.memory_space<vmem>>, vector<32x4xf32>
    %c0_318 = arith.constant 0 : index
    %c4_319 = arith.constant 4 : index
    %345 = vector.load %arg38[%c0_318, %c4_319] : memref<32x36xf32, #tpu.memory_space<vmem>>, vector<32x4xf32>
    tpu.vector_store %arg38[%c0_318, %c4_319], %344 {strides = array<i32>} : memref<32x36xf32, #tpu.memory_space<vmem>>, vector<32x4xf32>,
    %c2_320 = arith.constant 2 : index
    %c0_321 = arith.constant 0 : index
    %346 = vector.load %arg37[%c2_320, %c0_321] : memref<42x4xf32, #tpu.memory_space<vmem>>, vector<32x4xf32>
    %c0_322 = arith.constant 0 : index
    %c8_323 = arith.constant 8 : index
    %347 = vector.load %arg38[%c0_322, %c8_323] : memref<32x36xf32, #tpu.memory_space<vmem>>, vector<32x4xf32>
    tpu.vector_store %arg38[%c0_322, %c8_323], %346 {strides = array<i32>} : memref<32x36xf32, #tpu.memory_space<vmem>>, vector<32x4xf32>,
    %c4_324 = arith.constant 4 : index
    %c0_325 = arith.constant 0 : index
    %348 = vector.load %arg37[%c4_324, %c0_325] : memref<42x4xf32, #tpu.memory_space<vmem>>, vector<32x4xf32>
    %c0_326 = arith.constant 0 : index
    %c12_327 = arith.constant 12 : index
    %349 = vector.load %arg38[%c0_326, %c12_327] : memref<32x36xf32, #tpu.memory_space<vmem>>, vector<32x4xf32>
    tpu.vector_store %arg38[%c0_326, %c12_327], %348 {strides = array<i32>} : memref<32x36xf32, #tpu.memory_space<vmem>>, vector<32x4xf32>,
    %c5_328 = arith.constant 5 : index
    %c0_329 = arith.constant 0 : index
    %350 = vector.load %arg37[%c5_328, %c0_329] : memref<42x4xf32, #tpu.memory_space<vmem>>, vector<32x4xf32>
    %c0_330 = arith.constant 0 : index
    %c16_331 = arith.constant 16 : index
    %351 = vector.load %arg38[%c0_330, %c16_331] : memref<32x36xf32, #tpu.memory_space<vmem>>, vector<32x4xf32>
    tpu.vector_store %arg38[%c0_330, %c16_331], %350 {strides = array<i32>} : memref<32x36xf32, #tpu.memory_space<vmem>>, vector<32x4xf32>,
    %c6_332 = arith.constant 6 : index
    %c0_333 = arith.constant 0 : index
    %352 = vector.load %arg37[%c6_332, %c0_333] : memref<42x4xf32, #tpu.memory_space<vmem>>, vector<32x4xf32>
    %c0_334 = arith.constant 0 : index
    %c20_335 = arith.constant 20 : index
    %353 = vector.load %arg38[%c0_334, %c20_335] : memref<32x36xf32, #tpu.memory_space<vmem>>, vector<32x4xf32>
    tpu.vector_store %arg38[%c0_334, %c20_335], %352 {strides = array<i32>} : memref<32x36xf32, #tpu.memory_space<vmem>>, vector<32x4xf32>,
    %c8_336 = arith.constant 8 : index
    %c0_337 = arith.constant 0 : index
    %354 = vector.load %arg37[%c8_336, %c0_337] : memref<42x4xf32, #tpu.memory_space<vmem>>, vector<32x4xf32>
    %c0_338 = arith.constant 0 : index
    %c24_339 = arith.constant 24 : index
    %355 = vector.load %arg38[%c0_338, %c24_339] : memref<32x36xf32, #tpu.memory_space<vmem>>, vector<32x4xf32>
    tpu.vector_store %arg38[%c0_338, %c24_339], %354 {strides = array<i32>} : memref<32x36xf32, #tpu.memory_space<vmem>>, vector<32x4xf32>,
    %c9_340 = arith.constant 9 : index
    %c0_341 = arith.constant 0 : index
    %356 = vector.load %arg37[%c9_340, %c0_341] : memref<42x4xf32, #tpu.memory_space<vmem>>, vector<32x4xf32>
    %c0_342 = arith.constant 0 : index
    %c28_343 = arith.constant 28 : index
    %357 = vector.load %arg38[%c0_342, %c28_343] : memref<32x36xf32, #tpu.memory_space<vmem>>, vector<32x4xf32>
    tpu.vector_store %arg38[%c0_342, %c28_343], %356 {strides = array<i32>} : memref<32x36xf32, #tpu.memory_space<vmem>>, vector<32x4xf32>,
    %c10_344 = arith.constant 10 : index
    %c0_345 = arith.constant 0 : index
    %358 = vector.load %arg37[%c10_344, %c0_345] : memref<42x4xf32, #tpu.memory_space<vmem>>, vector<32x4xf32>
    %c0_346 = arith.constant 0 : index
    %c32_347 = arith.constant 32 : index
    %359 = vector.load %arg38[%c0_346, %c32_347] : memref<32x36xf32, #tpu.memory_space<vmem>>, vector<32x4xf32>
    tpu.vector_store %arg38[%c0_346, %c32_347], %358 {strides = array<i32>} : memref<32x36xf32, #tpu.memory_space<vmem>>, vector<32x4xf32>,
    %c0_348 = arith.constant 0 : index
    %c0_349 = arith.constant 0 : index
    %360 = vector.load %arg38[%c0_348, %c0_349] : memref<32x36xf32, #tpu.memory_space<vmem>>, vector<32x36xf32>
    %361 = arith.mulf %360, %2 : vector<32x36xf32>
    %362 = arith.truncf %361 : vector<32x36xf32> to vector<32x36xbf16>
    %c0_350 = arith.constant 0 : index
    %c0_351 = arith.constant 0 : index
    %363 = vector.load %arg30[%c0_350, %c0_351] : memref<36x4xbf16, #tpu.memory_space<vmem>>, vector<36x4xbf16>
    %cst_352 = arith.constant dense<0.000000e+00> : vector<32x4xf32>
    %364 = tpu.matmul %362, %363, %cst_352 {dimension_numbers = #tpu.dot_dimension_numbers<[1], [0], [0], [1], [0, 0, 1, 1], [], []>} : vector<32x36xbf16>, vector<36x4xbf16>, vector<32x4xf32> -> vector<32x4xf32>
    %c0_353 = arith.constant 0 : index
    %c0_354 = arith.constant 0 : index
    %365 = vector.load %arg31[%c0_353, %c0_354] : memref<1x4xf32, #tpu.memory_space<vmem>>, vector<1x4xf32>
    %366 = vector.broadcast %365 : vector<1x4xf32> to vector<32x4xf32>
    %367 = arith.addf %364, %366 : vector<32x4xf32>
    %368 = arith.mulf %367, %367 : vector<32x4xf32>
    %369 = arith.mulf %367, %368 : vector<32x4xf32>
    %cst_355 = arith.constant 4.471500e-02 : f32
    %370 = vector.broadcast %cst_355 : f32 to vector<32x4xf32>
    %371 = arith.mulf %370, %369 : vector<32x4xf32>
    %372 = arith.addf %367, %371 : vector<32x4xf32>
    %cst_356 = arith.constant 0.797884583 : f32
    %373 = vector.broadcast %cst_356 : f32 to vector<32x4xf32>
    %374 = arith.mulf %373, %372 : vector<32x4xf32>
    %375 = math.tanh %374 : vector<32x4xf32>
    %cst_357 = arith.constant 1.000000e+00 : f32
    %376 = vector.broadcast %cst_357 : f32 to vector<32x4xf32>
    %377 = arith.addf %376, %375 : vector<32x4xf32>
    %cst_358 = arith.constant 5.000000e-01 : f32
    %378 = vector.broadcast %cst_358 : f32 to vector<32x4xf32>
    %379 = arith.mulf %378, %377 : vector<32x4xf32>
    %380 = arith.mulf %367, %379 : vector<32x4xf32>
    %381 = arith.truncf %380 : vector<32x4xf32> to vector<32x4xbf16>
    %c0_359 = arith.constant 0 : index
    %c0_360 = arith.constant 0 : index
    %382 = vector.load %arg32[%c0_359, %c0_360] : memref<4x16xbf16, #tpu.memory_space<vmem>>, vector<4x16xbf16>
    %cst_361 = arith.constant dense<0.000000e+00> : vector<32x16xf32>
    %383 = tpu.matmul %381, %382, %cst_361 {dimension_numbers = #tpu.dot_dimension_numbers<[1], [0], [0], [1], [0, 0, 1, 1], [], []>} : vector<32x4xbf16>, vector<4x16xbf16>, vector<32x16xf32> -> vector<32x16xf32>
    %c0_362 = arith.constant 0 : index
    %c0_363 = arith.constant 0 : index
    %384 = vector.load %arg33[%c0_362, %c0_363] : memref<1x16xf32, #tpu.memory_space<vmem>>, vector<1x16xf32>
    %385 = vector.broadcast %384 : vector<1x16xf32> to vector<32x16xf32>
    %386 = arith.addf %383, %385 : vector<32x16xf32>
    %387 = arith.addf %268, %386 : vector<32x16xf32>
    %c0_364 = arith.constant 0 : index
    %c0_365 = arith.constant 0 : index
    %388 = vector.load %arg34[%c0_364, %c0_365] : memref<32x16xf32, #tpu.memory_space<vmem>>, vector<32x16xf32>
    tpu.vector_store %arg34[%c0_364, %c0_365], %387 {strides = array<i32>} : memref<32x16xf32, #tpu.memory_space<vmem>>, vector<32x16xf32>,
    return
  }
}

</mosaic_0001>

<llo_original>
// kernel: tpu_custom_call.1
$region0: #{tpu_custom_call.1}
  #allocation0 [shape = 'u32[]', space=smem, size = 0x4, offset = 0x4, fixed_abs, tag = 'smem constant byte address 0x4 - core index']
  #allocation1 [shape = 'u32[144,128]{1,0:T(1,128)}', space=vmem, size = 0x12000, scoped, tag = 'internal scratch']
  #allocation2 [shape = 'f32[42,4]{1,0:T(8,128)}', space=vmem, size = 0x6000, scoped, tag = 'scratch operand']
  #allocation3 [shape = 'f32[32,36]{1,0:T(8,128)}', space=vmem, size = 0x4000, scoped, tag = 'scratch operand']
  %s0 = inlined_call_operand.smem [shape: u32[37], index: -1, kind: input, shape index: {}]
  %s1 = sld [smem:[%s0]]
  %s2 = scalar_lea.smem %s0, 1
  %s3 = sld [smem:[%s2]]
  %s4 = scalar_lea.smem %s0, 2
  %s5 = sld [smem:[%s4]]
  %s6 = scalar_lea.smem %s0, 3
  %s7 = sld [smem:[%s6]]
  %s8 = scalar_lea.smem %s0, 4
  %s9 = sld [smem:[%s8]]
  %s10 = scalar_lea.smem %s0, 5
  %s11 = sld [smem:[%s10]]
  %s12 = scalar_lea.smem %s0, 6
  %s13 = sld [smem:[%s12]]
  %s14 = scalar_lea.smem %s0, 7
  %s15 = sld [smem:[%s14]]
  %s16 = scalar_lea.smem %s0, 8
  %s17 = sld [smem:[%s16]]
  %s18 = scalar_lea.smem %s0, 9
  %s19 = sld [smem:[%s18]]
  %s20 = scalar_lea.smem %s0, 10
  %s21 = sld [smem:[%s20]]
  %s22 = scalar_lea.smem %s0, 11
  %s23 = sld [smem:[%s22]]
  %s24 = scalar_lea.smem %s0, 12
  %s25 = sld [smem:[%s24]]
  %s26 = scalar_lea.smem %s0, 13
  %s27 = sld [smem:[%s26]]
  %s28 = scalar_lea.smem %s0, 14
  %s29 = sld [smem:[%s28]]
  %s30 = scalar_lea.smem %s0, 15
  %s31 = sld [smem:[%s30]]
  %s32 = scalar_lea.smem %s0, 16
  %s33 = sld [smem:[%s32]]
  %s34 = scalar_lea.smem %s0, 17
  %s35 = sld [smem:[%s34]]
  %s36 = scalar_lea.smem %s0, 18
  %s37 = sld [smem:[%s36]]
  %s38 = scalar_lea.smem %s0, 19
  %s39 = sld [smem:[%s38]]
  %s40 = scalar_lea.smem %s0, 20
  %s41 = sld [smem:[%s40]]
  %s42 = scalar_lea.smem %s0, 21
  %s43 = sld [smem:[%s42]]
  %s44 = scalar_lea.smem %s0, 22
  %s45 = sld [smem:[%s44]]
  %s46 = scalar_lea.smem %s0, 23
  %s47 = sld [smem:[%s46]]
  %s48 = scalar_lea.smem %s0, 24
  %s49 = sld [smem:[%s48]]
  %s50 = scalar_lea.smem %s0, 25
  %s51 = sld [smem:[%s50]]
  %s52 = scalar_lea.smem %s0, 26
  %s53 = sld [smem:[%s52]]
  %s54 = scalar_lea.smem %s0, 27
  %s55 = sld [smem:[%s54]]
  %s56 = scalar_lea.smem %s0, 28
  %s57 = sld [smem:[%s56]]
  %s58 = scalar_lea.smem %s0, 29
  %s59 = sld [smem:[%s58]]
  %s60 = scalar_lea.smem %s0, 30
  %s61 = sld [smem:[%s60]]
  %s62 = scalar_lea.smem %s0, 31
  %s63 = sld [smem:[%s62]]
  %s64 = scalar_lea.smem %s0, 32
  %s65 = sld [smem:[%s64]]
  %s66 = scalar_lea.smem %s0, 33
  %s67 = sld [smem:[%s66]]
  %s68 = scalar_lea.smem %s0, 34
  %s69 = sld [smem:[%s68]]
  %s70 = scalar_lea.smem %s0, 35
  %s71 = sld [smem:[%s70]]
  %s72 = scalar_lea.smem %s0, 36
  %s73 = sld [smem:[%s72]]
  %74 = xla_tuple %s69, %s71, %s73
  %s75 = sld [smem:[#allocation0]]
  $region162: #{tpu_custom_call.1} parent=0
    _
  %s77 = ssub.s32 1, %s75
  %s78 = scalar_select 0, %s77, %s75
  $region1: #{tpu_custom_call.1} parent=0
    #allocation4 [shape = 'u8[16384]{0}', space=vmem, size = 0x4000, scoped, tag = 'output window, operand 1, single buffered']
    #allocation5 [shape = 's32[1]{0}', space=sflag, size = 0x4, scoped, tag = 'scoped memory for tpu_custom_call.1']
    #allocation6 [shape = 'u8[16384]{0}', space=vmem, size = 0x4000, scoped, tag = 'output window, operand 2, single buffered']
    #allocation7 [shape = 's32[1]{0}', space=sflag, size = 0x4, scoped, tag = 'scoped memory for tpu_custom_call.1']
    %79 = vsyncpa [#allocation5], 0
    %80 = vsyncpa [#allocation7], 0
    // Predicated region
    $region2: #{tpu_custom_call.1} parent=1 // pred_check
      _
    $region3: #{tpu_custom_call.1} parent=1 // pred_check_branch
      %82 = sbr.rel (0) target = $region5
    $region4: #{tpu_custom_call.1} parent=1 // pred_region
      _
    $region5: #{tpu_custom_call.1} parent=1 // pred_fallthru
      _
    // Predicated region
    $region6: #{tpu_custom_call.1} parent=1 // pred_check
      _
    $region7: #{tpu_custom_call.1} parent=1 // pred_check_branch
      %84 = sbr.rel (0) target = $region9
    $region8: #{tpu_custom_call.1} parent=1 // pred_region
      _
    $region9: #{tpu_custom_call.1} parent=1 // pred_fallthru
      _
    // Predicated region
    $region10: #{tpu_custom_call.1} parent=1 // pred_check
      _
    $region11: #{tpu_custom_call.1} parent=1 // pred_check_branch
      %86 = sbr.rel (0) target = $region13
    $region12: #{tpu_custom_call.1} parent=1 // pred_region
      _
    $region13: #{tpu_custom_call.1} parent=1 // pred_fallthru
      _
    // Predicated region
    $region14: #{tpu_custom_call.1} parent=1 // pred_check
      _
    $region15: #{tpu_custom_call.1} parent=1 // pred_check_branch
      %88 = sbr.rel (0) target = $region17
    $region16: #{tpu_custom_call.1} parent=1 // pred_region
      _
    $region17: #{tpu_custom_call.1} parent=1 // pred_fallthru
      _
    // Predicated region
    $region18: #{tpu_custom_call.1} parent=1 // pred_check
      _
    $region19: #{tpu_custom_call.1} parent=1 // pred_check_branch
      %90 = sbr.rel (0) target = $region21
    $region20: #{tpu_custom_call.1} parent=1 // pred_region
      _
    $region21: #{tpu_custom_call.1} parent=1 // pred_fallthru
      _
    // Predicated region
    $region22: #{tpu_custom_call.1} parent=1 // pred_check
      _
    $region23: #{tpu_custom_call.1} parent=1 // pred_check_branch
      %92 = sbr.rel (0) target = $region25
    $region24: #{tpu_custom_call.1} parent=1 // pred_region
      _
    $region25: #{tpu_custom_call.1} parent=1 // pred_fallthru
      _
    // Predicated region
    $region26: #{tpu_custom_call.1} parent=1 // pred_check
      _
    $region27: #{tpu_custom_call.1} parent=1 // pred_check_branch
      %94 = sbr.rel (0) target = $region29
    $region28: #{tpu_custom_call.1} parent=1 // pred_region
      _
    $region29: #{tpu_custom_call.1} parent=1 // pred_fallthru
      _
    // Predicated region
    $region30: #{tpu_custom_call.1} parent=1 // pred_check
      _
    $region31: #{tpu_custom_call.1} parent=1 // pred_check_branch
      %96 = sbr.rel (0) target = $region33
    $region32: #{tpu_custom_call.1} parent=1 // pred_region
      _
    $region33: #{tpu_custom_call.1} parent=1 // pred_fallthru
      _
    // Predicated region
    $region34: #{tpu_custom_call.1} parent=1 // pred_check
      _
    $region35: #{tpu_custom_call.1} parent=1 // pred_check_branch
      %98 = sbr.rel (0) target = $region37
    $region36: #{tpu_custom_call.1} parent=1 // pred_region
      _
    $region37: #{tpu_custom_call.1} parent=1 // pred_fallthru
      _
    // Predicated region
    $region38: #{tpu_custom_call.1} parent=1 // pred_check
      _
    $region39: #{tpu_custom_call.1} parent=1 // pred_check_branch
      %100 = sbr.rel (0) target = $region41
    $region40: #{tpu_custom_call.1} parent=1 // pred_region
      _
    $region41: #{tpu_custom_call.1} parent=1 // pred_fallthru
      _
    // Predicated region
    $region42: #{tpu_custom_call.1} parent=1 // pred_check
      _
    $region43: #{tpu_custom_call.1} parent=1 // pred_check_branch
      %102 = sbr.rel (0) target = $region45
    $region44: #{tpu_custom_call.1} parent=1 // pred_region
      _
    $region45: #{tpu_custom_call.1} parent=1 // pred_fallthru
      _
    // Predicated region
    $region46: #{tpu_custom_call.1} parent=1 // pred_check
      _
    $region47: #{tpu_custom_call.1} parent=1 // pred_check_branch
      %104 = sbr.rel (0) target = $region49
    $region48: #{tpu_custom_call.1} parent=1 // pred_region
      _
    $region49: #{tpu_custom_call.1} parent=1 // pred_fallthru
      _
    // Predicated region
    $region50: #{tpu_custom_call.1} parent=1 // pred_check
      _
    $region51: #{tpu_custom_call.1} parent=1 // pred_check_branch
      %106 = sbr.rel (0) target = $region53
    $region52: #{tpu_custom_call.1} parent=1 // pred_region
      _
    $region53: #{tpu_custom_call.1} parent=1 // pred_fallthru
      _
    // Predicated region
    $region54: #{tpu_custom_call.1} parent=1 // pred_check
      _
    $region55: #{tpu_custom_call.1} parent=1 // pred_check_branch
      %108 = sbr.rel (0) target = $region57
    $region56: #{tpu_custom_call.1} parent=1 // pred_region
      _
    $region57: #{tpu_custom_call.1} parent=1 // pred_fallthru
      _
    // Predicated region
    $region58: #{tpu_custom_call.1} parent=1 // pred_check
      _
    $region59: #{tpu_custom_call.1} parent=1 // pred_check_branch
      %110 = sbr.rel (0) target = $region61
    $region60: #{tpu_custom_call.1} parent=1 // pred_region
      _
    $region61: #{tpu_custom_call.1} parent=1 // pred_fallthru
      _
    // Predicated region
    $region62: #{tpu_custom_call.1} parent=1 // pred_check
      _
    $region63: #{tpu_custom_call.1} parent=1 // pred_check_branch
      %112 = sbr.rel (0) target = $region65
    $region64: #{tpu_custom_call.1} parent=1 // pred_region
      _
    $region65: #{tpu_custom_call.1} parent=1 // pred_fallthru
      _
    // Predicated region
    $region66: #{tpu_custom_call.1} parent=1 // pred_check
      _
    $region67: #{tpu_custom_call.1} parent=1 // pred_check_branch
      %114 = sbr.rel (0) target = $region69
    $region68: #{tpu_custom_call.1} parent=1 // pred_region
      _
    $region69: #{tpu_custom_call.1} parent=1 // pred_fallthru
      _
    // Predicated region
    $region70: #{tpu_custom_call.1} parent=1 // pred_check
      _
    $region71: #{tpu_custom_call.1} parent=1 // pred_check_branch
      %116 = sbr.rel (0) target = $region73
    $region72: #{tpu_custom_call.1} parent=1 // pred_region
      _
    $region73: #{tpu_custom_call.1} parent=1 // pred_fallthru
      _
    // Predicated region
    $region74: #{tpu_custom_call.1} parent=1 // pred_check
      _
    $region75: #{tpu_custom_call.1} parent=1 // pred_check_branch
      %118 = sbr.rel (0) target = $region77
    $region76: #{tpu_custom_call.1} parent=1 // pred_region
      _
    $region77: #{tpu_custom_call.1} parent=1 // pred_fallthru
      _
    // Predicated region
    $region78: #{tpu_custom_call.1} parent=1 // pred_check
      _
    $region79: #{tpu_custom_call.1} parent=1 // pred_check_branch
      %120 = sbr.rel (0) target = $region81
    $region80: #{tpu_custom_call.1} parent=1 // pred_region
      _
    $region81: #{tpu_custom_call.1} parent=1 // pred_fallthru
      _
    // Predicated region
    $region82: #{tpu_custom_call.1} parent=1 // pred_check
      _
    $region83: #{tpu_custom_call.1} parent=1 // pred_check_branch
      %122 = sbr.rel (0) target = $region85
    $region84: #{tpu_custom_call.1} parent=1 // pred_region
      _
    $region85: #{tpu_custom_call.1} parent=1 // pred_fallthru
      _
    // Predicated region
    $region86: #{tpu_custom_call.1} parent=1 // pred_check
      _
    $region87: #{tpu_custom_call.1} parent=1 // pred_check_branch
      %124 = sbr.rel (0) target = $region89
    $region88: #{tpu_custom_call.1} parent=1 // pred_region
      _
    $region89: #{tpu_custom_call.1} parent=1 // pred_fallthru
      _
    // Predicated region
    $region90: #{tpu_custom_call.1} parent=1 // pred_check
      _
    $region91: #{tpu_custom_call.1} parent=1 // pred_check_branch
      %126 = sbr.rel (0) target = $region93
    $region92: #{tpu_custom_call.1} parent=1 // pred_region
      _
    $region93: #{tpu_custom_call.1} parent=1 // pred_fallthru
      _
    // Predicated region
    $region94: #{tpu_custom_call.1} parent=1 // pred_check
      _
    $region95: #{tpu_custom_call.1} parent=1 // pred_check_branch
      %128 = sbr.rel (0) target = $region97
    $region96: #{tpu_custom_call.1} parent=1 // pred_region
      _
    $region97: #{tpu_custom_call.1} parent=1 // pred_fallthru
      _
    // Predicated region
    $region98: #{tpu_custom_call.1} parent=1 // pred_check
      _
    $region99: #{tpu_custom_call.1} parent=1 // pred_check_branch
      %130 = sbr.rel (0) target = $region101
    $region100: #{tpu_custom_call.1} parent=1 // pred_region
      _
    $region101: #{tpu_custom_call.1} parent=1 // pred_fallthru
      _
    // Predicated region
    $region102: #{tpu_custom_call.1} parent=1 // pred_check
      _
    $region103: #{tpu_custom_call.1} parent=1 // pred_check_branch
      %132 = sbr.rel (0) target = $region105
    $region104: #{tpu_custom_call.1} parent=1 // pred_region
      _
    $region105: #{tpu_custom_call.1} parent=1 // pred_fallthru
      _
    // Predicated region
    $region106: #{tpu_custom_call.1} parent=1 // pred_check
      _
    $region107: #{tpu_custom_call.1} parent=1 // pred_check_branch
      %134 = sbr.rel (0) target = $region109
    $region108: #{tpu_custom_call.1} parent=1 // pred_region
      _
    $region109: #{tpu_custom_call.1} parent=1 // pred_fallthru
      _
    // Predicated region
    $region110: #{tpu_custom_call.1} parent=1 // pred_check
      _
    $region111: #{tpu_custom_call.1} parent=1 // pred_check_branch
      %136 = sbr.rel (0) target = $region113
    $region112: #{tpu_custom_call.1} parent=1 // pred_region
      _
    $region113: #{tpu_custom_call.1} parent=1 // pred_fallthru
      _
    // Predicated region
    $region114: #{tpu_custom_call.1} parent=1 // pred_check
      _
    $region115: #{tpu_custom_call.1} parent=1 // pred_check_branch
      %138 = sbr.rel (0) target = $region117
    $region116: #{tpu_custom_call.1} parent=1 // pred_region
      _
    $region117: #{tpu_custom_call.1} parent=1 // pred_fallthru
      _
    // Predicated region
    $region118: #{tpu_custom_call.1} parent=1 // pred_check
      _
    $region119: #{tpu_custom_call.1} parent=1 // pred_check_branch
      %140 = sbr.rel (0) target = $region121
    $region120: #{tpu_custom_call.1} parent=1 // pred_region
      _
    $region121: #{tpu_custom_call.1} parent=1 // pred_fallthru
      _
    // Predicated region
    $region122: #{tpu_custom_call.1} parent=1 // pred_check
      _
    $region123: #{tpu_custom_call.1} parent=1 // pred_check_branch
      %142 = sbr.rel (0) target = $region125
    $region124: #{tpu_custom_call.1} parent=1 // pred_region
      _
    $region125: #{tpu_custom_call.1} parent=1 // pred_fallthru
      _
    // Predicated region
    $region126: #{tpu_custom_call.1} parent=1 // pred_check
      _
    $region127: #{tpu_custom_call.1} parent=1 // pred_check_branch
      %144 = sbr.rel (0) target = $region129
    $region128: #{tpu_custom_call.1} parent=1 // pred_region
      _
    $region129: #{tpu_custom_call.1} parent=1 // pred_fallthru
      _
    // Predicated region
    $region130: #{tpu_custom_call.1} parent=1 // pred_check
      _
    $region131: #{tpu_custom_call.1} parent=1 // pred_check_branch
      %146 = sbr.rel (0) target = $region133
    $region132: #{tpu_custom_call.1} parent=1 // pred_region
      _
    $region133: #{tpu_custom_call.1} parent=1 // pred_fallthru
      _
    // Predicated region
    $region134: #{tpu_custom_call.1} parent=1 // pred_check
      _
    $region135: #{tpu_custom_call.1} parent=1 // pred_check_branch
      %148 = sbr.rel (0) target = $region137
    $region136: #{tpu_custom_call.1} parent=1 // pred_region
      _
    $region137: #{tpu_custom_call.1} parent=1 // pred_fallthru
      _
    %vm150 = vcmask 31744
    %151 = vst.msk [vmem:[#allocation2] sm:$0xff] %vm150, 0.0
    %152 = vst.msk [vmem:[#allocation2 + $0x8] sm:$0xff] %vm150, 0.0
    %153 = vst.msk [vmem:[#allocation2 + $0x10] sm:$0xff] %vm150, 0.0
    %154 = vst.msk [vmem:[#allocation2 + $0x18] sm:$0xff] %vm150, 0.0
    %155 = vst.msk [vmem:[#allocation2 + $0x20] sm:$0xff] %vm150, 0.0
    %vm156 = vcmask 25600
    %157 = vst.msk [vmem:[#allocation2 + $0x28] sm:$0x3] %vm156, 0.0
    %v158 = vld [vmem:[%s13] sm:$0xff]
    %v159 = vld [vmem:[%s13 + $0x8] sm:$0xff]
    %v160 = vld [vmem:[%s13 + $0x10] sm:$0xff]
    %v161 = vld [vmem:[%s13 + $0x18] sm:$0xff]
    %v162 = vld [vmem:[%s1] sm:$0xff]
    %v163 = vld [vmem:[%s1 + $0x8] sm:$0xff]
    %v164 = vld [vmem:[%s1 + $0x10] sm:$0xff]
    %v165 = vld [vmem:[%s1 + $0x18] sm:$0xff]
    %v166 = vmul.f32 %v162, %v162
    %v167 = vmul.f32 %v163, %v163
    %v168 = vmul.f32 %v164, %v164
    %v169 = vmul.f32 %v165, %v165
    %v170 = vmul.f32 %v162, %v166
    %v171 = vmul.f32 %v163, %v167
    %v172 = vmul.f32 %v164, %v168
    %v173 = vmul.f32 %v165, %v169
    %v174 = vmul.f32 %v170, 0.044715
    %v175 = vmul.f32 %v171, 0.044715
    %v176 = vmul.f32 %v172, 0.044715
    %v177 = vmul.f32 %v173, 0.044715
    %v178 = vadd.f32 %v162, %v174
    %v179 = vadd.f32 %v163, %v175
    %v180 = vadd.f32 %v164, %v176
    %v181 = vadd.f32 %v165, %v177
    %v182 = vmul.f32 %v178, 0.7978846
    %v183 = vmul.f32 %v179, 0.7978846
    %v184 = vmul.f32 %v180, 0.7978846
    %v185 = vmul.f32 %v181, 0.7978846
    %v186 = vtanh.pop %v182
    %v187 = vtanh.pop %v183
    %v188 = vtanh.pop %v184
    %v189 = vtanh.pop %v185
    %v190 = vadd.f32 %v186, 1.0
    %v191 = vadd.f32 %v187, 1.0
    %v192 = vadd.f32 %v188, 1.0
    %v193 = vadd.f32 %v189, 1.0
    %v194 = vmul.f32 %v190, 0.5
    %v195 = vmul.f32 %v191, 0.5
    %v196 = vmul.f32 %v192, 0.5
    %v197 = vmul.f32 %v193, 0.5
    %v198 = vmul.f32 %v162, %v194
    %v199 = vmul.f32 %v163, %v195
    %v200 = vmul.f32 %v164, %v196
    %v201 = vmul.f32 %v165, %v197
    %v202 = vpack.c.bf16 %v199, %v198
    %v203 = vpack.c.bf16 %v201, %v200
    %v204 = vld [vmem:[%s15] sm:$0xf]
    %v205 = vld [vmem:[%s15 + $0x4] sm:$0xf]
    %v206 = vld [vmem:[%s3] sm:$0xff]
    %v207 = vld [vmem:[%s3 + $0x8] sm:$0xff]
    %v208 = vld [vmem:[%s3 + $0x10] sm:$0xff]
    %v209 = vld [vmem:[%s3 + $0x18] sm:$0xff]
    %v210 = vmul.f32 %v206, %v206
    %v211 = vmul.f32 %v207, %v207
    %v212 = vmul.f32 %v208, %v208
    %v213 = vmul.f32 %v209, %v209
    %v214 = vmul.f32 %v206, %v210
    %v215 = vmul.f32 %v207, %v211
    %v216 = vmul.f32 %v208, %v212
    %v217 = vmul.f32 %v209, %v213
    %v218 = vmul.f32 %v214, 0.044715
    %v219 = vmul.f32 %v215, 0.044715
    %v220 = vmul.f32 %v216, 0.044715
    %v221 = vmul.f32 %v217, 0.044715
    %v222 = vadd.f32 %v206, %v218
    %v223 = vadd.f32 %v207, %v219
    %v224 = vadd.f32 %v208, %v220
    %v225 = vadd.f32 %v209, %v221
    %v226 = vmul.f32 %v222, 0.7978846
    %v227 = vmul.f32 %v223, 0.7978846
    %v228 = vmul.f32 %v224, 0.7978846
    %v229 = vmul.f32 %v225, 0.7978846
    %v230 = vtanh.pop %v226
    %v231 = vtanh.pop %v227
    %v232 = vtanh.pop %v228
    %v233 = vtanh.pop %v229
    %v234 = vadd.f32 %v230, 1.0
    %v235 = vadd.f32 %v231, 1.0
    %v236 = vadd.f32 %v232, 1.0
    %v237 = vadd.f32 %v233, 1.0
    %v238 = vmul.f32 %v234, 0.5
    %v239 = vmul.f32 %v235, 0.5
    %v240 = vmul.f32 %v236, 0.5
    %v241 = vmul.f32 %v237, 0.5
    %v242 = vmul.f32 %v206, %v238
    %v243 = vmul.f32 %v207, %v239
    %v244 = vmul.f32 %v208, %v240
    %v245 = vmul.f32 %v209, %v241
    %v246 = vpack.c.bf16 %v243, %v242
    %v247 = vpack.c.bf16 %v245, %v244
    %v248 = vld [vmem:[%s17] sm:$0xf]
    %v249 = vld [vmem:[%s17 + $0x4] sm:$0xf]
    %v252 = vunpack.c.l.b16 %v248
    %v253 = vunpack.c.l.b16 %v249
    %v254 = vpack.c.b16 %v253, %v252
    %vm256 = vcmask 130048
    %v258 = vsel %vm256, %v246, 0
    %v261 = vsel %vm256, %v247, 0
    %263 = vmatprep.subr.bf16.mxu0 0
    %264 = vmatpush1.bf16.msra.mxu0 %v254
    %265 = vmatprep.subr.bf16.mxu0 0
    %266 = vmatpush1.bf16.msra.mxu0 0
    %267 = vmatprep.subr.bf16.mxu0 0
    %268 = vmatpush1.bf16.msra.mxu0 0
    %269 = vmatprep.subr.bf16.mxu0 0
    %270 = vmatpush1.bf16.msra.mxu0 0
    %271 = vmatprep.subr.bf16.mxu0 0
    %272 = vmatpush1.bf16.msra.mxu0 0
    %273 = vmatprep.subr.bf16.mxu0 0
    %274 = vmatpush1.bf16.msra.mxu0 0
    %275 = vmatprep.subr.bf16.mxu0 0
    %276 = vmatpush1.bf16.msra.mxu0 0
    %277 = vmatprep.subr.bf16.mxu0 0
    %278 = vmatpush1.bf16.msra.mxu0 0
    %279 = vmatprep.subr.bf16.mxu0 0
    %280 = vmatpush1.bf16.msra.mxu0 0
    %281 = vmatprep.subr.bf16.mxu0 0
    %282 = vmatpush1.bf16.msra.mxu0 0
    %283 = vmatprep.subr.bf16.mxu0 0
    %284 = vmatpush1.bf16.msra.mxu0 0
    %285 = vmatprep.subr.bf16.mxu0 0
    %286 = vmatpush1.bf16.msra.mxu0 0
    %287 = vmatprep.subr.bf16.mxu0 0
    %288 = vmatpush1.bf16.msra.mxu0 0
    %289 = vmatprep.subr.bf16.mxu0 0
    %290 = vmatpush1.bf16.msra.mxu0 0
    %291 = vmatprep.subr.bf16.mxu0 0
    %292 = vmatpush1.bf16.msra.mxu0 0
    %293 = vmatprep.subr.bf16.mxu0 0
    %294 = vmatpush1.bf16.msra.mxu0 0
    %295 = vmatprep.mubr.bf16.mxu0 0
    %296 = vmatmul.mubr.bf16.gmra.mrb[0].mxu0 %v258
    %v297 = vpop.f32.mrb[0].mxu0
    %v298 = vadd.f32 0.0, %v297
    %v299 = vpop.f32.mrb[0].mxu0
    %v300 = vpop.f32.mrb[0].mxu0
    %v301 = vadd.f32 0.0, %v300
    %v302 = vpop.f32.mrb[0].mxu0
    %303 = vmatprep.mubr.bf16.mxu0 0
    %304 = vmatmul.mubr.bf16.gmra.mrb[0].mxu0 %v261
    %v305 = vpop.f32.mrb[0].mxu0
    %v306 = vadd.f32 0.0, %v305
    %v307 = vpop.f32.mrb[0].mxu0
    %v308 = vpop.f32.mrb[0].mxu0
    %v309 = vadd.f32 0.0, %v308
    %v310 = vpop.f32.mrb[0].mxu0
    %311 = vdwg.mxu0
    %v314 = vunpack.c.l.b16 %v204
    %v315 = vunpack.c.l.b16 %v205
    %v316 = vpack.c.b16 %v315, %v314
    %v319 = vsel %vm256, %v202, 0
    %v322 = vsel %vm256, %v203, 0
    %324 = vmatprep.subr.bf16.mxu0 0
    %325 = vmatpush1.bf16.msra.mxu0 %v316
    %326 = vmatprep.subr.bf16.mxu0 0
    %327 = vmatpush1.bf16.msra.mxu0 0
    %328 = vmatprep.subr.bf16.mxu0 0
    %329 = vmatpush1.bf16.msra.mxu0 0
    %330 = vmatprep.subr.bf16.mxu0 0
    %331 = vmatpush1.bf16.msra.mxu0 0
    %332 = vmatprep.subr.bf16.mxu0 0
    %333 = vmatpush1.bf16.msra.mxu0 0
    %334 = vmatprep.subr.bf16.mxu0 0
    %335 = vmatpush1.bf16.msra.mxu0 0
    %336 = vmatprep.subr.bf16.mxu0 0
    %337 = vmatpush1.bf16.msra.mxu0 0
    %338 = vmatprep.subr.bf16.mxu0 0
    %339 = vmatpush1.bf16.msra.mxu0 0
    %340 = vmatprep.subr.bf16.mxu0 0
    %341 = vmatpush1.bf16.msra.mxu0 0
    %342 = vmatprep.subr.bf16.mxu0 0
    %343 = vmatpush1.bf16.msra.mxu0 0
    %344 = vmatprep.subr.bf16.mxu0 0
    %345 = vmatpush1.bf16.msra.mxu0 0
    %346 = vmatprep.subr.bf16.mxu0 0
    %347 = vmatpush1.bf16.msra.mxu0 0
    %348 = vmatprep.subr.bf16.mxu0 0
    %349 = vmatpush1.bf16.msra.mxu0 0
    %350 = vmatprep.subr.bf16.mxu0 0
    %351 = vmatpush1.bf16.msra.mxu0 0
    %352 = vmatprep.subr.bf16.mxu0 0
    %353 = vmatpush1.bf16.msra.mxu0 0
    %354 = vmatprep.subr.bf16.mxu0 0
    %355 = vmatpush1.bf16.msra.mxu0 0
    %356 = vmatprep.mubr.bf16.mxu0 0
    %357 = vmatmul.mubr.bf16.gmra.mrb[0].mxu0 %v319
    %v358 = vpop.f32.mrb[0].mxu0
    %v359 = vadd.f32 %v298, %v358
    %v360 = vpop.f32.mrb[0].mxu0
    %v361 = vpop.f32.mrb[0].mxu0
    %v362 = vadd.f32 %v301, %v361
    %v363 = vpop.f32.mrb[0].mxu0
    %364 = vmatprep.mubr.bf16.mxu0 0
    %365 = vmatmul.mubr.bf16.gmra.mrb[0].mxu0 %v322
    %v366 = vpop.f32.mrb[0].mxu0
    %v367 = vadd.f32 %v306, %v366
    %v368 = vpop.f32.mrb[0].mxu0
    %v369 = vpop.f32.mrb[0].mxu0
    %v370 = vadd.f32 %v309, %v369
    %v371 = vpop.f32.mrb[0].mxu0
    %372 = vdwg.mxu0
    %v373 = vld [vmem:[%s19] sm:$0x1]
    %v375 = vlaneseq
    %v376 = vshrl.u32 %v375, 7
    %v377 = vsub.s32 0, %v376
    %v378 = vrot.slane %v373, %v377
    %v380 = vadd.f32 %v359, %v378
    %v381 = vadd.f32 %v362, %v378
    %v382 = vadd.f32 %v367, %v378
    %v383 = vadd.f32 %v370, %v378
    %v384 = vmul.f32 %v380, %v380
    %v385 = vmul.f32 %v381, %v381
    %v386 = vmul.f32 %v382, %v382
    %v387 = vmul.f32 %v383, %v383
    %v388 = vmul.f32 %v380, %v384
    %v389 = vmul.f32 %v381, %v385
    %v390 = vmul.f32 %v382, %v386
    %v391 = vmul.f32 %v383, %v387
    %v392 = vmul.f32 %v388, 0.044715
    %v393 = vmul.f32 %v389, 0.044715
    %v394 = vmul.f32 %v390, 0.044715
    %v395 = vmul.f32 %v391, 0.044715
    %v396 = vadd.f32 %v380, %v392
    %v397 = vadd.f32 %v381, %v393
    %v398 = vadd.f32 %v382, %v394
    %v399 = vadd.f32 %v383, %v395
    %v400 = vmul.f32 %v396, 0.7978846
    %v401 = vmul.f32 %v397, 0.7978846
    %v402 = vmul.f32 %v398, 0.7978846
    %v403 = vmul.f32 %v399, 0.7978846
    %v404 = vtanh.pop %v400
    %v405 = vtanh.pop %v401
    %v406 = vtanh.pop %v402
    %v407 = vtanh.pop %v403
    %v408 = vadd.f32 %v404, 1.0
    %v409 = vadd.f32 %v405, 1.0
    %v410 = vadd.f32 %v406, 1.0
    %v411 = vadd.f32 %v407, 1.0
    %v412 = vmul.f32 %v408, 0.5
    %v413 = vmul.f32 %v409, 0.5
    %v414 = vmul.f32 %v410, 0.5
    %v415 = vmul.f32 %v411, 0.5
    %v416 = vmul.f32 %v380, %v412
    %v417 = vmul.f32 %v381, %v413
    %v418 = vmul.f32 %v382, %v414
    %v419 = vmul.f32 %v383, %v415
    %420 = vst.msk [vmem:[#allocation2 + $0x5] sm:$0xff] %vm150, %v416
    %421 = vst.msk [vmem:[#allocation2 + $0xd] sm:$0xff] %vm150, %v417
    %422 = vst.msk [vmem:[#allocation2 + $0x15] sm:$0xff] %vm150, %v418
    %423 = vst.msk [vmem:[#allocation2 + $0x1d] sm:$0xff] %vm150, %v419
    %v424 = vld [vmem:[#allocation2] sm:$0xff]
    %v425 = vld [vmem:[#allocation2 + $0x8] sm:$0xff]
    %v426 = vld [vmem:[#allocation2 + $0x10] sm:$0xff]
    %v427 = vld [vmem:[#allocation2 + $0x18] sm:$0xff]
    %428 = vst.msk [vmem:[#allocation3] sm:$0xff] %vm150, %v424
    %429 = vst.msk [vmem:[#allocation3 + $0x8] sm:$0xff] %vm150, %v425
    %430 = vst.msk [vmem:[#allocation3 + $0x10] sm:$0xff] %vm150, %v426
    %431 = vst.msk [vmem:[#allocation3 + $0x18] sm:$0xff] %vm150, %v427
    %v432 = vld [vmem:[#allocation2 + $0x1] sm:$0xff]
    %v433 = vld [vmem:[#allocation2 + $0x9] sm:$0xff]
    %v434 = vld [vmem:[#allocation2 + $0x11] sm:$0xff]
    %v435 = vld [vmem:[#allocation2 + $0x19] sm:$0xff]
    %440 = vrot.lane.b32.xlu0 %v432, 4
    %v441 = vpop.permute.xlu0 %440
    %442 = vrot.lane.b32.xlu0 %v433, 4
    %v443 = vpop.permute.xlu0 %442
    %444 = vrot.lane.b32.xlu0 %v434, 4
    %v445 = vpop.permute.xlu0 %444
    %446 = vrot.lane.b32.xlu0 %v435, 4
    %v447 = vpop.permute.xlu0 %446
    %vm452 = vcmask 64544
    %453 = vst.msk [vmem:[#allocation3] sm:$0xff] %vm452, %v441
    %454 = vst.msk [vmem:[#allocation3 + $0x8] sm:$0xff] %vm452, %v443
    %455 = vst.msk [vmem:[#allocation3 + $0x10] sm:$0xff] %vm452, %v445
    %456 = vst.msk [vmem:[#allocation3 + $0x18] sm:$0xff] %vm452, %v447
    %v457 = vld [vmem:[#allocation2 + $0x2] sm:$0xff]
    %v458 = vld [vmem:[#allocation2 + $0xa] sm:$0xff]
    %v459 = vld [vmem:[#allocation2 + $0x12] sm:$0xff]
    %v460 = vld [vmem:[#allocation2 + $0x1a] sm:$0xff]
    %465 = vrot.lane.b32.xlu0 %v457, 8
    %v466 = vpop.permute.xlu0 %465
    %467 = vrot.lane.b32.xlu0 %v458, 8
    %v468 = vpop.permute.xlu0 %467
    %469 = vrot.lane.b32.xlu0 %v459, 8
    %v470 = vpop.permute.xlu0 %469
    %471 = vrot.lane.b32.xlu0 %v460, 8
    %v472 = vpop.permute.xlu0 %471
    %vm477 = vcmask 97344
    %478 = vst.msk [vmem:[#allocation3] sm:$0xff] %vm477, %v466
    %479 = vst.msk [vmem:[#allocation3 + $0x8] sm:$0xff] %vm477, %v468
    %480 = vst.msk [vmem:[#allocation3 + $0x10] sm:$0xff] %vm477, %v470
    %481 = vst.msk [vmem:[#allocation3 + $0x18] sm:$0xff] %vm477, %v472
    %v482 = vld [vmem:[#allocation2 + $0x4] sm:$0xff]
    %v483 = vld [vmem:[#allocation2 + $0xc] sm:$0xff]
    %v484 = vld [vmem:[#allocation2 + $0x14] sm:$0xff]
    %v485 = vld [vmem:[#allocation2 + $0x1c] sm:$0xff]
    %490 = vrot.lane.b32.xlu0 %v482, 12
    %v491 = vpop.permute.xlu0 %490
    %492 = vrot.lane.b32.xlu0 %v483, 12
    %v493 = vpop.permute.xlu0 %492
    %494 = vrot.lane.b32.xlu0 %v484, 12
    %v495 = vpop.permute.xlu0 %494
    %496 = vrot.lane.b32.xlu0 %v485, 12
    %v497 = vpop.permute.xlu0 %496
    %vm502 = vcmask 130144
    %503 = vst.msk [vmem:[#allocation3] sm:$0xff] %vm502, %v491
    %504 = vst.msk [vmem:[#allocation3 + $0x8] sm:$0xff] %vm502, %v493
    %505 = vst.msk [vmem:[#allocation3 + $0x10] sm:$0xff] %vm502, %v495
    %506 = vst.msk [vmem:[#allocation3 + $0x18] sm:$0xff] %vm502, %v497
    %v507 = vld [vmem:[#allocation2 + $0x5] sm:$0xff]
    %v508 = vld [vmem:[#allocation2 + $0xd] sm:$0xff]
    %v509 = vld [vmem:[#allocation2 + $0x15] sm:$0xff]
    %v510 = vld [vmem:[#allocation2 + $0x1d] sm:$0xff]
    %515 = vrot.lane.b32.xlu0 %v507, 16
    %v516 = vpop.permute.xlu0 %515
    %517 = vrot.lane.b32.xlu0 %v508, 16
    %v518 = vpop.permute.xlu0 %517
    %519 = vrot.lane.b32.xlu0 %v509, 16
    %v520 = vpop.permute.xlu0 %519
    %521 = vrot.lane.b32.xlu0 %v510, 16
    %v522 = vpop.permute.xlu0 %521
    %vm527 = vcmask 162944
    %528 = vst.msk [vmem:[#allocation3] sm:$0xff] %vm527, %v516
    %529 = vst.msk [vmem:[#allocation3 + $0x8] sm:$0xff] %vm527, %v518
    %530 = vst.msk [vmem:[#allocation3 + $0x10] sm:$0xff] %vm527, %v520
    %531 = vst.msk [vmem:[#allocation3 + $0x18] sm:$0xff] %vm527, %v522
    %v532 = vld [vmem:[#allocation2 + $0x6] sm:$0xff]
    %v533 = vld [vmem:[#allocation2 + $0xe] sm:$0xff]
    %v534 = vld [vmem:[#allocation2 + $0x16] sm:$0xff]
    %v535 = vld [vmem:[#allocation2 + $0x1e] sm:$0xff]
    %540 = vrot.lane.b32.xlu0 %v532, 20
    %v541 = vpop.permute.xlu0 %540
    %542 = vrot.lane.b32.xlu0 %v533, 20
    %v543 = vpop.permute.xlu0 %542
    %544 = vrot.lane.b32.xlu0 %v534, 20
    %v545 = vpop.permute.xlu0 %544
    %546 = vrot.lane.b32.xlu0 %v535, 20
    %v547 = vpop.permute.xlu0 %546
    %vm552 = vcmask 195744
    %553 = vst.msk [vmem:[#allocation3] sm:$0xff] %vm552, %v541
    %554 = vst.msk [vmem:[#allocation3 + $0x8] sm:$0xff] %vm552, %v543
    %555 = vst.msk [vmem:[#allocation3 + $0x10] sm:$0xff] %vm552, %v545
    %556 = vst.msk [vmem:[#allocation3 + $0x18] sm:$0xff] %vm552, %v547
    %v557 = vld [vmem:[#allocation2 + $0x8] sm:$0xff]
    %v558 = vld [vmem:[#allocation2 + $0x10] sm:$0xff]
    %v559 = vld [vmem:[#allocation2 + $0x18] sm:$0xff]
    %v560 = vld [vmem:[#allocation2 + $0x20] sm:$0xff]
    %565 = vrot.lane.b32.xlu0 %v557, 24
    %v566 = vpop.permute.xlu0 %565
    %567 = vrot.lane.b32.xlu0 %v558, 24
    %v568 = vpop.permute.xlu0 %567
    %569 = vrot.lane.b32.xlu0 %v559, 24
    %v570 = vpop.permute.xlu0 %569
    %571 = vrot.lane.b32.xlu0 %v560, 24
    %v572 = vpop.permute.xlu0 %571
    %vm577 = vcmask 228544
    %578 = vst.msk [vmem:[#allocation3] sm:$0xff] %vm577, %v566
    %579 = vst.msk [vmem:[#allocation3 + $0x8] sm:$0xff] %vm577, %v568
    %580 = vst.msk [vmem:[#allocation3 + $0x10] sm:$0xff] %vm577, %v570
    %581 = vst.msk [vmem:[#allocation3 + $0x18] sm:$0xff] %vm577, %v572
    %v582 = vld [vmem:[#allocation2 + $0x9] sm:$0xff]
    %v583 = vld [vmem:[#allocation2 + $0x11] sm:$0xff]
    %v584 = vld [vmem:[#allocation2 + $0x19] sm:$0xff]
    %v585 = vld [vmem:[#allocation2 + $0x21] sm:$0xff]
    %590 = vrot.lane.b32.xlu0 %v582, 28
    %v591 = vpop.permute.xlu0 %590
    %592 = vrot.lane.b32.xlu0 %v583, 28
    %v593 = vpop.permute.xlu0 %592
    %594 = vrot.lane.b32.xlu0 %v584, 28
    %v595 = vpop.permute.xlu0 %594
    %596 = vrot.lane.b32.xlu0 %v585, 28
    %v597 = vpop.permute.xlu0 %596
    %vm602 = vcmask 261344
    %603 = vst.msk [vmem:[#allocation3] sm:$0xff] %vm602, %v591
    %604 = vst.msk [vmem:[#allocation3 + $0x8] sm:$0xff] %vm602, %v593
    %605 = vst.msk [vmem:[#allocation3 + $0x10] sm:$0xff] %vm602, %v595
    %606 = vst.msk [vmem:[#allocation3 + $0x18] sm:$0xff] %vm602, %v597
    %v607 = vld [vmem:[#allocation2 + $0xa] sm:$0xff]
    %v608 = vld [vmem:[#allocation2 + $0x12] sm:$0xff]
    %v609 = vld [vmem:[#allocation2 + $0x1a] sm:$0xff]
    %v610 = vld [vmem:[#allocation2 + $0x22] sm:$0xff]
    %615 = vrot.lane.b32.xlu0 %v607, 32
    %v616 = vpop.permute.xlu0 %615
    %617 = vrot.lane.b32.xlu0 %v608, 32
    %v618 = vpop.permute.xlu0 %617
    %619 = vrot.lane.b32.xlu0 %v609, 32
    %v620 = vpop.permute.xlu0 %619
    %621 = vrot.lane.b32.xlu0 %v610, 32
    %v622 = vpop.permute.xlu0 %621
    %vm627 = vcmask 294144
    %628 = vst.msk [vmem:[#allocation3] sm:$0xff] %vm627, %v616
    %629 = vst.msk [vmem:[#allocation3 + $0x8] sm:$0xff] %vm627, %v618
    %630 = vst.msk [vmem:[#allocation3 + $0x10] sm:$0xff] %vm627, %v620
    %631 = vst.msk [vmem:[#allocation3 + $0x18] sm:$0xff] %vm627, %v622
    %v632 = vld [vmem:[#allocation3] sm:$0xff]
    %v633 = vld [vmem:[#allocation3 + $0x8] sm:$0xff]
    %v634 = vld [vmem:[#allocation3 + $0x10] sm:$0xff]
    %v635 = vld [vmem:[#allocation3 + $0x18] sm:$0xff]
    %v636 = vmul.f32 %v632, %v158
    %v637 = vmul.f32 %v633, %v159
    %v638 = vmul.f32 %v634, %v160
    %v639 = vmul.f32 %v635, %v161
    %v640 = vpack.c.bf16 %v637, %v636
    %v641 = vpack.c.bf16 %v639, %v638
    %v642 = vld [vmem:[%s21] sm:$0xf]
    %v643 = vld [vmem:[%s21 + $0x4] sm:$0xf]
    %v644 = vld [vmem:[%s21 + $0x8] sm:$0xf]
    %v645 = vld [vmem:[%s21 + $0xc] sm:$0xf]
    %v646 = vld [vmem:[%s21 + $0x10] sm:$0x3]
    %v647 = vld [vmem:[%s23] sm:$0x1]
    %v649 = vlaneseq
    %v650 = vshrl.u32 %v649, 7
    %v651 = vsub.s32 0, %v650
    %v652 = vrot.slane %v647, %v651
    %v659 = vunpack.c.l.b16 %v642
    %v660 = vunpack.c.l.b16 %v643
    %v661 = vunpack.c.l.b16 %v644
    %v662 = vunpack.c.l.b16 %v645
    %v663 = vunpack.c.l.b16 %v646
    %v664 = vpack.c.b16 %v660, %v659
    %v665 = vpack.c.b16 %v662, %v661
    %v666 = vpack.c.b16 %v663, %v663
    %vm669 = vcmask 293888
    %v671 = vsel %vm669, %v640, 0
    %v674 = vsel %vm669, %v641, 0
    %vm676 = vcmask 1041408
    %v678 = vsel %vm676, %v666, 0
    %680 = vmatprep.subr.bf16.mxu0 0
    %681 = vmatpush1.bf16.msra.mxu0 %v664
    %682 = vmatprep.subr.bf16.mxu0 0
    %683 = vmatpush1.bf16.msra.mxu0 %v665
    %684 = vmatprep.subr.bf16.mxu0 0
    %685 = vmatpush1.bf16.msra.mxu0 %v678
    %686 = vmatprep.subr.bf16.mxu0 0
    %687 = vmatpush1.bf16.msra.mxu0 0
    %688 = vmatprep.subr.bf16.mxu0 0
    %689 = vmatpush1.bf16.msra.mxu0 0
    %690 = vmatprep.subr.bf16.mxu0 0
    %691 = vmatpush1.bf16.msra.mxu0 0
    %692 = vmatprep.subr.bf16.mxu0 0
    %693 = vmatpush1.bf16.msra.mxu0 0
    %694 = vmatprep.subr.bf16.mxu0 0
    %695 = vmatpush1.bf16.msra.mxu0 0
    %696 = vmatprep.subr.bf16.mxu0 0
    %697 = vmatpush1.bf16.msra.mxu0 0
    %698 = vmatprep.subr.bf16.mxu0 0
    %699 = vmatpush1.bf16.msra.mxu0 0
    %700 = vmatprep.subr.bf16.mxu0 0
    %701 = vmatpush1.bf16.msra.mxu0 0
    %702 = vmatprep.subr.bf16.mxu0 0
    %703 = vmatpush1.bf16.msra.mxu0 0
    %704 = vmatprep.subr.bf16.mxu0 0
    %705 = vmatpush1.bf16.msra.mxu0 0
    %706 = vmatprep.subr.bf16.mxu0 0
    %707 = vmatpush1.bf16.msra.mxu0 0
    %708 = vmatprep.subr.bf16.mxu0 0
    %709 = vmatpush1.bf16.msra.mxu0 0
    %710 = vmatprep.subr.bf16.mxu0 0
    %711 = vmatpush1.bf16.msra.mxu0 0
    %712 = vmatprep.mubr.bf16.mxu0 0
    %713 = vmatmul.mubr.bf16.gmra.mrb[0].mxu0 %v671
    %v714 = vpop.f32.mrb[0].mxu0
    %v715 = vadd.f32 %v652, %v714
    %v716 = vpop.f32.mrb[0].mxu0
    %v717 = vpop.f32.mrb[0].mxu0
    %v718 = vadd.f32 %v652, %v717
    %v719 = vpop.f32.mrb[0].mxu0
    %720 = vmatprep.mubr.bf16.mxu0 0
    %721 = vmatmul.mubr.bf16.gmra.mrb[0].mxu0 %v674
    %v722 = vpop.f32.mrb[0].mxu0
    %v723 = vadd.f32 %v652, %v722
    %v724 = vpop.f32.mrb[0].mxu0
    %v725 = vpop.f32.mrb[0].mxu0
    %v726 = vadd.f32 %v652, %v725
    %v727 = vpop.f32.mrb[0].mxu0
    %728 = vdwg.mxu0
    %v729 = vmul.f32 %v715, %v715
    %v730 = vmul.f32 %v718, %v718
    %v731 = vmul.f32 %v723, %v723
    %v732 = vmul.f32 %v726, %v726
    %v733 = vmul.f32 %v715, %v729
    %v734 = vmul.f32 %v718, %v730
    %v735 = vmul.f32 %v723, %v731
    %v736 = vmul.f32 %v726, %v732
    %v737 = vmul.f32 %v733, 0.044715
    %v738 = vmul.f32 %v734, 0.044715
    %v739 = vmul.f32 %v735, 0.044715
    %v740 = vmul.f32 %v736, 0.044715
    %v741 = vadd.f32 %v715, %v737
    %v742 = vadd.f32 %v718, %v738
    %v743 = vadd.f32 %v723, %v739
    %v744 = vadd.f32 %v726, %v740
    %v745 = vmul.f32 %v741, 0.7978846
    %v746 = vmul.f32 %v742, 0.7978846
    %v747 = vmul.f32 %v743, 0.7978846
    %v748 = vmul.f32 %v744, 0.7978846
    %v749 = vtanh.pop %v745
    %v750 = vtanh.pop %v746
    %v751 = vtanh.pop %v747
    %v752 = vtanh.pop %v748
    %v753 = vadd.f32 %v749, 1.0
    %v754 = vadd.f32 %v750, 1.0
    %v755 = vadd.f32 %v751, 1.0
    %v756 = vadd.f32 %v752, 1.0
    %v757 = vmul.f32 %v753, 0.5
    %v758 = vmul.f32 %v754, 0.5
    %v759 = vmul.f32 %v755, 0.5
    %v760 = vmul.f32 %v756, 0.5
    %v761 = vmul.f32 %v715, %v757
    %v762 = vmul.f32 %v718, %v758
    %v763 = vmul.f32 %v723, %v759
    %v764 = vmul.f32 %v726, %v760
    %765 = vst.msk [vmem:[#allocation2 + $0x5] sm:$0xff] %vm150, %v761
    %766 = vst.msk [vmem:[#allocation2 + $0xd] sm:$0xff] %vm150, %v762
    %767 = vst.msk [vmem:[#allocation2 + $0x15] sm:$0xff] %vm150, %v763
    %768 = vst.msk [vmem:[#allocation2 + $0x1d] sm:$0xff] %vm150, %v764
    %v769 = vld [vmem:[#allocation2] sm:$0xff]
    %v770 = vld [vmem:[#allocation2 + $0x8] sm:$0xff]
    %v771 = vld [vmem:[#allocation2 + $0x10] sm:$0xff]
    %v772 = vld [vmem:[#allocation2 + $0x18] sm:$0xff]
    %773 = vst.msk [vmem:[#allocation3] sm:$0xff] %vm150, %v769
    %774 = vst.msk [vmem:[#allocation3 + $0x8] sm:$0xff] %vm150, %v770
    %775 = vst.msk [vmem:[#allocation3 + $0x10] sm:$0xff] %vm150, %v771
    %776 = vst.msk [vmem:[#allocation3 + $0x18] sm:$0xff] %vm150, %v772
    %v777 = vld [vmem:[#allocation2 + $0x1] sm:$0xff]
    %v778 = vld [vmem:[#allocation2 + $0x9] sm:$0xff]
    %v779 = vld [vmem:[#allocation2 + $0x11] sm:$0xff]
    %v780 = vld [vmem:[#allocation2 + $0x19] sm:$0xff]
    %785 = vrot.lane.b32.xlu0 %v777, 4
    %v786 = vpop.permute.xlu0 %785
    %787 = vrot.lane.b32.xlu0 %v778, 4
    %v788 = vpop.permute.xlu0 %787
    %789 = vrot.lane.b32.xlu0 %v779, 4
    %v790 = vpop.permute.xlu0 %789
    %791 = vrot.lane.b32.xlu0 %v780, 4
    %v792 = vpop.permute.xlu0 %791
    %797 = vst.msk [vmem:[#allocation3] sm:$0xff] %vm452, %v786
    %798 = vst.msk [vmem:[#allocation3 + $0x8] sm:$0xff] %vm452, %v788
    %799 = vst.msk [vmem:[#allocation3 + $0x10] sm:$0xff] %vm452, %v790
    %800 = vst.msk [vmem:[#allocation3 + $0x18] sm:$0xff] %vm452, %v792
    %v801 = vld [vmem:[#allocation2 + $0x2] sm:$0xff]
    %v802 = vld [vmem:[#allocation2 + $0xa] sm:$0xff]
    %v803 = vld [vmem:[#allocation2 + $0x12] sm:$0xff]
    %v804 = vld [vmem:[#allocation2 + $0x1a] sm:$0xff]
    %809 = vrot.lane.b32.xlu0 %v801, 8
    %v810 = vpop.permute.xlu0 %809
    %811 = vrot.lane.b32.xlu0 %v802, 8
    %v812 = vpop.permute.xlu0 %811
    %813 = vrot.lane.b32.xlu0 %v803, 8
    %v814 = vpop.permute.xlu0 %813
    %815 = vrot.lane.b32.xlu0 %v804, 8
    %v816 = vpop.permute.xlu0 %815
    %821 = vst.msk [vmem:[#allocation3] sm:$0xff] %vm477, %v810
    %822 = vst.msk [vmem:[#allocation3 + $0x8] sm:$0xff] %vm477, %v812
    %823 = vst.msk [vmem:[#allocation3 + $0x10] sm:$0xff] %vm477, %v814
    %824 = vst.msk [vmem:[#allocation3 + $0x18] sm:$0xff] %vm477, %v816
    %v825 = vld [vmem:[#allocation2 + $0x4] sm:$0xff]
    %v826 = vld [vmem:[#allocation2 + $0xc] sm:$0xff]
    %v827 = vld [vmem:[#allocation2 + $0x14] sm:$0xff]
    %v828 = vld [vmem:[#allocation2 + $0x1c] sm:$0xff]
    %833 = vrot.lane.b32.xlu0 %v825, 12
    %v834 = vpop.permute.xlu0 %833
    %835 = vrot.lane.b32.xlu0 %v826, 12
    %v836 = vpop.permute.xlu0 %835
    %837 = vrot.lane.b32.xlu0 %v827, 12
    %v838 = vpop.permute.xlu0 %837
    %839 = vrot.lane.b32.xlu0 %v828, 12
    %v840 = vpop.permute.xlu0 %839
    %845 = vst.msk [vmem:[#allocation3] sm:$0xff] %vm502, %v834
    %846 = vst.msk [vmem:[#allocation3 + $0x8] sm:$0xff] %vm502, %v836
    %847 = vst.msk [vmem:[#allocation3 + $0x10] sm:$0xff] %vm502, %v838
    %848 = vst.msk [vmem:[#allocation3 + $0x18] sm:$0xff] %vm502, %v840
    %v849 = vld [vmem:[#allocation2 + $0x5] sm:$0xff]
    %v850 = vld [vmem:[#allocation2 + $0xd] sm:$0xff]
    %v851 = vld [vmem:[#allocation2 + $0x15] sm:$0xff]
    %v852 = vld [vmem:[#allocation2 + $0x1d] sm:$0xff]
    %857 = vrot.lane.b32.xlu0 %v849, 16
    %v858 = vpop.permute.xlu0 %857
    %859 = vrot.lane.b32.xlu0 %v850, 16
    %v860 = vpop.permute.xlu0 %859
    %861 = vrot.lane.b32.xlu0 %v851, 16
    %v862 = vpop.permute.xlu0 %861
    %863 = vrot.lane.b32.xlu0 %v852, 16
    %v864 = vpop.permute.xlu0 %863
    %869 = vst.msk [vmem:[#allocation3] sm:$0xff] %vm527, %v858
    %870 = vst.msk [vmem:[#allocation3 + $0x8] sm:$0xff] %vm527, %v860
    %871 = vst.msk [vmem:[#allocation3 + $0x10] sm:$0xff] %vm527, %v862
    %872 = vst.msk [vmem:[#allocation3 + $0x18] sm:$0xff] %vm527, %v864
    %v873 = vld [vmem:[#allocation2 + $0x6] sm:$0xff]
    %v874 = vld [vmem:[#allocation2 + $0xe] sm:$0xff]
    %v875 = vld [vmem:[#allocation2 + $0x16] sm:$0xff]
    %v876 = vld [vmem:[#allocation2 + $0x1e] sm:$0xff]
    %881 = vrot.lane.b32.xlu0 %v873, 20
    %v882 = vpop.permute.xlu0 %881
    %883 = vrot.lane.b32.xlu0 %v874, 20
    %v884 = vpop.permute.xlu0 %883
    %885 = vrot.lane.b32.xlu0 %v875, 20
    %v886 = vpop.permute.xlu0 %885
    %887 = vrot.lane.b32.xlu0 %v876, 20
    %v888 = vpop.permute.xlu0 %887
    %893 = vst.msk [vmem:[#allocation3] sm:$0xff] %vm552, %v882
    %894 = vst.msk [vmem:[#allocation3 + $0x8] sm:$0xff] %vm552, %v884
    %895 = vst.msk [vmem:[#allocation3 + $0x10] sm:$0xff] %vm552, %v886
    %896 = vst.msk [vmem:[#allocation3 + $0x18] sm:$0xff] %vm552, %v888
    %v897 = vld [vmem:[#allocation2 + $0x8] sm:$0xff]
    %v898 = vld [vmem:[#allocation2 + $0x10] sm:$0xff]
    %v899 = vld [vmem:[#allocation2 + $0x18] sm:$0xff]
    %v900 = vld [vmem:[#allocation2 + $0x20] sm:$0xff]
    %905 = vrot.lane.b32.xlu0 %v897, 24
    %v906 = vpop.permute.xlu0 %905
    %907 = vrot.lane.b32.xlu0 %v898, 24
    %v908 = vpop.permute.xlu0 %907
    %909 = vrot.lane.b32.xlu0 %v899, 24
    %v910 = vpop.permute.xlu0 %909
    %911 = vrot.lane.b32.xlu0 %v900, 24
    %v912 = vpop.permute.xlu0 %911
    %917 = vst.msk [vmem:[#allocation3] sm:$0xff] %vm577, %v906
    %918 = vst.msk [vmem:[#allocation3 + $0x8] sm:$0xff] %vm577, %v908
    %919 = vst.msk [vmem:[#allocation3 + $0x10] sm:$0xff] %vm577, %v910
    %920 = vst.msk [vmem:[#allocation3 + $0x18] sm:$0xff] %vm577, %v912
    %v921 = vld [vmem:[#allocation2 + $0x9] sm:$0xff]
    %v922 = vld [vmem:[#allocation2 + $0x11] sm:$0xff]
    %v923 = vld [vmem:[#allocation2 + $0x19] sm:$0xff]
    %v924 = vld [vmem:[#allocation2 + $0x21] sm:$0xff]
    %929 = vrot.lane.b32.xlu0 %v921, 28
    %v930 = vpop.permute.xlu0 %929
    %931 = vrot.lane.b32.xlu0 %v922, 28
    %v932 = vpop.permute.xlu0 %931
    %933 = vrot.lane.b32.xlu0 %v923, 28
    %v934 = vpop.permute.xlu0 %933
    %935 = vrot.lane.b32.xlu0 %v924, 28
    %v936 = vpop.permute.xlu0 %935
    %941 = vst.msk [vmem:[#allocation3] sm:$0xff] %vm602, %v930
    %942 = vst.msk [vmem:[#allocation3 + $0x8] sm:$0xff] %vm602, %v932
    %943 = vst.msk [vmem:[#allocation3 + $0x10] sm:$0xff] %vm602, %v934
    %944 = vst.msk [vmem:[#allocation3 + $0x18] sm:$0xff] %vm602, %v936
    %v945 = vld [vmem:[#allocation2 + $0xa] sm:$0xff]
    %v946 = vld [vmem:[#allocation2 + $0x12] sm:$0xff]
    %v947 = vld [vmem:[#allocation2 + $0x1a] sm:$0xff]
    %v948 = vld [vmem:[#allocation2 + $0x22] sm:$0xff]
    %953 = vrot.lane.b32.xlu0 %v945, 32
    %v954 = vpop.permute.xlu0 %953
    %955 = vrot.lane.b32.xlu0 %v946, 32
    %v956 = vpop.permute.xlu0 %955
    %957 = vrot.lane.b32.xlu0 %v947, 32
    %v958 = vpop.permute.xlu0 %957
    %959 = vrot.lane.b32.xlu0 %v948, 32
    %v960 = vpop.permute.xlu0 %959
    %965 = vst.msk [vmem:[#allocation3] sm:$0xff] %vm627, %v954
    %966 = vst.msk [vmem:[#allocation3 + $0x8] sm:$0xff] %vm627, %v956
    %967 = vst.msk [vmem:[#allocation3 + $0x10] sm:$0xff] %vm627, %v958
    %968 = vst.msk [vmem:[#allocation3 + $0x18] sm:$0xff] %vm627, %v960
    %v969 = vld [vmem:[#allocation3] sm:$0xff]
    %v970 = vld [vmem:[#allocation3 + $0x8] sm:$0xff]
    %v971 = vld [vmem:[#allocation3 + $0x10] sm:$0xff]
    %v972 = vld [vmem:[#allocation3 + $0x18] sm:$0xff]
    %v973 = vmul.f32 %v969, %v158
    %v974 = vmul.f32 %v970, %v159
    %v975 = vmul.f32 %v971, %v160
    %v976 = vmul.f32 %v972, %v161
    %v977 = vpack.c.bf16 %v974, %v973
    %v978 = vpack.c.bf16 %v976, %v975
    %v979 = vld [vmem:[%s25] sm:$0xf]
    %v980 = vld [vmem:[%s25 + $0x4] sm:$0xf]
    %v981 = vld [vmem:[%s25 + $0x8] sm:$0xf]
    %v982 = vld [vmem:[%s25 + $0xc] sm:$0xf]
    %v983 = vld [vmem:[%s25 + $0x10] sm:$0x3]
    %v984 = vld [vmem:[%s27] sm:$0x1]
    %v986 = vlaneseq
    %v987 = vshrl.u32 %v986, 7
    %v988 = vsub.s32 0, %v987
    %v989 = vrot.slane %v984, %v988
    %v996 = vunpack.c.l.b16 %v979
    %v997 = vunpack.c.l.b16 %v980
    %v998 = vunpack.c.l.b16 %v981
    %v999 = vunpack.c.l.b16 %v982
    %v1000 = vunpack.c.l.b16 %v983
    %v1001 = vpack.c.b16 %v997, %v996
    %v1002 = vpack.c.b16 %v999, %v998
    %v1003 = vpack.c.b16 %v1000, %v1000
    %v1007 = vsel %vm669, %v977, 0
    %v1010 = vsel %vm669, %v978, 0
    %v1013 = vsel %vm676, %v1003, 0
    %1015 = vmatprep.subr.bf16.mxu0 0
    %1016 = vmatpush1.bf16.msra.mxu0 %v1001
    %1017 = vmatprep.subr.bf16.mxu0 0
    %1018 = vmatpush1.bf16.msra.mxu0 %v1002
    %1019 = vmatprep.subr.bf16.mxu0 0
    %1020 = vmatpush1.bf16.msra.mxu0 %v1013
    %1021 = vmatprep.subr.bf16.mxu0 0
    %1022 = vmatpush1.bf16.msra.mxu0 0
    %1023 = vmatprep.subr.bf16.mxu0 0
    %1024 = vmatpush1.bf16.msra.mxu0 0
    %1025 = vmatprep.subr.bf16.mxu0 0
    %1026 = vmatpush1.bf16.msra.mxu0 0
    %1027 = vmatprep.subr.bf16.mxu0 0
    %1028 = vmatpush1.bf16.msra.mxu0 0
    %1029 = vmatprep.subr.bf16.mxu0 0
    %1030 = vmatpush1.bf16.msra.mxu0 0
    %1031 = vmatprep.subr.bf16.mxu0 0
    %1032 = vmatpush1.bf16.msra.mxu0 0
    %1033 = vmatprep.subr.bf16.mxu0 0
    %1034 = vmatpush1.bf16.msra.mxu0 0
    %1035 = vmatprep.subr.bf16.mxu0 0
    %1036 = vmatpush1.bf16.msra.mxu0 0
    %1037 = vmatprep.subr.bf16.mxu0 0
    %1038 = vmatpush1.bf16.msra.mxu0 0
    %1039 = vmatprep.subr.bf16.mxu0 0
    %1040 = vmatpush1.bf16.msra.mxu0 0
    %1041 = vmatprep.subr.bf16.mxu0 0
    %1042 = vmatpush1.bf16.msra.mxu0 0
    %1043 = vmatprep.subr.bf16.mxu0 0
    %1044 = vmatpush1.bf16.msra.mxu0 0
    %1045 = vmatprep.subr.bf16.mxu0 0
    %1046 = vmatpush1.bf16.msra.mxu0 0
    %1047 = vmatprep.mubr.bf16.mxu0 0
    %1048 = vmatmul.mubr.bf16.gmra.mrb[0].mxu0 %v1007
    %v1049 = vpop.f32.mrb[0].mxu0
    %v1050 = vadd.f32 %v989, %v1049
    %v1051 = vpop.f32.mrb[0].mxu0
    %v1052 = vpop.f32.mrb[0].mxu0
    %v1053 = vadd.f32 %v989, %v1052
    %v1054 = vpop.f32.mrb[0].mxu0
    %1055 = vmatprep.mubr.bf16.mxu0 0
    %1056 = vmatmul.mubr.bf16.gmra.mrb[0].mxu0 %v1010
    %v1057 = vpop.f32.mrb[0].mxu0
    %v1058 = vadd.f32 %v989, %v1057
    %v1059 = vpop.f32.mrb[0].mxu0
    %v1060 = vpop.f32.mrb[0].mxu0
    %v1061 = vadd.f32 %v989, %v1060
    %v1062 = vpop.f32.mrb[0].mxu0
    %1063 = vdwg.mxu0
    %v1064 = vmul.f32 %v1050, %v1050
    %v1065 = vmul.f32 %v1053, %v1053
    %v1066 = vmul.f32 %v1058, %v1058
    %v1067 = vmul.f32 %v1061, %v1061
    %v1068 = vmul.f32 %v1050, %v1064
    %v1069 = vmul.f32 %v1053, %v1065
    %v1070 = vmul.f32 %v1058, %v1066
    %v1071 = vmul.f32 %v1061, %v1067
    %v1072 = vmul.f32 %v1068, 0.044715
    %v1073 = vmul.f32 %v1069, 0.044715
    %v1074 = vmul.f32 %v1070, 0.044715
    %v1075 = vmul.f32 %v1071, 0.044715
    %v1076 = vadd.f32 %v1050, %v1072
    %v1077 = vadd.f32 %v1053, %v1073
    %v1078 = vadd.f32 %v1058, %v1074
    %v1079 = vadd.f32 %v1061, %v1075
    %v1080 = vmul.f32 %v1076, 0.7978846
    %v1081 = vmul.f32 %v1077, 0.7978846
    %v1082 = vmul.f32 %v1078, 0.7978846
    %v1083 = vmul.f32 %v1079, 0.7978846
    %v1084 = vtanh.pop %v1080
    %v1085 = vtanh.pop %v1081
    %v1086 = vtanh.pop %v1082
    %v1087 = vtanh.pop %v1083
    %v1088 = vadd.f32 %v1084, 1.0
    %v1089 = vadd.f32 %v1085, 1.0
    %v1090 = vadd.f32 %v1086, 1.0
    %v1091 = vadd.f32 %v1087, 1.0
    %v1092 = vmul.f32 %v1088, 0.5
    %v1093 = vmul.f32 %v1089, 0.5
    %v1094 = vmul.f32 %v1090, 0.5
    %v1095 = vmul.f32 %v1091, 0.5
    %v1096 = vmul.f32 %v1050, %v1092
    %v1097 = vmul.f32 %v1053, %v1093
    %v1098 = vmul.f32 %v1058, %v1094
    %v1099 = vmul.f32 %v1061, %v1095
    %v1100 = vpack.c.bf16 %v1097, %v1096
    %v1101 = vpack.c.bf16 %v1099, %v1098
    %v1102 = vld [vmem:[%s29] sm:$0x3]
    %v1103 = vld [vmem:[%s31] sm:$0x1]
    %v1105 = vlaneseq
    %v1106 = vshrl.u32 %v1105, 7
    %v1107 = vsub.s32 0, %v1106
    %v1108 = vrot.slane %v1103, %v1107
    %v1111 = vsel %vm150, %v1100, 0
    %v1114 = vsel %vm150, %v1101, 0
    %v1117 = vsel %vm676, %v1102, 0
    %1119 = vmatprep.subr.bf16.mxu0 0
    %1120 = vmatpush1.bf16.msra.mxu0 %v1117
    %1121 = vmatprep.subr.bf16.mxu0 0
    %1122 = vmatpush1.bf16.msra.mxu0 0
    %1123 = vmatprep.subr.bf16.mxu0 0
    %1124 = vmatpush1.bf16.msra.mxu0 0
    %1125 = vmatprep.subr.bf16.mxu0 0
    %1126 = vmatpush1.bf16.msra.mxu0 0
    %1127 = vmatprep.subr.bf16.mxu0 0
    %1128 = vmatpush1.bf16.msra.mxu0 0
    %1129 = vmatprep.subr.bf16.mxu0 0
    %1130 = vmatpush1.bf16.msra.mxu0 0
    %1131 = vmatprep.subr.bf16.mxu0 0
    %1132 = vmatpush1.bf16.msra.mxu0 0
    %1133 = vmatprep.subr.bf16.mxu0 0
    %1134 = vmatpush1.bf16.msra.mxu0 0
    %1135 = vmatprep.subr.bf16.mxu0 0
    %1136 = vmatpush1.bf16.msra.mxu0 0
    %1137 = vmatprep.subr.bf16.mxu0 0
    %1138 = vmatpush1.bf16.msra.mxu0 0
    %1139 = vmatprep.subr.bf16.mxu0 0
    %1140 = vmatpush1.bf16.msra.mxu0 0
    %1141 = vmatprep.subr.bf16.mxu0 0
    %1142 = vmatpush1.bf16.msra.mxu0 0
    %1143 = vmatprep.subr.bf16.mxu0 0
    %1144 = vmatpush1.bf16.msra.mxu0 0
    %1145 = vmatprep.subr.bf16.mxu0 0
    %1146 = vmatpush1.bf16.msra.mxu0 0
    %1147 = vmatprep.subr.bf16.mxu0 0
    %1148 = vmatpush1.bf16.msra.mxu0 0
    %1149 = vmatprep.subr.bf16.mxu0 0
    %1150 = vmatpush1.bf16.msra.mxu0 0
    %1151 = vmatprep.mubr.bf16.mxu0 0
    %1152 = vmatmul.mubr.bf16.gmra.mrb[0].mxu0 %v1111
    %v1153 = vpop.f32.mrb[0].mxu0
    %v1154 = vadd.f32 %v1108, %v1153
    %v1155 = vpop.f32.mrb[0].mxu0
    %v1156 = vpop.f32.mrb[0].mxu0
    %v1157 = vadd.f32 %v1108, %v1156
    %v1158 = vpop.f32.mrb[0].mxu0
    %1159 = vmatprep.mubr.bf16.mxu0 0
    %1160 = vmatmul.mubr.bf16.gmra.mrb[0].mxu0 %v1114
    %v1161 = vpop.f32.mrb[0].mxu0
    %v1162 = vadd.f32 %v1108, %v1161
    %v1163 = vpop.f32.mrb[0].mxu0
    %v1164 = vpop.f32.mrb[0].mxu0
    %v1165 = vadd.f32 %v1108, %v1164
    %v1166 = vpop.f32.mrb[0].mxu0
    %1167 = vdwg.mxu0
    %v1168 = vld [vmem:[%s33] sm:$0xf]
    %v1169 = vld [vmem:[%s33 + $0x4] sm:$0xf]
    %v1170 = vld [vmem:[%s35] sm:$0x1]
    %v1172 = vlaneseq
    %v1173 = vshrl.u32 %v1172, 7
    %v1174 = vsub.s32 0, %v1173
    %v1175 = vrot.slane %v1170, %v1174
    %v1179 = vunpack.c.l.b16 %v1168
    %v1180 = vunpack.c.l.b16 %v1169
    %v1181 = vpack.c.b16 %v1180, %v1179
    %1183 = vmatprep.subr.bf16.mxu0 0
    %1184 = vmatpush1.bf16.msra.mxu0 %v1181
    %1185 = vmatprep.subr.bf16.mxu0 0
    %1186 = vmatpush1.bf16.msra.mxu0 0
    %1187 = vmatprep.subr.bf16.mxu0 0
    %1188 = vmatpush1.bf16.msra.mxu0 0
    %1189 = vmatprep.subr.bf16.mxu0 0
    %1190 = vmatpush1.bf16.msra.mxu0 0
    %1191 = vmatprep.subr.bf16.mxu0 0
    %1192 = vmatpush1.bf16.msra.mxu0 0
    %1193 = vmatprep.subr.bf16.mxu0 0
    %1194 = vmatpush1.bf16.msra.mxu0 0
    %1195 = vmatprep.subr.bf16.mxu0 0
    %1196 = vmatpush1.bf16.msra.mxu0 0
    %1197 = vmatprep.subr.bf16.mxu0 0
    %1198 = vmatpush1.bf16.msra.mxu0 0
    %1199 = vmatprep.subr.bf16.mxu0 0
    %1200 = vmatpush1.bf16.msra.mxu0 0
    %1201 = vmatprep.subr.bf16.mxu0 0
    %1202 = vmatpush1.bf16.msra.mxu0 0
    %1203 = vmatprep.subr.bf16.mxu0 0
    %1204 = vmatpush1.bf16.msra.mxu0 0
    %1205 = vmatprep.subr.bf16.mxu0 0
    %1206 = vmatpush1.bf16.msra.mxu0 0
    %1207 = vmatprep.subr.bf16.mxu0 0
    %1208 = vmatpush1.bf16.msra.mxu0 0
    %1209 = vmatprep.subr.bf16.mxu0 0
    %1210 = vmatpush1.bf16.msra.mxu0 0
    %1211 = vmatprep.subr.bf16.mxu0 0
    %1212 = vmatpush1.bf16.msra.mxu0 0
    %1213 = vmatprep.subr.bf16.mxu0 0
    %1214 = vmatpush1.bf16.msra.mxu0 0
    %1215 = vmatprep.mubr.bf16.mxu0 0
    %1216 = vmatmul.mubr.bf16.gmra.mrb[0].mxu0 %v319
    %v1217 = vpop.f32.mrb[0].mxu0
    %v1218 = vadd.f32 %v1175, %v1217
    %v1219 = vpop.f32.mrb[0].mxu0
    %v1220 = vpop.f32.mrb[0].mxu0
    %v1221 = vadd.f32 %v1175, %v1220
    %v1222 = vpop.f32.mrb[0].mxu0
    %1223 = vmatprep.mubr.bf16.mxu0 0
    %1224 = vmatmul.mubr.bf16.gmra.mrb[0].mxu0 %v322
    %v1225 = vpop.f32.mrb[0].mxu0
    %v1226 = vadd.f32 %v1175, %v1225
    %v1227 = vpop.f32.mrb[0].mxu0
    %v1228 = vpop.f32.mrb[0].mxu0
    %v1229 = vadd.f32 %v1175, %v1228
    %v1230 = vpop.f32.mrb[0].mxu0
    %1231 = vdwg.mxu0
    %v1232 = vmul.f32 %v1218, %v1218
    %v1233 = vmul.f32 %v1221, %v1221
    %v1234 = vmul.f32 %v1226, %v1226
    %v1235 = vmul.f32 %v1229, %v1229
    %v1236 = vmul.f32 %v1218, %v1232
    %v1237 = vmul.f32 %v1221, %v1233
    %v1238 = vmul.f32 %v1226, %v1234
    %v1239 = vmul.f32 %v1229, %v1235
    %v1240 = vmul.f32 %v1236, 0.044715
    %v1241 = vmul.f32 %v1237, 0.044715
    %v1242 = vmul.f32 %v1238, 0.044715
    %v1243 = vmul.f32 %v1239, 0.044715
    %v1244 = vadd.f32 %v1218, %v1240
    %v1245 = vadd.f32 %v1221, %v1241
    %v1246 = vadd.f32 %v1226, %v1242
    %v1247 = vadd.f32 %v1229, %v1243
    %v1248 = vmul.f32 %v1244, 0.7978846
    %v1249 = vmul.f32 %v1245, 0.7978846
    %v1250 = vmul.f32 %v1246, 0.7978846
    %v1251 = vmul.f32 %v1247, 0.7978846
    %v1252 = vtanh.pop %v1248
    %v1253 = vtanh.pop %v1249
    %v1254 = vtanh.pop %v1250
    %v1255 = vtanh.pop %v1251
    %v1256 = vadd.f32 %v1252, 1.0
    %v1257 = vadd.f32 %v1253, 1.0
    %v1258 = vadd.f32 %v1254, 1.0
    %v1259 = vadd.f32 %v1255, 1.0
    %v1260 = vmul.f32 %v1256, 0.5
    %v1261 = vmul.f32 %v1257, 0.5
    %v1262 = vmul.f32 %v1258, 0.5
    %v1263 = vmul.f32 %v1259, 0.5
    %v1264 = vmul.f32 %v1218, %v1260
    %v1265 = vmul.f32 %v1221, %v1261
    %v1266 = vmul.f32 %v1226, %v1262
    %v1267 = vmul.f32 %v1229, %v1263
    %1268 = vst.msk [vmem:[#allocation2 + $0x5] sm:$0xff] %vm150, %v1264
    %1269 = vst.msk [vmem:[#allocation2 + $0xd] sm:$0xff] %vm150, %v1265
    %1270 = vst.msk [vmem:[#allocation2 + $0x15] sm:$0xff] %vm150, %v1266
    %1271 = vst.msk [vmem:[#allocation2 + $0x1d] sm:$0xff] %vm150, %v1267
    %v1272 = vld [vmem:[#allocation2] sm:$0xff]
    %v1273 = vld [vmem:[#allocation2 + $0x8] sm:$0xff]
    %v1274 = vld [vmem:[#allocation2 + $0x10] sm:$0xff]
    %v1275 = vld [vmem:[#allocation2 + $0x18] sm:$0xff]
    %1276 = vst.msk [vmem:[#allocation3] sm:$0xff] %vm150, %v1272
    %1277 = vst.msk [vmem:[#allocation3 + $0x8] sm:$0xff] %vm150, %v1273
    %1278 = vst.msk [vmem:[#allocation3 + $0x10] sm:$0xff] %vm150, %v1274
    %1279 = vst.msk [vmem:[#allocation3 + $0x18] sm:$0xff] %vm150, %v1275
    %v1280 = vld [vmem:[#allocation2 + $0x1] sm:$0xff]
    %v1281 = vld [vmem:[#allocation2 + $0x9] sm:$0xff]
    %v1282 = vld [vmem:[#allocation2 + $0x11] sm:$0xff]
    %v1283 = vld [vmem:[#allocation2 + $0x19] sm:$0xff]
    %1288 = vrot.lane.b32.xlu0 %v1280, 4
    %v1289 = vpop.permute.xlu0 %1288
    %1290 = vrot.lane.b32.xlu0 %v1281, 4
    %v1291 = vpop.permute.xlu0 %1290
    %1292 = vrot.lane.b32.xlu0 %v1282, 4
    %v1293 = vpop.permute.xlu0 %1292
    %1294 = vrot.lane.b32.xlu0 %v1283, 4
    %v1295 = vpop.permute.xlu0 %1294
    %1300 = vst.msk [vmem:[#allocation3] sm:$0xff] %vm452, %v1289
    %1301 = vst.msk [vmem:[#allocation3 + $0x8] sm:$0xff] %vm452, %v1291
    %1302 = vst.msk [vmem:[#allocation3 + $0x10] sm:$0xff] %vm452, %v1293
    %1303 = vst.msk [vmem:[#allocation3 + $0x18] sm:$0xff] %vm452, %v1295
    %v1304 = vld [vmem:[#allocation2 + $0x2] sm:$0xff]
    %v1305 = vld [vmem:[#allocation2 + $0xa] sm:$0xff]
    %v1306 = vld [vmem:[#allocation2 + $0x12] sm:$0xff]
    %v1307 = vld [vmem:[#allocation2 + $0x1a] sm:$0xff]
    %1312 = vrot.lane.b32.xlu0 %v1304, 8
    %v1313 = vpop.permute.xlu0 %1312
    %1314 = vrot.lane.b32.xlu0 %v1305, 8
    %v1315 = vpop.permute.xlu0 %1314
    %1316 = vrot.lane.b32.xlu0 %v1306, 8
    %v1317 = vpop.permute.xlu0 %1316
    %1318 = vrot.lane.b32.xlu0 %v1307, 8
    %v1319 = vpop.permute.xlu0 %1318
    %1324 = vst.msk [vmem:[#allocation3] sm:$0xff] %vm477, %v1313
    %1325 = vst.msk [vmem:[#allocation3 + $0x8] sm:$0xff] %vm477, %v1315
    %1326 = vst.msk [vmem:[#allocation3 + $0x10] sm:$0xff] %vm477, %v1317
    %1327 = vst.msk [vmem:[#allocation3 + $0x18] sm:$0xff] %vm477, %v1319
    %v1328 = vld [vmem:[#allocation2 + $0x4] sm:$0xff]
    %v1329 = vld [vmem:[#allocation2 + $0xc] sm:$0xff]
    %v1330 = vld [vmem:[#allocation2 + $0x14] sm:$0xff]
    %v1331 = vld [vmem:[#allocation2 + $0x1c] sm:$0xff]
    %1336 = vrot.lane.b32.xlu0 %v1328, 12
    %v1337 = vpop.permute.xlu0 %1336
    %1338 = vrot.lane.b32.xlu0 %v1329, 12
    %v1339 = vpop.permute.xlu0 %1338
    %1340 = vrot.lane.b32.xlu0 %v1330, 12
    %v1341 = vpop.permute.xlu0 %1340
    %1342 = vrot.lane.b32.xlu0 %v1331, 12
    %v1343 = vpop.permute.xlu0 %1342
    %1348 = vst.msk [vmem:[#allocation3] sm:$0xff] %vm502, %v1337
    %1349 = vst.msk [vmem:[#allocation3 + $0x8] sm:$0xff] %vm502, %v1339
    %1350 = vst.msk [vmem:[#allocation3 + $0x10] sm:$0xff] %vm502, %v1341
    %1351 = vst.msk [vmem:[#allocation3 + $0x18] sm:$0xff] %vm502, %v1343
    %v1352 = vld [vmem:[#allocation2 + $0x5] sm:$0xff]
    %v1353 = vld [vmem:[#allocation2 + $0xd] sm:$0xff]
    %v1354 = vld [vmem:[#allocation2 + $0x15] sm:$0xff]
    %v1355 = vld [vmem:[#allocation2 + $0x1d] sm:$0xff]
    %1360 = vrot.lane.b32.xlu0 %v1352, 16
    %v1361 = vpop.permute.xlu0 %1360
    %1362 = vrot.lane.b32.xlu0 %v1353, 16
    %v1363 = vpop.permute.xlu0 %1362
    %1364 = vrot.lane.b32.xlu0 %v1354, 16
    %v1365 = vpop.permute.xlu0 %1364
    %1366 = vrot.lane.b32.xlu0 %v1355, 16
    %v1367 = vpop.permute.xlu0 %1366
    %1372 = vst.msk [vmem:[#allocation3] sm:$0xff] %vm527, %v1361
    %1373 = vst.msk [vmem:[#allocation3 + $0x8] sm:$0xff] %vm527, %v1363
    %1374 = vst.msk [vmem:[#allocation3 + $0x10] sm:$0xff] %vm527, %v1365
    %1375 = vst.msk [vmem:[#allocation3 + $0x18] sm:$0xff] %vm527, %v1367
    %v1376 = vld [vmem:[#allocation2 + $0x6] sm:$0xff]
    %v1377 = vld [vmem:[#allocation2 + $0xe] sm:$0xff]
    %v1378 = vld [vmem:[#allocation2 + $0x16] sm:$0xff]
    %v1379 = vld [vmem:[#allocation2 + $0x1e] sm:$0xff]
    %1384 = vrot.lane.b32.xlu0 %v1376, 20
    %v1385 = vpop.permute.xlu0 %1384
    %1386 = vrot.lane.b32.xlu0 %v1377, 20
    %v1387 = vpop.permute.xlu0 %1386
    %1388 = vrot.lane.b32.xlu0 %v1378, 20
    %v1389 = vpop.permute.xlu0 %1388
    %1390 = vrot.lane.b32.xlu0 %v1379, 20
    %v1391 = vpop.permute.xlu0 %1390
    %1396 = vst.msk [vmem:[#allocation3] sm:$0xff] %vm552, %v1385
    %1397 = vst.msk [vmem:[#allocation3 + $0x8] sm:$0xff] %vm552, %v1387
    %1398 = vst.msk [vmem:[#allocation3 + $0x10] sm:$0xff] %vm552, %v1389
    %1399 = vst.msk [vmem:[#allocation3 + $0x18] sm:$0xff] %vm552, %v1391
    %v1400 = vld [vmem:[#allocation2 + $0x8] sm:$0xff]
    %v1401 = vld [vmem:[#allocation2 + $0x10] sm:$0xff]
    %v1402 = vld [vmem:[#allocation2 + $0x18] sm:$0xff]
    %v1403 = vld [vmem:[#allocation2 + $0x20] sm:$0xff]
    %1408 = vrot.lane.b32.xlu0 %v1400, 24
    %v1409 = vpop.permute.xlu0 %1408
    %1410 = vrot.lane.b32.xlu0 %v1401, 24
    %v1411 = vpop.permute.xlu0 %1410
    %1412 = vrot.lane.b32.xlu0 %v1402, 24
    %v1413 = vpop.permute.xlu0 %1412
    %1414 = vrot.lane.b32.xlu0 %v1403, 24
    %v1415 = vpop.permute.xlu0 %1414
    %1420 = vst.msk [vmem:[#allocation3] sm:$0xff] %vm577, %v1409
    %1421 = vst.msk [vmem:[#allocation3 + $0x8] sm:$0xff] %vm577, %v1411
    %1422 = vst.msk [vmem:[#allocation3 + $0x10] sm:$0xff] %vm577, %v1413
    %1423 = vst.msk [vmem:[#allocation3 + $0x18] sm:$0xff] %vm577, %v1415
    %v1424 = vld [vmem:[#allocation2 + $0x9] sm:$0xff]
    %v1425 = vld [vmem:[#allocation2 + $0x11] sm:$0xff]
    %v1426 = vld [vmem:[#allocation2 + $0x19] sm:$0xff]
    %v1427 = vld [vmem:[#allocation2 + $0x21] sm:$0xff]
    %1432 = vrot.lane.b32.xlu0 %v1424, 28
    %v1433 = vpop.permute.xlu0 %1432
    %1434 = vrot.lane.b32.xlu0 %v1425, 28
    %v1435 = vpop.permute.xlu0 %1434
    %1436 = vrot.lane.b32.xlu0 %v1426, 28
    %v1437 = vpop.permute.xlu0 %1436
    %1438 = vrot.lane.b32.xlu0 %v1427, 28
    %v1439 = vpop.permute.xlu0 %1438
    %1444 = vst.msk [vmem:[#allocation3] sm:$0xff] %vm602, %v1433
    %1445 = vst.msk [vmem:[#allocation3 + $0x8] sm:$0xff] %vm602, %v1435
    %1446 = vst.msk [vmem:[#allocation3 + $0x10] sm:$0xff] %vm602, %v1437
    %1447 = vst.msk [vmem:[#allocation3 + $0x18] sm:$0xff] %vm602, %v1439
    %v1448 = vld [vmem:[#allocation2 + $0xa] sm:$0xff]
    %v1449 = vld [vmem:[#allocation2 + $0x12] sm:$0xff]
    %v1450 = vld [vmem:[#allocation2 + $0x1a] sm:$0xff]
    %v1451 = vld [vmem:[#allocation2 + $0x22] sm:$0xff]
    %1456 = vrot.lane.b32.xlu0 %v1448, 32
    %v1457 = vpop.permute.xlu0 %1456
    %1458 = vrot.lane.b32.xlu0 %v1449, 32
    %v1459 = vpop.permute.xlu0 %1458
    %1460 = vrot.lane.b32.xlu0 %v1450, 32
    %v1461 = vpop.permute.xlu0 %1460
    %1462 = vrot.lane.b32.xlu0 %v1451, 32
    %v1463 = vpop.permute.xlu0 %1462
    %1468 = vst.msk [vmem:[#allocation3] sm:$0xff] %vm627, %v1457
    %1469 = vst.msk [vmem:[#allocation3 + $0x8] sm:$0xff] %vm627, %v1459
    %1470 = vst.msk [vmem:[#allocation3 + $0x10] sm:$0xff] %vm627, %v1461
    %1471 = vst.msk [vmem:[#allocation3 + $0x18] sm:$0xff] %vm627, %v1463
    %v1472 = vld [vmem:[#allocation3] sm:$0xff]
    %v1473 = vld [vmem:[#allocation3 + $0x8] sm:$0xff]
    %v1474 = vld [vmem:[#allocation3 + $0x10] sm:$0xff]
    %v1475 = vld [vmem:[#allocation3 + $0x18] sm:$0xff]
    %v1476 = vmul.f32 %v1472, %v158
    %v1477 = vmul.f32 %v1473, %v159
    %v1478 = vmul.f32 %v1474, %v160
    %v1479 = vmul.f32 %v1475, %v161
    %v1480 = vpack.c.bf16 %v1477, %v1476
    %v1481 = vpack.c.bf16 %v1479, %v1478
    %v1482 = vld [vmem:[%s37] sm:$0xf]
    %v1483 = vld [vmem:[%s37 + $0x4] sm:$0xf]
    %v1484 = vld [vmem:[%s37 + $0x8] sm:$0xf]
    %v1485 = vld [vmem:[%s37 + $0xc] sm:$0xf]
    %v1486 = vld [vmem:[%s37 + $0x10] sm:$0x3]
    %v1487 = vld [vmem:[%s39] sm:$0x1]
    %v1489 = vlaneseq
    %v1490 = vshrl.u32 %v1489, 7
    %v1491 = vsub.s32 0, %v1490
    %v1492 = vrot.slane %v1487, %v1491
    %v1499 = vunpack.c.l.b16 %v1482
    %v1500 = vunpack.c.l.b16 %v1483
    %v1501 = vunpack.c.l.b16 %v1484
    %v1502 = vunpack.c.l.b16 %v1485
    %v1503 = vunpack.c.l.b16 %v1486
    %v1504 = vpack.c.b16 %v1500, %v1499
    %v1505 = vpack.c.b16 %v1502, %v1501
    %v1506 = vpack.c.b16 %v1503, %v1503
    %v1510 = vsel %vm669, %v1480, 0
    %v1513 = vsel %vm669, %v1481, 0
    %v1516 = vsel %vm676, %v1506, 0
    %1518 = vmatprep.subr.bf16.mxu0 0
    %1519 = vmatpush1.bf16.msra.mxu0 %v1504
    %1520 = vmatprep.subr.bf16.mxu0 0
    %1521 = vmatpush1.bf16.msra.mxu0 %v1505
    %1522 = vmatprep.subr.bf16.mxu0 0
    %1523 = vmatpush1.bf16.msra.mxu0 %v1516
    %1524 = vmatprep.subr.bf16.mxu0 0
    %1525 = vmatpush1.bf16.msra.mxu0 0
    %1526 = vmatprep.subr.bf16.mxu0 0
    %1527 = vmatpush1.bf16.msra.mxu0 0
    %1528 = vmatprep.subr.bf16.mxu0 0
    %1529 = vmatpush1.bf16.msra.mxu0 0
    %1530 = vmatprep.subr.bf16.mxu0 0
    %1531 = vmatpush1.bf16.msra.mxu0 0
    %1532 = vmatprep.subr.bf16.mxu0 0
    %1533 = vmatpush1.bf16.msra.mxu0 0
    %1534 = vmatprep.subr.bf16.mxu0 0
    %1535 = vmatpush1.bf16.msra.mxu0 0
    %1536 = vmatprep.subr.bf16.mxu0 0
    %1537 = vmatpush1.bf16.msra.mxu0 0
    %1538 = vmatprep.subr.bf16.mxu0 0
    %1539 = vmatpush1.bf16.msra.mxu0 0
    %1540 = vmatprep.subr.bf16.mxu0 0
    %1541 = vmatpush1.bf16.msra.mxu0 0
    %1542 = vmatprep.subr.bf16.mxu0 0
    %1543 = vmatpush1.bf16.msra.mxu0 0
    %1544 = vmatprep.subr.bf16.mxu0 0
    %1545 = vmatpush1.bf16.msra.mxu0 0
    %1546 = vmatprep.subr.bf16.mxu0 0
    %1547 = vmatpush1.bf16.msra.mxu0 0
    %1548 = vmatprep.subr.bf16.mxu0 0
    %1549 = vmatpush1.bf16.msra.mxu0 0
    %1550 = vmatprep.mubr.bf16.mxu0 0
    %1551 = vmatmul.mubr.bf16.gmra.mrb[0].mxu0 %v1510
    %v1552 = vpop.f32.mrb[0].mxu0
    %v1553 = vadd.f32 %v1492, %v1552
    %v1554 = vpop.f32.mrb[0].mxu0
    %v1555 = vpop.f32.mrb[0].mxu0
    %v1556 = vadd.f32 %v1492, %v1555
    %v1557 = vpop.f32.mrb[0].mxu0
    %1558 = vmatprep.mubr.bf16.mxu0 0
    %1559 = vmatmul.mubr.bf16.gmra.mrb[0].mxu0 %v1513
    %v1560 = vpop.f32.mrb[0].mxu0
    %v1561 = vadd.f32 %v1492, %v1560
    %v1562 = vpop.f32.mrb[0].mxu0
    %v1563 = vpop.f32.mrb[0].mxu0
    %v1564 = vadd.f32 %v1492, %v1563
    %v1565 = vpop.f32.mrb[0].mxu0
    %1566 = vdwg.mxu0
    %v1567 = vmul.f32 %v1553, %v1553
    %v1568 = vmul.f32 %v1556, %v1556
    %v1569 = vmul.f32 %v1561, %v1561
    %v1570 = vmul.f32 %v1564, %v1564
    %v1571 = vmul.f32 %v1553, %v1567
    %v1572 = vmul.f32 %v1556, %v1568
    %v1573 = vmul.f32 %v1561, %v1569
    %v1574 = vmul.f32 %v1564, %v1570
    %v1575 = vmul.f32 %v1571, 0.044715
    %v1576 = vmul.f32 %v1572, 0.044715
    %v1577 = vmul.f32 %v1573, 0.044715
    %v1578 = vmul.f32 %v1574, 0.044715
    %v1579 = vadd.f32 %v1553, %v1575
    %v1580 = vadd.f32 %v1556, %v1576
    %v1581 = vadd.f32 %v1561, %v1577
    %v1582 = vadd.f32 %v1564, %v1578
    %v1583 = vmul.f32 %v1579, 0.7978846
    %v1584 = vmul.f32 %v1580, 0.7978846
    %v1585 = vmul.f32 %v1581, 0.7978846
    %v1586 = vmul.f32 %v1582, 0.7978846
    %v1587 = vtanh.pop %v1583
    %v1588 = vtanh.pop %v1584
    %v1589 = vtanh.pop %v1585
    %v1590 = vtanh.pop %v1586
    %v1591 = vadd.f32 %v1587, 1.0
    %v1592 = vadd.f32 %v1588, 1.0
    %v1593 = vadd.f32 %v1589, 1.0
    %v1594 = vadd.f32 %v1590, 1.0
    %v1595 = vmul.f32 %v1591, 0.5
    %v1596 = vmul.f32 %v1592, 0.5
    %v1597 = vmul.f32 %v1593, 0.5
    %v1598 = vmul.f32 %v1594, 0.5
    %v1599 = vmul.f32 %v1553, %v1595
    %v1600 = vmul.f32 %v1556, %v1596
    %v1601 = vmul.f32 %v1561, %v1597
    %v1602 = vmul.f32 %v1564, %v1598
    %1603 = vst.msk [vmem:[#allocation2 + $0x5] sm:$0xff] %vm150, %v1599
    %1604 = vst.msk [vmem:[#allocation2 + $0xd] sm:$0xff] %vm150, %v1600
    %1605 = vst.msk [vmem:[#allocation2 + $0x15] sm:$0xff] %vm150, %v1601
    %1606 = vst.msk [vmem:[#allocation2 + $0x1d] sm:$0xff] %vm150, %v1602
    %v1607 = vld [vmem:[#allocation2] sm:$0xff]
    %v1608 = vld [vmem:[#allocation2 + $0x8] sm:$0xff]
    %v1609 = vld [vmem:[#allocation2 + $0x10] sm:$0xff]
    %v1610 = vld [vmem:[#allocation2 + $0x18] sm:$0xff]
    %1611 = vst.msk [vmem:[#allocation3] sm:$0xff] %vm150, %v1607
    %1612 = vst.msk [vmem:[#allocation3 + $0x8] sm:$0xff] %vm150, %v1608
    %1613 = vst.msk [vmem:[#allocation3 + $0x10] sm:$0xff] %vm150, %v1609
    %1614 = vst.msk [vmem:[#allocation3 + $0x18] sm:$0xff] %vm150, %v1610
    %v1615 = vld [vmem:[#allocation2 + $0x1] sm:$0xff]
    %v1616 = vld [vmem:[#allocation2 + $0x9] sm:$0xff]
    %v1617 = vld [vmem:[#allocation2 + $0x11] sm:$0xff]
    %v1618 = vld [vmem:[#allocation2 + $0x19] sm:$0xff]
    %1623 = vrot.lane.b32.xlu0 %v1615, 4
    %v1624 = vpop.permute.xlu0 %1623
    %1625 = vrot.lane.b32.xlu0 %v1616, 4
    %v1626 = vpop.permute.xlu0 %1625
    %1627 = vrot.lane.b32.xlu0 %v1617, 4
    %v1628 = vpop.permute.xlu0 %1627
    %1629 = vrot.lane.b32.xlu0 %v1618, 4
    %v1630 = vpop.permute.xlu0 %1629
    %1635 = vst.msk [vmem:[#allocation3] sm:$0xff] %vm452, %v1624
    %1636 = vst.msk [vmem:[#allocation3 + $0x8] sm:$0xff] %vm452, %v1626
    %1637 = vst.msk [vmem:[#allocation3 + $0x10] sm:$0xff] %vm452, %v1628
    %1638 = vst.msk [vmem:[#allocation3 + $0x18] sm:$0xff] %vm452, %v1630
    %v1639 = vld [vmem:[#allocation2 + $0x2] sm:$0xff]
    %v1640 = vld [vmem:[#allocation2 + $0xa] sm:$0xff]
    %v1641 = vld [vmem:[#allocation2 + $0x12] sm:$0xff]
    %v1642 = vld [vmem:[#allocation2 + $0x1a] sm:$0xff]
    %1647 = vrot.lane.b32.xlu0 %v1639, 8
    %v1648 = vpop.permute.xlu0 %1647
    %1649 = vrot.lane.b32.xlu0 %v1640, 8
    %v1650 = vpop.permute.xlu0 %1649
    %1651 = vrot.lane.b32.xlu0 %v1641, 8
    %v1652 = vpop.permute.xlu0 %1651
    %1653 = vrot.lane.b32.xlu0 %v1642, 8
    %v1654 = vpop.permute.xlu0 %1653
    %1659 = vst.msk [vmem:[#allocation3] sm:$0xff] %vm477, %v1648
    %1660 = vst.msk [vmem:[#allocation3 + $0x8] sm:$0xff] %vm477, %v1650
    %1661 = vst.msk [vmem:[#allocation3 + $0x10] sm:$0xff] %vm477, %v1652
    %1662 = vst.msk [vmem:[#allocation3 + $0x18] sm:$0xff] %vm477, %v1654
    %v1663 = vld [vmem:[#allocation2 + $0x4] sm:$0xff]
    %v1664 = vld [vmem:[#allocation2 + $0xc] sm:$0xff]
    %v1665 = vld [vmem:[#allocation2 + $0x14] sm:$0xff]
    %v1666 = vld [vmem:[#allocation2 + $0x1c] sm:$0xff]
    %1671 = vrot.lane.b32.xlu0 %v1663, 12
    %v1672 = vpop.permute.xlu0 %1671
    %1673 = vrot.lane.b32.xlu0 %v1664, 12
    %v1674 = vpop.permute.xlu0 %1673
    %1675 = vrot.lane.b32.xlu0 %v1665, 12
    %v1676 = vpop.permute.xlu0 %1675
    %1677 = vrot.lane.b32.xlu0 %v1666, 12
    %v1678 = vpop.permute.xlu0 %1677
    %1683 = vst.msk [vmem:[#allocation3] sm:$0xff] %vm502, %v1672
    %1684 = vst.msk [vmem:[#allocation3 + $0x8] sm:$0xff] %vm502, %v1674
    %1685 = vst.msk [vmem:[#allocation3 + $0x10] sm:$0xff] %vm502, %v1676
    %1686 = vst.msk [vmem:[#allocation3 + $0x18] sm:$0xff] %vm502, %v1678
    %v1687 = vld [vmem:[#allocation2 + $0x5] sm:$0xff]
    %v1688 = vld [vmem:[#allocation2 + $0xd] sm:$0xff]
    %v1689 = vld [vmem:[#allocation2 + $0x15] sm:$0xff]
    %v1690 = vld [vmem:[#allocation2 + $0x1d] sm:$0xff]
    %1695 = vrot.lane.b32.xlu0 %v1687, 16
    %v1696 = vpop.permute.xlu0 %1695
    %1697 = vrot.lane.b32.xlu0 %v1688, 16
    %v1698 = vpop.permute.xlu0 %1697
    %1699 = vrot.lane.b32.xlu0 %v1689, 16
    %v1700 = vpop.permute.xlu0 %1699
    %1701 = vrot.lane.b32.xlu0 %v1690, 16
    %v1702 = vpop.permute.xlu0 %1701
    %1707 = vst.msk [vmem:[#allocation3] sm:$0xff] %vm527, %v1696
    %1708 = vst.msk [vmem:[#allocation3 + $0x8] sm:$0xff] %vm527, %v1698
    %1709 = vst.msk [vmem:[#allocation3 + $0x10] sm:$0xff] %vm527, %v1700
    %1710 = vst.msk [vmem:[#allocation3 + $0x18] sm:$0xff] %vm527, %v1702
    %v1711 = vld [vmem:[#allocation2 + $0x6] sm:$0xff]
    %v1712 = vld [vmem:[#allocation2 + $0xe] sm:$0xff]
    %v1713 = vld [vmem:[#allocation2 + $0x16] sm:$0xff]
    %v1714 = vld [vmem:[#allocation2 + $0x1e] sm:$0xff]
    %1719 = vrot.lane.b32.xlu0 %v1711, 20
    %v1720 = vpop.permute.xlu0 %1719
    %1721 = vrot.lane.b32.xlu0 %v1712, 20
    %v1722 = vpop.permute.xlu0 %1721
    %1723 = vrot.lane.b32.xlu0 %v1713, 20
    %v1724 = vpop.permute.xlu0 %1723
    %1725 = vrot.lane.b32.xlu0 %v1714, 20
    %v1726 = vpop.permute.xlu0 %1725
    %1731 = vst.msk [vmem:[#allocation3] sm:$0xff] %vm552, %v1720
    %1732 = vst.msk [vmem:[#allocation3 + $0x8] sm:$0xff] %vm552, %v1722
    %1733 = vst.msk [vmem:[#allocation3 + $0x10] sm:$0xff] %vm552, %v1724
    %1734 = vst.msk [vmem:[#allocation3 + $0x18] sm:$0xff] %vm552, %v1726
    %v1735 = vld [vmem:[#allocation2 + $0x8] sm:$0xff]
    %v1736 = vld [vmem:[#allocation2 + $0x10] sm:$0xff]
    %v1737 = vld [vmem:[#allocation2 + $0x18] sm:$0xff]
    %v1738 = vld [vmem:[#allocation2 + $0x20] sm:$0xff]
    %1743 = vrot.lane.b32.xlu0 %v1735, 24
    %v1744 = vpop.permute.xlu0 %1743
    %1745 = vrot.lane.b32.xlu0 %v1736, 24
    %v1746 = vpop.permute.xlu0 %1745
    %1747 = vrot.lane.b32.xlu0 %v1737, 24
    %v1748 = vpop.permute.xlu0 %1747
    %1749 = vrot.lane.b32.xlu0 %v1738, 24
    %v1750 = vpop.permute.xlu0 %1749
    %1755 = vst.msk [vmem:[#allocation3] sm:$0xff] %vm577, %v1744
    %1756 = vst.msk [vmem:[#allocation3 + $0x8] sm:$0xff] %vm577, %v1746
    %1757 = vst.msk [vmem:[#allocation3 + $0x10] sm:$0xff] %vm577, %v1748
    %1758 = vst.msk [vmem:[#allocation3 + $0x18] sm:$0xff] %vm577, %v1750
    %v1759 = vld [vmem:[#allocation2 + $0x9] sm:$0xff]
    %v1760 = vld [vmem:[#allocation2 + $0x11] sm:$0xff]
    %v1761 = vld [vmem:[#allocation2 + $0x19] sm:$0xff]
    %v1762 = vld [vmem:[#allocation2 + $0x21] sm:$0xff]
    %1767 = vrot.lane.b32.xlu0 %v1759, 28
    %v1768 = vpop.permute.xlu0 %1767
    %1769 = vrot.lane.b32.xlu0 %v1760, 28
    %v1770 = vpop.permute.xlu0 %1769
    %1771 = vrot.lane.b32.xlu0 %v1761, 28
    %v1772 = vpop.permute.xlu0 %1771
    %1773 = vrot.lane.b32.xlu0 %v1762, 28
    %v1774 = vpop.permute.xlu0 %1773
    %1779 = vst.msk [vmem:[#allocation3] sm:$0xff] %vm602, %v1768
    %1780 = vst.msk [vmem:[#allocation3 + $0x8] sm:$0xff] %vm602, %v1770
    %1781 = vst.msk [vmem:[#allocation3 + $0x10] sm:$0xff] %vm602, %v1772
    %1782 = vst.msk [vmem:[#allocation3 + $0x18] sm:$0xff] %vm602, %v1774
    %v1783 = vld [vmem:[#allocation2 + $0xa] sm:$0xff]
    %v1784 = vld [vmem:[#allocation2 + $0x12] sm:$0xff]
    %v1785 = vld [vmem:[#allocation2 + $0x1a] sm:$0xff]
    %v1786 = vld [vmem:[#allocation2 + $0x22] sm:$0xff]
    %1791 = vrot.lane.b32.xlu0 %v1783, 32
    %v1792 = vpop.permute.xlu0 %1791
    %1793 = vrot.lane.b32.xlu0 %v1784, 32
    %v1794 = vpop.permute.xlu0 %1793
    %1795 = vrot.lane.b32.xlu0 %v1785, 32
    %v1796 = vpop.permute.xlu0 %1795
    %1797 = vrot.lane.b32.xlu0 %v1786, 32
    %v1798 = vpop.permute.xlu0 %1797
    %1803 = vst.msk [vmem:[#allocation3] sm:$0xff] %vm627, %v1792
    %1804 = vst.msk [vmem:[#allocation3 + $0x8] sm:$0xff] %vm627, %v1794
    %1805 = vst.msk [vmem:[#allocation3 + $0x10] sm:$0xff] %vm627, %v1796
    %1806 = vst.msk [vmem:[#allocation3 + $0x18] sm:$0xff] %vm627, %v1798
    %v1807 = vld [vmem:[#allocation3] sm:$0xff]
    %v1808 = vld [vmem:[#allocation3 + $0x8] sm:$0xff]
    %v1809 = vld [vmem:[#allocation3 + $0x10] sm:$0xff]
    %v1810 = vld [vmem:[#allocation3 + $0x18] sm:$0xff]
    %v1811 = vmul.f32 %v1807, %v158
    %v1812 = vmul.f32 %v1808, %v159
    %v1813 = vmul.f32 %v1809, %v160
    %v1814 = vmul.f32 %v1810, %v161
    %v1815 = vpack.c.bf16 %v1812, %v1811
    %v1816 = vpack.c.bf16 %v1814, %v1813
    %v1817 = vld [vmem:[%s41] sm:$0xf]
    %v1818 = vld [vmem:[%s41 + $0x4] sm:$0xf]
    %v1819 = vld [vmem:[%s41 + $0x8] sm:$0xf]
    %v1820 = vld [vmem:[%s41 + $0xc] sm:$0xf]
    %v1821 = vld [vmem:[%s41 + $0x10] sm:$0x3]
    %v1822 = vld [vmem:[%s43] sm:$0x1]
    %v1824 = vlaneseq
    %v1825 = vshrl.u32 %v1824, 7
    %v1826 = vsub.s32 0, %v1825
    %v1827 = vrot.slane %v1822, %v1826
    %v1834 = vunpack.c.l.b16 %v1817
    %v1835 = vunpack.c.l.b16 %v1818
    %v1836 = vunpack.c.l.b16 %v1819
    %v1837 = vunpack.c.l.b16 %v1820
    %v1838 = vunpack.c.l.b16 %v1821
    %v1839 = vpack.c.b16 %v1835, %v1834
    %v1840 = vpack.c.b16 %v1837, %v1836
    %v1841 = vpack.c.b16 %v1838, %v1838
    %v1845 = vsel %vm669, %v1815, 0
    %v1848 = vsel %vm669, %v1816, 0
    %v1851 = vsel %vm676, %v1841, 0
    %1853 = vmatprep.subr.bf16.mxu0 0
    %1854 = vmatpush1.bf16.msra.mxu0 %v1839
    %1855 = vmatprep.subr.bf16.mxu0 0
    %1856 = vmatpush1.bf16.msra.mxu0 %v1840
    %1857 = vmatprep.subr.bf16.mxu0 0
    %1858 = vmatpush1.bf16.msra.mxu0 %v1851
    %1859 = vmatprep.subr.bf16.mxu0 0
    %1860 = vmatpush1.bf16.msra.mxu0 0
    %1861 = vmatprep.subr.bf16.mxu0 0
    %1862 = vmatpush1.bf16.msra.mxu0 0
    %1863 = vmatprep.subr.bf16.mxu0 0
    %1864 = vmatpush1.bf16.msra.mxu0 0
    %1865 = vmatprep.subr.bf16.mxu0 0
    %1866 = vmatpush1.bf16.msra.mxu0 0
    %1867 = vmatprep.subr.bf16.mxu0 0
    %1868 = vmatpush1.bf16.msra.mxu0 0
    %1869 = vmatprep.subr.bf16.mxu0 0
    %1870 = vmatpush1.bf16.msra.mxu0 0
    %1871 = vmatprep.subr.bf16.mxu0 0
    %1872 = vmatpush1.bf16.msra.mxu0 0
    %1873 = vmatprep.subr.bf16.mxu0 0
    %1874 = vmatpush1.bf16.msra.mxu0 0
    %1875 = vmatprep.subr.bf16.mxu0 0
    %1876 = vmatpush1.bf16.msra.mxu0 0
    %1877 = vmatprep.subr.bf16.mxu0 0
    %1878 = vmatpush1.bf16.msra.mxu0 0
    %1879 = vmatprep.subr.bf16.mxu0 0
    %1880 = vmatpush1.bf16.msra.mxu0 0
    %1881 = vmatprep.subr.bf16.mxu0 0
    %1882 = vmatpush1.bf16.msra.mxu0 0
    %1883 = vmatprep.subr.bf16.mxu0 0
    %1884 = vmatpush1.bf16.msra.mxu0 0
    %1885 = vmatprep.mubr.bf16.mxu0 0
    %1886 = vmatmul.mubr.bf16.gmra.mrb[0].mxu0 %v1845
    %v1887 = vpop.f32.mrb[0].mxu0
    %v1888 = vadd.f32 %v1827, %v1887
    %v1889 = vpop.f32.mrb[0].mxu0
    %v1890 = vpop.f32.mrb[0].mxu0
    %v1891 = vadd.f32 %v1827, %v1890
    %v1892 = vpop.f32.mrb[0].mxu0
    %1893 = vmatprep.mubr.bf16.mxu0 0
    %1894 = vmatmul.mubr.bf16.gmra.mrb[0].mxu0 %v1848
    %v1895 = vpop.f32.mrb[0].mxu0
    %v1896 = vadd.f32 %v1827, %v1895
    %v1897 = vpop.f32.mrb[0].mxu0
    %v1898 = vpop.f32.mrb[0].mxu0
    %v1899 = vadd.f32 %v1827, %v1898
    %v1900 = vpop.f32.mrb[0].mxu0
    %1901 = vdwg.mxu0
    %v1902 = vmul.f32 %v1888, %v1888
    %v1903 = vmul.f32 %v1891, %v1891
    %v1904 = vmul.f32 %v1896, %v1896
    %v1905 = vmul.f32 %v1899, %v1899
    %v1906 = vmul.f32 %v1888, %v1902
    %v1907 = vmul.f32 %v1891, %v1903
    %v1908 = vmul.f32 %v1896, %v1904
    %v1909 = vmul.f32 %v1899, %v1905
    %v1910 = vmul.f32 %v1906, 0.044715
    %v1911 = vmul.f32 %v1907, 0.044715
    %v1912 = vmul.f32 %v1908, 0.044715
    %v1913 = vmul.f32 %v1909, 0.044715
    %v1914 = vadd.f32 %v1888, %v1910
    %v1915 = vadd.f32 %v1891, %v1911
    %v1916 = vadd.f32 %v1896, %v1912
    %v1917 = vadd.f32 %v1899, %v1913
    %v1918 = vmul.f32 %v1914, 0.7978846
    %v1919 = vmul.f32 %v1915, 0.7978846
    %v1920 = vmul.f32 %v1916, 0.7978846
    %v1921 = vmul.f32 %v1917, 0.7978846
    %v1922 = vtanh.pop %v1918
    %v1923 = vtanh.pop %v1919
    %v1924 = vtanh.pop %v1920
    %v1925 = vtanh.pop %v1921
    %v1926 = vadd.f32 %v1922, 1.0
    %v1927 = vadd.f32 %v1923, 1.0
    %v1928 = vadd.f32 %v1924, 1.0
    %v1929 = vadd.f32 %v1925, 1.0
    %v1930 = vmul.f32 %v1926, 0.5
    %v1931 = vmul.f32 %v1927, 0.5
    %v1932 = vmul.f32 %v1928, 0.5
    %v1933 = vmul.f32 %v1929, 0.5
    %v1934 = vmul.f32 %v1888, %v1930
    %v1935 = vmul.f32 %v1891, %v1931
    %v1936 = vmul.f32 %v1896, %v1932
    %v1937 = vmul.f32 %v1899, %v1933
    %v1938 = vpack.c.bf16 %v1935, %v1934
    %v1939 = vpack.c.bf16 %v1937, %v1936
    %v1940 = vld [vmem:[%s45] sm:$0x3]
    %v1941 = vld [vmem:[%s47] sm:$0x1]
    %v1943 = vlaneseq
    %v1944 = vshrl.u32 %v1943, 7
    %v1945 = vsub.s32 0, %v1944
    %v1946 = vrot.slane %v1941, %v1945
    %v1949 = vsel %vm150, %v1938, 0
    %v1952 = vsel %vm150, %v1939, 0
    %v1955 = vsel %vm676, %v1940, 0
    %1957 = vmatprep.subr.bf16.mxu0 0
    %1958 = vmatpush1.bf16.msra.mxu0 %v1955
    %1959 = vmatprep.subr.bf16.mxu0 0
    %1960 = vmatpush1.bf16.msra.mxu0 0
    %1961 = vmatprep.subr.bf16.mxu0 0
    %1962 = vmatpush1.bf16.msra.mxu0 0
    %1963 = vmatprep.subr.bf16.mxu0 0
    %1964 = vmatpush1.bf16.msra.mxu0 0
    %1965 = vmatprep.subr.bf16.mxu0 0
    %1966 = vmatpush1.bf16.msra.mxu0 0
    %1967 = vmatprep.subr.bf16.mxu0 0
    %1968 = vmatpush1.bf16.msra.mxu0 0
    %1969 = vmatprep.subr.bf16.mxu0 0
    %1970 = vmatpush1.bf16.msra.mxu0 0
    %1971 = vmatprep.subr.bf16.mxu0 0
    %1972 = vmatpush1.bf16.msra.mxu0 0
    %1973 = vmatprep.subr.bf16.mxu0 0
    %1974 = vmatpush1.bf16.msra.mxu0 0
    %1975 = vmatprep.subr.bf16.mxu0 0
    %1976 = vmatpush1.bf16.msra.mxu0 0
    %1977 = vmatprep.subr.bf16.mxu0 0
    %1978 = vmatpush1.bf16.msra.mxu0 0
    %1979 = vmatprep.subr.bf16.mxu0 0
    %1980 = vmatpush1.bf16.msra.mxu0 0
    %1981 = vmatprep.subr.bf16.mxu0 0
    %1982 = vmatpush1.bf16.msra.mxu0 0
    %1983 = vmatprep.subr.bf16.mxu0 0
    %1984 = vmatpush1.bf16.msra.mxu0 0
    %1985 = vmatprep.subr.bf16.mxu0 0
    %1986 = vmatpush1.bf16.msra.mxu0 0
    %1987 = vmatprep.subr.bf16.mxu0 0
    %1988 = vmatpush1.bf16.msra.mxu0 0
    %1989 = vmatprep.mubr.bf16.mxu0 0
    %1990 = vmatmul.mubr.bf16.gmra.mrb[0].mxu0 %v1949
    %v1991 = vpop.f32.mrb[0].mxu0
    %v1992 = vadd.f32 %v1946, %v1991
    %v1993 = vpop.f32.mrb[0].mxu0
    %v1994 = vpop.f32.mrb[0].mxu0
    %v1995 = vadd.f32 %v1946, %v1994
    %v1996 = vpop.f32.mrb[0].mxu0
    %1997 = vmatprep.mubr.bf16.mxu0 0
    %1998 = vmatmul.mubr.bf16.gmra.mrb[0].mxu0 %v1952
    %v1999 = vpop.f32.mrb[0].mxu0
    %v2000 = vadd.f32 %v1946, %v1999
    %v2001 = vpop.f32.mrb[0].mxu0
    %v2002 = vpop.f32.mrb[0].mxu0
    %v2003 = vadd.f32 %v1946, %v2002
    %v2004 = vpop.f32.mrb[0].mxu0
    %2005 = vdwg.mxu0
    %v2006 = vld [vmem:[%s7] sm:$0xff]
    %vm2007 = vcmask 64512
    %v2009 = vsel %vm2007, %v1154, 0
    %v2012 = vsel %vm2007, %v1157, 0
    %v2015 = vsel %vm2007, %v1162, 0
    %v2018 = vsel %vm2007, %v1165, 0
    %2020 = vmatprep.subr.mxu0 0.0
    %2021 = vmatpush1.msra.mxu0 %v2006
    %2022 = vmatprep.subr.mxu0 0.0
    %2023 = vmatpush1.msra.mxu0 0.0
    %2024 = vmatprep.subr.mxu0 0.0
    %2025 = vmatpush1.msra.mxu0 0.0
    %2026 = vmatprep.subr.mxu0 0.0
    %2027 = vmatpush1.msra.mxu0 0.0
    %2028 = vmatprep.subr.mxu0 0.0
    %2029 = vmatpush1.msra.mxu0 0.0
    %2030 = vmatprep.subr.mxu0 0.0
    %2031 = vmatpush1.msra.mxu0 0.0
    %2032 = vmatprep.subr.mxu0 0.0
    %2033 = vmatpush1.msra.mxu0 0.0
    %2034 = vmatprep.subr.mxu0 0.0
    %2035 = vmatpush1.msra.mxu0 0.0
    %2036 = vmatprep.subr.mxu0 0.0
    %2037 = vmatpush1.msra.mxu0 0.0
    %2038 = vmatprep.subr.mxu0 0.0
    %2039 = vmatpush1.msra.mxu0 0.0
    %2040 = vmatprep.subr.mxu0 0.0
    %2041 = vmatpush1.msra.mxu0 0.0
    %2042 = vmatprep.subr.mxu0 0.0
    %2043 = vmatpush1.msra.mxu0 0.0
    %2044 = vmatprep.subr.mxu0 0.0
    %2045 = vmatpush1.msra.mxu0 0.0
    %2046 = vmatprep.subr.mxu0 0.0
    %2047 = vmatpush1.msra.mxu0 0.0
    %2048 = vmatprep.subr.mxu0 0.0
    %2049 = vmatpush1.msra.mxu0 0.0
    %2050 = vmatprep.subr.mxu0 0.0
    %2051 = vmatpush1.msra.mxu0 0.0
    %2052 = vmatprep.subr.mxu0 0.0
    %2053 = vmatpush1.msra.mxu0 0.0
    %2054 = vmatprep.subr.mxu0 0.0
    %2055 = vmatpush1.msra.mxu0 0.0
    %2056 = vmatprep.subr.mxu0 0.0
    %2057 = vmatpush1.msra.mxu0 0.0
    %2058 = vmatprep.subr.mxu0 0.0
    %2059 = vmatpush1.msra.mxu0 0.0
    %2060 = vmatprep.subr.mxu0 0.0
    %2061 = vmatpush1.msra.mxu0 0.0
    %2062 = vmatprep.subr.mxu0 0.0
    %2063 = vmatpush1.msra.mxu0 0.0
    %2064 = vmatprep.subr.mxu0 0.0
    %2065 = vmatpush1.msra.mxu0 0.0
    %2066 = vmatprep.subr.mxu0 0.0
    %2067 = vmatpush1.msra.mxu0 0.0
    %2068 = vmatprep.subr.mxu0 0.0
    %2069 = vmatpush1.msra.mxu0 0.0
    %2070 = vmatprep.subr.mxu0 0.0
    %2071 = vmatpush1.msra.mxu0 0.0
    %2072 = vmatprep.subr.mxu0 0.0
    %2073 = vmatpush1.msra.mxu0 0.0
    %2074 = vmatprep.subr.mxu0 0.0
    %2075 = vmatpush1.msra.mxu0 0.0
    %2076 = vmatprep.subr.mxu0 0.0
    %2077 = vmatpush1.msra.mxu0 0.0
    %2078 = vmatprep.subr.mxu0 0.0
    %2079 = vmatpush1.msra.mxu0 0.0
    %2080 = vmatprep.subr.mxu0 0.0
    %2081 = vmatpush1.msra.mxu0 0.0
    %2082 = vmatprep.subr.mxu0 0.0
    %2083 = vmatpush1.msra.mxu0 0.0
    %2084 = vmatprep.mubr.f32.mxu0 0.0
    %2085 = vmatmul.mubr.f32.gmra.mrb[0].mxu0 %v2009
    %v2086 = vpop.f32.mrb[0].mxu0
    %v2087 = vadd.f32 0.0, %v2086
    %v2088 = vpop.f32.mrb[0].mxu0
    %2089 = vmatprep.mubr.f32.mxu0 0.0
    %2090 = vmatmul.mubr.f32.gmra.mrb[0].mxu0 %v2012
    %v2091 = vpop.f32.mrb[0].mxu0
    %v2092 = vadd.f32 0.0, %v2091
    %v2093 = vpop.f32.mrb[0].mxu0
    %2094 = vmatprep.mubr.f32.mxu0 0.0
    %2095 = vmatmul.mubr.f32.gmra.mrb[0].mxu0 %v2015
    %v2096 = vpop.f32.mrb[0].mxu0
    %v2097 = vadd.f32 0.0, %v2096
    %v2098 = vpop.f32.mrb[0].mxu0
    %2099 = vmatprep.mubr.f32.mxu0 0.0
    %2100 = vmatmul.mubr.f32.gmra.mrb[0].mxu0 %v2018
    %v2101 = vpop.f32.mrb[0].mxu0
    %v2102 = vadd.f32 0.0, %v2101
    %v2103 = vpop.f32.mrb[0].mxu0
    %2104 = vdwg.mxu0
    %vm2105 = vcmask 523264
    %2106 = vst.msk [vmem:[#allocation4] sm:$0xff] %vm2105, %v2087
    %2107 = vst.msk [vmem:[#allocation4 + $0x8] sm:$0xff] %vm2105, %v2092
    %2108 = vst.msk [vmem:[#allocation4 + $0x10] sm:$0xff] %vm2105, %v2097
    %2109 = vst.msk [vmem:[#allocation4 + $0x18] sm:$0xff] %vm2105, %v2102
    %v2110 = vld [vmem:[%s5] sm:$0xff]
    %v2111 = vld [vmem:[%s5 + $0x8] sm:$0xff]
    %v2112 = vld [vmem:[%s5 + $0x10] sm:$0xff]
    %v2113 = vld [vmem:[%s5 + $0x18] sm:$0xff]
    %v2115 = vsel %vm2007, %v2110, 0
    %v2118 = vsel %vm2007, %v2111, 0
    %v2121 = vsel %vm2007, %v2112, 0
    %v2124 = vsel %vm2007, %v2113, 0
    %2126 = vmatprep.subr.mxu0 0.0
    %2127 = vmatpush1.msra.mxu0 %v2006
    %2128 = vmatprep.subr.mxu0 0.0
    %2129 = vmatpush1.msra.mxu0 0.0
    %2130 = vmatprep.subr.mxu0 0.0
    %2131 = vmatpush1.msra.mxu0 0.0
    %2132 = vmatprep.subr.mxu0 0.0
    %2133 = vmatpush1.msra.mxu0 0.0
    %2134 = vmatprep.subr.mxu0 0.0
    %2135 = vmatpush1.msra.mxu0 0.0
    %2136 = vmatprep.subr.mxu0 0.0
    %2137 = vmatpush1.msra.mxu0 0.0
    %2138 = vmatprep.subr.mxu0 0.0
    %2139 = vmatpush1.msra.mxu0 0.0
    %2140 = vmatprep.subr.mxu0 0.0
    %2141 = vmatpush1.msra.mxu0 0.0
    %2142 = vmatprep.subr.mxu0 0.0
    %2143 = vmatpush1.msra.mxu0 0.0
    %2144 = vmatprep.subr.mxu0 0.0
    %2145 = vmatpush1.msra.mxu0 0.0
    %2146 = vmatprep.subr.mxu0 0.0
    %2147 = vmatpush1.msra.mxu0 0.0
    %2148 = vmatprep.subr.mxu0 0.0
    %2149 = vmatpush1.msra.mxu0 0.0
    %2150 = vmatprep.subr.mxu0 0.0
    %2151 = vmatpush1.msra.mxu0 0.0
    %2152 = vmatprep.subr.mxu0 0.0
    %2153 = vmatpush1.msra.mxu0 0.0
    %2154 = vmatprep.subr.mxu0 0.0
    %2155 = vmatpush1.msra.mxu0 0.0
    %2156 = vmatprep.subr.mxu0 0.0
    %2157 = vmatpush1.msra.mxu0 0.0
    %2158 = vmatprep.subr.mxu0 0.0
    %2159 = vmatpush1.msra.mxu0 0.0
    %2160 = vmatprep.subr.mxu0 0.0
    %2161 = vmatpush1.msra.mxu0 0.0
    %2162 = vmatprep.subr.mxu0 0.0
    %2163 = vmatpush1.msra.mxu0 0.0
    %2164 = vmatprep.subr.mxu0 0.0
    %2165 = vmatpush1.msra.mxu0 0.0
    %2166 = vmatprep.subr.mxu0 0.0
    %2167 = vmatpush1.msra.mxu0 0.0
    %2168 = vmatprep.subr.mxu0 0.0
    %2169 = vmatpush1.msra.mxu0 0.0
    %2170 = vmatprep.subr.mxu0 0.0
    %2171 = vmatpush1.msra.mxu0 0.0
    %2172 = vmatprep.subr.mxu0 0.0
    %2173 = vmatpush1.msra.mxu0 0.0
    %2174 = vmatprep.subr.mxu0 0.0
    %2175 = vmatpush1.msra.mxu0 0.0
    %2176 = vmatprep.subr.mxu0 0.0
    %2177 = vmatpush1.msra.mxu0 0.0
    %2178 = vmatprep.subr.mxu0 0.0
    %2179 = vmatpush1.msra.mxu0 0.0
    %2180 = vmatprep.subr.mxu0 0.0
    %2181 = vmatpush1.msra.mxu0 0.0
    %2182 = vmatprep.subr.mxu0 0.0
    %2183 = vmatpush1.msra.mxu0 0.0
    %2184 = vmatprep.subr.mxu0 0.0
    %2185 = vmatpush1.msra.mxu0 0.0
    %2186 = vmatprep.subr.mxu0 0.0
    %2187 = vmatpush1.msra.mxu0 0.0
    %2188 = vmatprep.subr.mxu0 0.0
    %2189 = vmatpush1.msra.mxu0 0.0
    %2190 = vmatprep.mubr.f32.mxu0 0.0
    %2191 = vmatmul.mubr.f32.gmra.mrb[0].mxu0 %v2115
    %v2192 = vpop.f32.mrb[0].mxu0
    %v2193 = vadd.f32 0.0, %v2192
    %v2194 = vpop.f32.mrb[0].mxu0
    %2195 = vmatprep.mubr.f32.mxu0 0.0
    %2196 = vmatmul.mubr.f32.gmra.mrb[0].mxu0 %v2118
    %v2197 = vpop.f32.mrb[0].mxu0
    %v2198 = vadd.f32 0.0, %v2197
    %v2199 = vpop.f32.mrb[0].mxu0
    %2200 = vmatprep.mubr.f32.mxu0 0.0
    %2201 = vmatmul.mubr.f32.gmra.mrb[0].mxu0 %v2121
    %v2202 = vpop.f32.mrb[0].mxu0
    %v2203 = vadd.f32 0.0, %v2202
    %v2204 = vpop.f32.mrb[0].mxu0
    %2205 = vmatprep.mubr.f32.mxu0 0.0
    %2206 = vmatmul.mubr.f32.gmra.mrb[0].mxu0 %v2124
    %v2207 = vpop.f32.mrb[0].mxu0
    %v2208 = vadd.f32 0.0, %v2207
    %v2209 = vpop.f32.mrb[0].mxu0
    %2210 = vdwg.mxu0
    %2211 = vst.msk [vmem:[#allocation6] sm:$0xff] %vm2105, %v2193
    %2212 = vst.msk [vmem:[#allocation6 + $0x8] sm:$0xff] %vm2105, %v2198
    %2213 = vst.msk [vmem:[#allocation6 + $0x10] sm:$0xff] %vm2105, %v2203
    %2214 = vst.msk [vmem:[#allocation6 + $0x18] sm:$0xff] %vm2105, %v2208
    %v2215 = vld [vmem:[%s9] sm:$0xff]
    %v2216 = vld [vmem:[%s9 + $0x8] sm:$0xff]
    %v2217 = vld [vmem:[%s9 + $0x10] sm:$0xff]
    %v2218 = vld [vmem:[%s9 + $0x18] sm:$0xff]
    %v2219 = vxor.u32 %v2215, 2147483648
    %v2220 = vxor.u32 %v2216, 2147483648
    %v2221 = vxor.u32 %v2217, 2147483648
    %v2222 = vxor.u32 %v2218, 2147483648
    %v2223 = vmul.f32 %v2219, 1.442695
    %v2224 = vpow.pop %v2223
    %v2225 = vmul.f32 %v2220, 1.442695
    %v2226 = vpow.pop %v2225
    %v2227 = vmul.f32 %v2221, 1.442695
    %v2228 = vpow.pop %v2227
    %v2229 = vmul.f32 %v2222, 1.442695
    %v2230 = vpow.pop %v2229
    %v2231 = vadd.f32 %v2224, 1.0
    %v2232 = vadd.f32 %v2226, 1.0
    %v2233 = vadd.f32 %v2228, 1.0
    %v2234 = vadd.f32 %v2230, 1.0
    %v2235 = vrcp.pop %v2231
    %v2236 = vmul.f32 1.0, %v2235
    %v2237 = vrcp.pop %v2232
    %v2238 = vmul.f32 1.0, %v2237
    %v2239 = vrcp.pop %v2233
    %v2240 = vmul.f32 1.0, %v2239
    %v2241 = vrcp.pop %v2234
    %v2242 = vmul.f32 1.0, %v2241
    %v2243 = vmul.f32 %v1154, %v2236
    %v2244 = vmul.f32 %v1157, %v2238
    %v2245 = vmul.f32 %v1162, %v2240
    %v2246 = vmul.f32 %v1165, %v2242
    %v2247 = vld [vmem:[%s11] sm:$0xff]
    %v2248 = vld [vmem:[%s11 + $0x8] sm:$0xff]
    %v2249 = vld [vmem:[%s11 + $0x10] sm:$0xff]
    %v2250 = vld [vmem:[%s11 + $0x18] sm:$0xff]
    %2252 = vset.pattern.permute.xlu0 0
    %2253 = vperm.xlu0 %2252, %v2247
    %v2254 = vpop.permute.xlu0 %2253
    %2257 = vset.pattern.permute.xlu0 0
    %2258 = vperm.xlu0 %2257, %v2248
    %v2259 = vpop.permute.xlu0 %2258
    %2262 = vset.pattern.permute.xlu0 0
    %2263 = vperm.xlu0 %2262, %v2249
    %v2264 = vpop.permute.xlu0 %2263
    %2267 = vset.pattern.permute.xlu0 0
    %2268 = vperm.xlu0 %2267, %v2250
    %v2269 = vpop.permute.xlu0 %2268
    %v2271 = vmul.f32 %v2243, %v2254
    %v2272 = vmul.f32 %v2244, %v2259
    %v2273 = vmul.f32 %v2245, %v2264
    %v2274 = vmul.f32 %v2246, %v2269
    %v2275 = vadd.f32 %v162, %v1992
    %v2276 = vadd.f32 %v163, %v1995
    %v2277 = vadd.f32 %v164, %v2000
    %v2278 = vadd.f32 %v165, %v2003
    %v2279 = vpack.c.bf16 %v2272, %v2271
    %v2280 = vpack.c.bf16 %v2274, %v2273
    %v2281 = vld [vmem:[%s49] sm:$0xf]
    %v2282 = vld [vmem:[%s51] sm:$0x1]
    %v2284 = vlaneseq
    %v2285 = vshrl.u32 %v2284, 7
    %v2286 = vsub.s32 0, %v2285
    %v2287 = vrot.slane %v2282, %v2286
    %v2290 = vsel %vm2007, %v2279, 0
    %v2293 = vsel %vm2007, %v2280, 0
    %vm2295 = vcmask 1043456
    %v2297 = vsel %vm2295, %v2281, 0
    %2299 = vmatprep.subr.bf16.mxu0 0
    %2300 = vmatpush1.bf16.msra.mxu0 %v2297
    %2301 = vmatprep.subr.bf16.mxu0 0
    %2302 = vmatpush1.bf16.msra.mxu0 0
    %2303 = vmatprep.subr.bf16.mxu0 0
    %2304 = vmatpush1.bf16.msra.mxu0 0
    %2305 = vmatprep.subr.bf16.mxu0 0
    %2306 = vmatpush1.bf16.msra.mxu0 0
    %2307 = vmatprep.subr.bf16.mxu0 0
    %2308 = vmatpush1.bf16.msra.mxu0 0
    %2309 = vmatprep.subr.bf16.mxu0 0
    %2310 = vmatpush1.bf16.msra.mxu0 0
    %2311 = vmatprep.subr.bf16.mxu0 0
    %2312 = vmatpush1.bf16.msra.mxu0 0
    %2313 = vmatprep.subr.bf16.mxu0 0
    %2314 = vmatpush1.bf16.msra.mxu0 0
    %2315 = vmatprep.subr.bf16.mxu0 0
    %2316 = vmatpush1.bf16.msra.mxu0 0
    %2317 = vmatprep.subr.bf16.mxu0 0
    %2318 = vmatpush1.bf16.msra.mxu0 0
    %2319 = vmatprep.subr.bf16.mxu0 0
    %2320 = vmatpush1.bf16.msra.mxu0 0
    %2321 = vmatprep.subr.bf16.mxu0 0
    %2322 = vmatpush1.bf16.msra.mxu0 0
    %2323 = vmatprep.subr.bf16.mxu0 0
    %2324 = vmatpush1.bf16.msra.mxu0 0
    %2325 = vmatprep.subr.bf16.mxu0 0
    %2326 = vmatpush1.bf16.msra.mxu0 0
    %2327 = vmatprep.subr.bf16.mxu0 0
    %2328 = vmatpush1.bf16.msra.mxu0 0
    %2329 = vmatprep.subr.bf16.mxu0 0
    %2330 = vmatpush1.bf16.msra.mxu0 0
    %2331 = vmatprep.mubr.bf16.mxu0 0
    %2332 = vmatmul.mubr.bf16.gmra.mrb[0].mxu0 %v2290
    %v2333 = vpop.f32.mrb[0].mxu0
    %v2334 = vadd.f32 %v2287, %v2333
    %v2335 = vpop.f32.mrb[0].mxu0
    %v2336 = vpop.f32.mrb[0].mxu0
    %v2337 = vadd.f32 %v2287, %v2336
    %v2338 = vpop.f32.mrb[0].mxu0
    %2339 = vmatprep.mubr.bf16.mxu0 0
    %2340 = vmatmul.mubr.bf16.gmra.mrb[0].mxu0 %v2293
    %v2341 = vpop.f32.mrb[0].mxu0
    %v2342 = vadd.f32 %v2287, %v2341
    %v2343 = vpop.f32.mrb[0].mxu0
    %v2344 = vpop.f32.mrb[0].mxu0
    %v2345 = vadd.f32 %v2287, %v2344
    %v2346 = vpop.f32.mrb[0].mxu0
    %2347 = vdwg.mxu0
    %v2348 = vadd.f32 %v2275, %v2334
    %v2349 = vadd.f32 %v2276, %v2337
    %v2350 = vadd.f32 %v2277, %v2342
    %v2351 = vadd.f32 %v2278, %v2345
    %v2352 = vmul.f32 %v2348, %v2348
    %v2353 = vmul.f32 %v2349, %v2349
    %v2354 = vmul.f32 %v2350, %v2350
    %v2355 = vmul.f32 %v2351, %v2351
    %v2356 = vmul.f32 %v2348, %v2352
    %v2357 = vmul.f32 %v2349, %v2353
    %v2358 = vmul.f32 %v2350, %v2354
    %v2359 = vmul.f32 %v2351, %v2355
    %v2360 = vmul.f32 %v2356, 0.044715
    %v2361 = vmul.f32 %v2357, 0.044715
    %v2362 = vmul.f32 %v2358, 0.044715
    %v2363 = vmul.f32 %v2359, 0.044715
    %v2364 = vadd.f32 %v2348, %v2360
    %v2365 = vadd.f32 %v2349, %v2361
    %v2366 = vadd.f32 %v2350, %v2362
    %v2367 = vadd.f32 %v2351, %v2363
    %v2368 = vmul.f32 %v2364, 0.7978846
    %v2369 = vmul.f32 %v2365, 0.7978846
    %v2370 = vmul.f32 %v2366, 0.7978846
    %v2371 = vmul.f32 %v2367, 0.7978846
    %v2372 = vtanh.pop %v2368
    %v2373 = vtanh.pop %v2369
    %v2374 = vtanh.pop %v2370
    %v2375 = vtanh.pop %v2371
    %v2376 = vadd.f32 %v2372, 1.0
    %v2377 = vadd.f32 %v2373, 1.0
    %v2378 = vadd.f32 %v2374, 1.0
    %v2379 = vadd.f32 %v2375, 1.0
    %v2380 = vmul.f32 %v2376, 0.5
    %v2381 = vmul.f32 %v2377, 0.5
    %v2382 = vmul.f32 %v2378, 0.5
    %v2383 = vmul.f32 %v2379, 0.5
    %v2384 = vmul.f32 %v2348, %v2380
    %v2385 = vmul.f32 %v2349, %v2381
    %v2386 = vmul.f32 %v2350, %v2382
    %v2387 = vmul.f32 %v2351, %v2383
    %v2388 = vpack.c.bf16 %v2385, %v2384
    %v2389 = vpack.c.bf16 %v2387, %v2386
    %v2390 = vld [vmem:[%s53] sm:$0xf]
    %v2391 = vld [vmem:[%s53 + $0x4] sm:$0xf]
    %v2392 = vld [vmem:[%s55] sm:$0x1]
    %v2394 = vlaneseq
    %v2395 = vshrl.u32 %v2394, 7
    %v2396 = vsub.s32 0, %v2395
    %v2397 = vrot.slane %v2392, %v2396
    %v2401 = vunpack.c.l.b16 %v2390
    %v2402 = vunpack.c.l.b16 %v2391
    %v2403 = vpack.c.b16 %v2402, %v2401
    %v2406 = vsel %vm256, %v2388, 0
    %v2409 = vsel %vm256, %v2389, 0
    %2411 = vmatprep.subr.bf16.mxu0 0
    %2412 = vmatpush1.bf16.msra.mxu0 %v2403
    %2413 = vmatprep.subr.bf16.mxu0 0
    %2414 = vmatpush1.bf16.msra.mxu0 0
    %2415 = vmatprep.subr.bf16.mxu0 0
    %2416 = vmatpush1.bf16.msra.mxu0 0
    %2417 = vmatprep.subr.bf16.mxu0 0
    %2418 = vmatpush1.bf16.msra.mxu0 0
    %2419 = vmatprep.subr.bf16.mxu0 0
    %2420 = vmatpush1.bf16.msra.mxu0 0
    %2421 = vmatprep.subr.bf16.mxu0 0
    %2422 = vmatpush1.bf16.msra.mxu0 0
    %2423 = vmatprep.subr.bf16.mxu0 0
    %2424 = vmatpush1.bf16.msra.mxu0 0
    %2425 = vmatprep.subr.bf16.mxu0 0
    %2426 = vmatpush1.bf16.msra.mxu0 0
    %2427 = vmatprep.subr.bf16.mxu0 0
    %2428 = vmatpush1.bf16.msra.mxu0 0
    %2429 = vmatprep.subr.bf16.mxu0 0
    %2430 = vmatpush1.bf16.msra.mxu0 0
    %2431 = vmatprep.subr.bf16.mxu0 0
    %2432 = vmatpush1.bf16.msra.mxu0 0
    %2433 = vmatprep.subr.bf16.mxu0 0
    %2434 = vmatpush1.bf16.msra.mxu0 0
    %2435 = vmatprep.subr.bf16.mxu0 0
    %2436 = vmatpush1.bf16.msra.mxu0 0
    %2437 = vmatprep.subr.bf16.mxu0 0
    %2438 = vmatpush1.bf16.msra.mxu0 0
    %2439 = vmatprep.subr.bf16.mxu0 0
    %2440 = vmatpush1.bf16.msra.mxu0 0
    %2441 = vmatprep.subr.bf16.mxu0 0
    %2442 = vmatpush1.bf16.msra.mxu0 0
    %2443 = vmatprep.mubr.bf16.mxu0 0
    %2444 = vmatmul.mubr.bf16.gmra.mrb[0].mxu0 %v2406
    %v2445 = vpop.f32.mrb[0].mxu0
    %v2446 = vadd.f32 %v2397, %v2445
    %v2447 = vpop.f32.mrb[0].mxu0
    %v2448 = vpop.f32.mrb[0].mxu0
    %v2449 = vadd.f32 %v2397, %v2448
    %v2450 = vpop.f32.mrb[0].mxu0
    %2451 = vmatprep.mubr.bf16.mxu0 0
    %2452 = vmatmul.mubr.bf16.gmra.mrb[0].mxu0 %v2409
    %v2453 = vpop.f32.mrb[0].mxu0
    %v2454 = vadd.f32 %v2397, %v2453
    %v2455 = vpop.f32.mrb[0].mxu0
    %v2456 = vpop.f32.mrb[0].mxu0
    %v2457 = vadd.f32 %v2397, %v2456
    %v2458 = vpop.f32.mrb[0].mxu0
    %2459 = vdwg.mxu0
    %v2460 = vmul.f32 %v2446, %v2446
    %v2461 = vmul.f32 %v2449, %v2449
    %v2462 = vmul.f32 %v2454, %v2454
    %v2463 = vmul.f32 %v2457, %v2457
    %v2464 = vmul.f32 %v2446, %v2460
    %v2465 = vmul.f32 %v2449, %v2461
    %v2466 = vmul.f32 %v2454, %v2462
    %v2467 = vmul.f32 %v2457, %v2463
    %v2468 = vmul.f32 %v2464, 0.044715
    %v2469 = vmul.f32 %v2465, 0.044715
    %v2470 = vmul.f32 %v2466, 0.044715
    %v2471 = vmul.f32 %v2467, 0.044715
    %v2472 = vadd.f32 %v2446, %v2468
    %v2473 = vadd.f32 %v2449, %v2469
    %v2474 = vadd.f32 %v2454, %v2470
    %v2475 = vadd.f32 %v2457, %v2471
    %v2476 = vmul.f32 %v2472, 0.7978846
    %v2477 = vmul.f32 %v2473, 0.7978846
    %v2478 = vmul.f32 %v2474, 0.7978846
    %v2479 = vmul.f32 %v2475, 0.7978846
    %v2480 = vtanh.pop %v2476
    %v2481 = vtanh.pop %v2477
    %v2482 = vtanh.pop %v2478
    %v2483 = vtanh.pop %v2479
    %v2484 = vadd.f32 %v2480, 1.0
    %v2485 = vadd.f32 %v2481, 1.0
    %v2486 = vadd.f32 %v2482, 1.0
    %v2487 = vadd.f32 %v2483, 1.0
    %v2488 = vmul.f32 %v2484, 0.5
    %v2489 = vmul.f32 %v2485, 0.5
    %v2490 = vmul.f32 %v2486, 0.5
    %v2491 = vmul.f32 %v2487, 0.5
    %v2492 = vmul.f32 %v2446, %v2488
    %v2493 = vmul.f32 %v2449, %v2489
    %v2494 = vmul.f32 %v2454, %v2490
    %v2495 = vmul.f32 %v2457, %v2491
    %2496 = vst.msk [vmem:[#allocation2 + $0x5] sm:$0xff] %vm150, %v2492
    %2497 = vst.msk [vmem:[#allocation2 + $0xd] sm:$0xff] %vm150, %v2493
    %2498 = vst.msk [vmem:[#allocation2 + $0x15] sm:$0xff] %vm150, %v2494
    %2499 = vst.msk [vmem:[#allocation2 + $0x1d] sm:$0xff] %vm150, %v2495
    %v2500 = vld [vmem:[#allocation2] sm:$0xff]
    %v2501 = vld [vmem:[#allocation2 + $0x8] sm:$0xff]
    %v2502 = vld [vmem:[#allocation2 + $0x10] sm:$0xff]
    %v2503 = vld [vmem:[#allocation2 + $0x18] sm:$0xff]
    %2504 = vst.msk [vmem:[#allocation3] sm:$0xff] %vm150, %v2500
    %2505 = vst.msk [vmem:[#allocation3 + $0x8] sm:$0xff] %vm150, %v2501
    %2506 = vst.msk [vmem:[#allocation3 + $0x10] sm:$0xff] %vm150, %v2502
    %2507 = vst.msk [vmem:[#allocation3 + $0x18] sm:$0xff] %vm150, %v2503
    %v2508 = vld [vmem:[#allocation2 + $0x1] sm:$0xff]
    %v2509 = vld [vmem:[#allocation2 + $0x9] sm:$0xff]
    %v2510 = vld [vmem:[#allocation2 + $0x11] sm:$0xff]
    %v2511 = vld [vmem:[#allocation2 + $0x19] sm:$0xff]
    %2516 = vrot.lane.b32.xlu0 %v2508, 4
    %v2517 = vpop.permute.xlu0 %2516
    %2518 = vrot.lane.b32.xlu0 %v2509, 4
    %v2519 = vpop.permute.xlu0 %2518
    %2520 = vrot.lane.b32.xlu0 %v2510, 4
    %v2521 = vpop.permute.xlu0 %2520
    %2522 = vrot.lane.b32.xlu0 %v2511, 4
    %v2523 = vpop.permute.xlu0 %2522
    %2528 = vst.msk [vmem:[#allocation3] sm:$0xff] %vm452, %v2517
    %2529 = vst.msk [vmem:[#allocation3 + $0x8] sm:$0xff] %vm452, %v2519
    %2530 = vst.msk [vmem:[#allocation3 + $0x10] sm:$0xff] %vm452, %v2521
    %2531 = vst.msk [vmem:[#allocation3 + $0x18] sm:$0xff] %vm452, %v2523
    %v2532 = vld [vmem:[#allocation2 + $0x2] sm:$0xff]
    %v2533 = vld [vmem:[#allocation2 + $0xa] sm:$0xff]
    %v2534 = vld [vmem:[#allocation2 + $0x12] sm:$0xff]
    %v2535 = vld [vmem:[#allocation2 + $0x1a] sm:$0xff]
    %2540 = vrot.lane.b32.xlu0 %v2532, 8
    %v2541 = vpop.permute.xlu0 %2540
    %2542 = vrot.lane.b32.xlu0 %v2533, 8
    %v2543 = vpop.permute.xlu0 %2542
    %2544 = vrot.lane.b32.xlu0 %v2534, 8
    %v2545 = vpop.permute.xlu0 %2544
    %2546 = vrot.lane.b32.xlu0 %v2535, 8
    %v2547 = vpop.permute.xlu0 %2546
    %2552 = vst.msk [vmem:[#allocation3] sm:$0xff] %vm477, %v2541
    %2553 = vst.msk [vmem:[#allocation3 + $0x8] sm:$0xff] %vm477, %v2543
    %2554 = vst.msk [vmem:[#allocation3 + $0x10] sm:$0xff] %vm477, %v2545
    %2555 = vst.msk [vmem:[#allocation3 + $0x18] sm:$0xff] %vm477, %v2547
    %v2556 = vld [vmem:[#allocation2 + $0x4] sm:$0xff]
    %v2557 = vld [vmem:[#allocation2 + $0xc] sm:$0xff]
    %v2558 = vld [vmem:[#allocation2 + $0x14] sm:$0xff]
    %v2559 = vld [vmem:[#allocation2 + $0x1c] sm:$0xff]
    %2564 = vrot.lane.b32.xlu0 %v2556, 12
    %v2565 = vpop.permute.xlu0 %2564
    %2566 = vrot.lane.b32.xlu0 %v2557, 12
    %v2567 = vpop.permute.xlu0 %2566
    %2568 = vrot.lane.b32.xlu0 %v2558, 12
    %v2569 = vpop.permute.xlu0 %2568
    %2570 = vrot.lane.b32.xlu0 %v2559, 12
    %v2571 = vpop.permute.xlu0 %2570
    %2576 = vst.msk [vmem:[#allocation3] sm:$0xff] %vm502, %v2565
    %2577 = vst.msk [vmem:[#allocation3 + $0x8] sm:$0xff] %vm502, %v2567
    %2578 = vst.msk [vmem:[#allocation3 + $0x10] sm:$0xff] %vm502, %v2569
    %2579 = vst.msk [vmem:[#allocation3 + $0x18] sm:$0xff] %vm502, %v2571
    %v2580 = vld [vmem:[#allocation2 + $0x5] sm:$0xff]
    %v2581 = vld [vmem:[#allocation2 + $0xd] sm:$0xff]
    %v2582 = vld [vmem:[#allocation2 + $0x15] sm:$0xff]
    %v2583 = vld [vmem:[#allocation2 + $0x1d] sm:$0xff]
    %2588 = vrot.lane.b32.xlu0 %v2580, 16
    %v2589 = vpop.permute.xlu0 %2588
    %2590 = vrot.lane.b32.xlu0 %v2581, 16
    %v2591 = vpop.permute.xlu0 %2590
    %2592 = vrot.lane.b32.xlu0 %v2582, 16
    %v2593 = vpop.permute.xlu0 %2592
    %2594 = vrot.lane.b32.xlu0 %v2583, 16
    %v2595 = vpop.permute.xlu0 %2594
    %2600 = vst.msk [vmem:[#allocation3] sm:$0xff] %vm527, %v2589
    %2601 = vst.msk [vmem:[#allocation3 + $0x8] sm:$0xff] %vm527, %v2591
    %2602 = vst.msk [vmem:[#allocation3 + $0x10] sm:$0xff] %vm527, %v2593
    %2603 = vst.msk [vmem:[#allocation3 + $0x18] sm:$0xff] %vm527, %v2595
    %v2604 = vld [vmem:[#allocation2 + $0x6] sm:$0xff]
    %v2605 = vld [vmem:[#allocation2 + $0xe] sm:$0xff]
    %v2606 = vld [vmem:[#allocation2 + $0x16] sm:$0xff]
    %v2607 = vld [vmem:[#allocation2 + $0x1e] sm:$0xff]
    %2612 = vrot.lane.b32.xlu0 %v2604, 20
    %v2613 = vpop.permute.xlu0 %2612
    %2614 = vrot.lane.b32.xlu0 %v2605, 20
    %v2615 = vpop.permute.xlu0 %2614
    %2616 = vrot.lane.b32.xlu0 %v2606, 20
    %v2617 = vpop.permute.xlu0 %2616
    %2618 = vrot.lane.b32.xlu0 %v2607, 20
    %v2619 = vpop.permute.xlu0 %2618
    %2624 = vst.msk [vmem:[#allocation3] sm:$0xff] %vm552, %v2613
    %2625 = vst.msk [vmem:[#allocation3 + $0x8] sm:$0xff] %vm552, %v2615
    %2626 = vst.msk [vmem:[#allocation3 + $0x10] sm:$0xff] %vm552, %v2617
    %2627 = vst.msk [vmem:[#allocation3 + $0x18] sm:$0xff] %vm552, %v2619
    %v2628 = vld [vmem:[#allocation2 + $0x8] sm:$0xff]
    %v2629 = vld [vmem:[#allocation2 + $0x10] sm:$0xff]
    %v2630 = vld [vmem:[#allocation2 + $0x18] sm:$0xff]
    %v2631 = vld [vmem:[#allocation2 + $0x20] sm:$0xff]
    %2636 = vrot.lane.b32.xlu0 %v2628, 24
    %v2637 = vpop.permute.xlu0 %2636
    %2638 = vrot.lane.b32.xlu0 %v2629, 24
    %v2639 = vpop.permute.xlu0 %2638
    %2640 = vrot.lane.b32.xlu0 %v2630, 24
    %v2641 = vpop.permute.xlu0 %2640
    %2642 = vrot.lane.b32.xlu0 %v2631, 24
    %v2643 = vpop.permute.xlu0 %2642
    %2648 = vst.msk [vmem:[#allocation3] sm:$0xff] %vm577, %v2637
    %2649 = vst.msk [vmem:[#allocation3 + $0x8] sm:$0xff] %vm577, %v2639
    %2650 = vst.msk [vmem:[#allocation3 + $0x10] sm:$0xff] %vm577, %v2641
    %2651 = vst.msk [vmem:[#allocation3 + $0x18] sm:$0xff] %vm577, %v2643
    %v2652 = vld [vmem:[#allocation2 + $0x9] sm:$0xff]
    %v2653 = vld [vmem:[#allocation2 + $0x11] sm:$0xff]
    %v2654 = vld [vmem:[#allocation2 + $0x19] sm:$0xff]
    %v2655 = vld [vmem:[#allocation2 + $0x21] sm:$0xff]
    %2660 = vrot.lane.b32.xlu0 %v2652, 28
    %v2661 = vpop.permute.xlu0 %2660
    %2662 = vrot.lane.b32.xlu0 %v2653, 28
    %v2663 = vpop.permute.xlu0 %2662
    %2664 = vrot.lane.b32.xlu0 %v2654, 28
    %v2665 = vpop.permute.xlu0 %2664
    %2666 = vrot.lane.b32.xlu0 %v2655, 28
    %v2667 = vpop.permute.xlu0 %2666
    %2672 = vst.msk [vmem:[#allocation3] sm:$0xff] %vm602, %v2661
    %2673 = vst.msk [vmem:[#allocation3 + $0x8] sm:$0xff] %vm602, %v2663
    %2674 = vst.msk [vmem:[#allocation3 + $0x10] sm:$0xff] %vm602, %v2665
    %2675 = vst.msk [vmem:[#allocation3 + $0x18] sm:$0xff] %vm602, %v2667
    %v2676 = vld [vmem:[#allocation2 + $0xa] sm:$0xff]
    %v2677 = vld [vmem:[#allocation2 + $0x12] sm:$0xff]
    %v2678 = vld [vmem:[#allocation2 + $0x1a] sm:$0xff]
    %v2679 = vld [vmem:[#allocation2 + $0x22] sm:$0xff]
    %2684 = vrot.lane.b32.xlu0 %v2676, 32
    %v2685 = vpop.permute.xlu0 %2684
    %2686 = vrot.lane.b32.xlu0 %v2677, 32
    %v2687 = vpop.permute.xlu0 %2686
    %2688 = vrot.lane.b32.xlu0 %v2678, 32
    %v2689 = vpop.permute.xlu0 %2688
    %2690 = vrot.lane.b32.xlu0 %v2679, 32
    %v2691 = vpop.permute.xlu0 %2690
    %2696 = vst.msk [vmem:[#allocation3] sm:$0xff] %vm627, %v2685
    %2697 = vst.msk [vmem:[#allocation3 + $0x8] sm:$0xff] %vm627, %v2687
    %2698 = vst.msk [vmem:[#allocation3 + $0x10] sm:$0xff] %vm627, %v2689
    %2699 = vst.msk [vmem:[#allocation3 + $0x18] sm:$0xff] %vm627, %v2691
    %v2700 = vld [vmem:[#allocation3] sm:$0xff]
    %v2701 = vld [vmem:[#allocation3 + $0x8] sm:$0xff]
    %v2702 = vld [vmem:[#allocation3 + $0x10] sm:$0xff]
    %v2703 = vld [vmem:[#allocation3 + $0x18] sm:$0xff]
    %v2704 = vmul.f32 %v2700, %v158
    %v2705 = vmul.f32 %v2701, %v159
    %v2706 = vmul.f32 %v2702, %v160
    %v2707 = vmul.f32 %v2703, %v161
    %v2708 = vpack.c.bf16 %v2705, %v2704
    %v2709 = vpack.c.bf16 %v2707, %v2706
    %v2710 = vld [vmem:[%s57] sm:$0xf]
    %v2711 = vld [vmem:[%s57 + $0x4] sm:$0xf]
    %v2712 = vld [vmem:[%s57 + $0x8] sm:$0xf]
    %v2713 = vld [vmem:[%s57 + $0xc] sm:$0xf]
    %v2714 = vld [vmem:[%s57 + $0x10] sm:$0x3]
    %v2715 = vld [vmem:[%s59] sm:$0x1]
    %v2717 = vlaneseq
    %v2718 = vshrl.u32 %v2717, 7
    %v2719 = vsub.s32 0, %v2718
    %v2720 = vrot.slane %v2715, %v2719
    %v2727 = vunpack.c.l.b16 %v2710
    %v2728 = vunpack.c.l.b16 %v2711
    %v2729 = vunpack.c.l.b16 %v2712
    %v2730 = vunpack.c.l.b16 %v2713
    %v2731 = vunpack.c.l.b16 %v2714
    %v2732 = vpack.c.b16 %v2728, %v2727
    %v2733 = vpack.c.b16 %v2730, %v2729
    %v2734 = vpack.c.b16 %v2731, %v2731
    %v2738 = vsel %vm669, %v2708, 0
    %v2741 = vsel %vm669, %v2709, 0
    %v2744 = vsel %vm676, %v2734, 0
    %2746 = vmatprep.subr.bf16.mxu0 0
    %2747 = vmatpush1.bf16.msra.mxu0 %v2732
    %2748 = vmatprep.subr.bf16.mxu0 0
    %2749 = vmatpush1.bf16.msra.mxu0 %v2733
    %2750 = vmatprep.subr.bf16.mxu0 0
    %2751 = vmatpush1.bf16.msra.mxu0 %v2744
    %2752 = vmatprep.subr.bf16.mxu0 0
    %2753 = vmatpush1.bf16.msra.mxu0 0
    %2754 = vmatprep.subr.bf16.mxu0 0
    %2755 = vmatpush1.bf16.msra.mxu0 0
    %2756 = vmatprep.subr.bf16.mxu0 0
    %2757 = vmatpush1.bf16.msra.mxu0 0
    %2758 = vmatprep.subr.bf16.mxu0 0
    %2759 = vmatpush1.bf16.msra.mxu0 0
    %2760 = vmatprep.subr.bf16.mxu0 0
    %2761 = vmatpush1.bf16.msra.mxu0 0
    %2762 = vmatprep.subr.bf16.mxu0 0
    %2763 = vmatpush1.bf16.msra.mxu0 0
    %2764 = vmatprep.subr.bf16.mxu0 0
    %2765 = vmatpush1.bf16.msra.mxu0 0
    %2766 = vmatprep.subr.bf16.mxu0 0
    %2767 = vmatpush1.bf16.msra.mxu0 0
    %2768 = vmatprep.subr.bf16.mxu0 0
    %2769 = vmatpush1.bf16.msra.mxu0 0
    %2770 = vmatprep.subr.bf16.mxu0 0
    %2771 = vmatpush1.bf16.msra.mxu0 0
    %2772 = vmatprep.subr.bf16.mxu0 0
    %2773 = vmatpush1.bf16.msra.mxu0 0
    %2774 = vmatprep.subr.bf16.mxu0 0
    %2775 = vmatpush1.bf16.msra.mxu0 0
    %2776 = vmatprep.subr.bf16.mxu0 0
    %2777 = vmatpush1.bf16.msra.mxu0 0
    %2778 = vmatprep.mubr.bf16.mxu0 0
    %2779 = vmatmul.mubr.bf16.gmra.mrb[0].mxu0 %v2738
    %v2780 = vpop.f32.mrb[0].mxu0
    %v2781 = vadd.f32 %v2720, %v2780
    %v2782 = vpop.f32.mrb[0].mxu0
    %v2783 = vpop.f32.mrb[0].mxu0
    %v2784 = vadd.f32 %v2720, %v2783
    %v2785 = vpop.f32.mrb[0].mxu0
    %2786 = vmatprep.mubr.bf16.mxu0 0
    %2787 = vmatmul.mubr.bf16.gmra.mrb[0].mxu0 %v2741
    %v2788 = vpop.f32.mrb[0].mxu0
    %v2789 = vadd.f32 %v2720, %v2788
    %v2790 = vpop.f32.mrb[0].mxu0
    %v2791 = vpop.f32.mrb[0].mxu0
    %v2792 = vadd.f32 %v2720, %v2791
    %v2793 = vpop.f32.mrb[0].mxu0
    %2794 = vdwg.mxu0
    %v2795 = vmul.f32 %v2781, %v2781
    %v2796 = vmul.f32 %v2784, %v2784
    %v2797 = vmul.f32 %v2789, %v2789
    %v2798 = vmul.f32 %v2792, %v2792
    %v2799 = vmul.f32 %v2781, %v2795
    %v2800 = vmul.f32 %v2784, %v2796
    %v2801 = vmul.f32 %v2789, %v2797
    %v2802 = vmul.f32 %v2792, %v2798
    %v2803 = vmul.f32 %v2799, 0.044715
    %v2804 = vmul.f32 %v2800, 0.044715
    %v2805 = vmul.f32 %v2801, 0.044715
    %v2806 = vmul.f32 %v2802, 0.044715
    %v2807 = vadd.f32 %v2781, %v2803
    %v2808 = vadd.f32 %v2784, %v2804
    %v2809 = vadd.f32 %v2789, %v2805
    %v2810 = vadd.f32 %v2792, %v2806
    %v2811 = vmul.f32 %v2807, 0.7978846
    %v2812 = vmul.f32 %v2808, 0.7978846
    %v2813 = vmul.f32 %v2809, 0.7978846
    %v2814 = vmul.f32 %v2810, 0.7978846
    %v2815 = vtanh.pop %v2811
    %v2816 = vtanh.pop %v2812
    %v2817 = vtanh.pop %v2813
    %v2818 = vtanh.pop %v2814
    %v2819 = vadd.f32 %v2815, 1.0
    %v2820 = vadd.f32 %v2816, 1.0
    %v2821 = vadd.f32 %v2817, 1.0
    %v2822 = vadd.f32 %v2818, 1.0
    %v2823 = vmul.f32 %v2819, 0.5
    %v2824 = vmul.f32 %v2820, 0.5
    %v2825 = vmul.f32 %v2821, 0.5
    %v2826 = vmul.f32 %v2822, 0.5
    %v2827 = vmul.f32 %v2781, %v2823
    %v2828 = vmul.f32 %v2784, %v2824
    %v2829 = vmul.f32 %v2789, %v2825
    %v2830 = vmul.f32 %v2792, %v2826
    %2831 = vst.msk [vmem:[#allocation2 + $0x5] sm:$0xff] %vm150, %v2827
    %2832 = vst.msk [vmem:[#allocation2 + $0xd] sm:$0xff] %vm150, %v2828
    %2833 = vst.msk [vmem:[#allocation2 + $0x15] sm:$0xff] %vm150, %v2829
    %2834 = vst.msk [vmem:[#allocation2 + $0x1d] sm:$0xff] %vm150, %v2830
    %v2835 = vld [vmem:[#allocation2] sm:$0xff]
    %v2836 = vld [vmem:[#allocation2 + $0x8] sm:$0xff]
    %v2837 = vld [vmem:[#allocation2 + $0x10] sm:$0xff]
    %v2838 = vld [vmem:[#allocation2 + $0x18] sm:$0xff]
    %2839 = vst.msk [vmem:[#allocation3] sm:$0xff] %vm150, %v2835
    %2840 = vst.msk [vmem:[#allocation3 + $0x8] sm:$0xff] %vm150, %v2836
    %2841 = vst.msk [vmem:[#allocation3 + $0x10] sm:$0xff] %vm150, %v2837
    %2842 = vst.msk [vmem:[#allocation3 + $0x18] sm:$0xff] %vm150, %v2838
    %v2843 = vld [vmem:[#allocation2 + $0x1] sm:$0xff]
    %v2844 = vld [vmem:[#allocation2 + $0x9] sm:$0xff]
    %v2845 = vld [vmem:[#allocation2 + $0x11] sm:$0xff]
    %v2846 = vld [vmem:[#allocation2 + $0x19] sm:$0xff]
    %2851 = vrot.lane.b32.xlu0 %v2843, 4
    %v2852 = vpop.permute.xlu0 %2851
    %2853 = vrot.lane.b32.xlu0 %v2844, 4
    %v2854 = vpop.permute.xlu0 %2853
    %2855 = vrot.lane.b32.xlu0 %v2845, 4
    %v2856 = vpop.permute.xlu0 %2855
    %2857 = vrot.lane.b32.xlu0 %v2846, 4
    %v2858 = vpop.permute.xlu0 %2857
    %2863 = vst.msk [vmem:[#allocation3] sm:$0xff] %vm452, %v2852
    %2864 = vst.msk [vmem:[#allocation3 + $0x8] sm:$0xff] %vm452, %v2854
    %2865 = vst.msk [vmem:[#allocation3 + $0x10] sm:$0xff] %vm452, %v2856
    %2866 = vst.msk [vmem:[#allocation3 + $0x18] sm:$0xff] %vm452, %v2858
    %v2867 = vld [vmem:[#allocation2 + $0x2] sm:$0xff]
    %v2868 = vld [vmem:[#allocation2 + $0xa] sm:$0xff]
    %v2869 = vld [vmem:[#allocation2 + $0x12] sm:$0xff]
    %v2870 = vld [vmem:[#allocation2 + $0x1a] sm:$0xff]
    %2875 = vrot.lane.b32.xlu0 %v2867, 8
    %v2876 = vpop.permute.xlu0 %2875
    %2877 = vrot.lane.b32.xlu0 %v2868, 8
    %v2878 = vpop.permute.xlu0 %2877
    %2879 = vrot.lane.b32.xlu0 %v2869, 8
    %v2880 = vpop.permute.xlu0 %2879
    %2881 = vrot.lane.b32.xlu0 %v2870, 8
    %v2882 = vpop.permute.xlu0 %2881
    %2887 = vst.msk [vmem:[#allocation3] sm:$0xff] %vm477, %v2876
    %2888 = vst.msk [vmem:[#allocation3 + $0x8] sm:$0xff] %vm477, %v2878
    %2889 = vst.msk [vmem:[#allocation3 + $0x10] sm:$0xff] %vm477, %v2880
    %2890 = vst.msk [vmem:[#allocation3 + $0x18] sm:$0xff] %vm477, %v2882
    %v2891 = vld [vmem:[#allocation2 + $0x4] sm:$0xff]
    %v2892 = vld [vmem:[#allocation2 + $0xc] sm:$0xff]
    %v2893 = vld [vmem:[#allocation2 + $0x14] sm:$0xff]
    %v2894 = vld [vmem:[#allocation2 + $0x1c] sm:$0xff]
    %2899 = vrot.lane.b32.xlu0 %v2891, 12
    %v2900 = vpop.permute.xlu0 %2899
    %2901 = vrot.lane.b32.xlu0 %v2892, 12
    %v2902 = vpop.permute.xlu0 %2901
    %2903 = vrot.lane.b32.xlu0 %v2893, 12
    %v2904 = vpop.permute.xlu0 %2903
    %2905 = vrot.lane.b32.xlu0 %v2894, 12
    %v2906 = vpop.permute.xlu0 %2905
    %2911 = vst.msk [vmem:[#allocation3] sm:$0xff] %vm502, %v2900
    %2912 = vst.msk [vmem:[#allocation3 + $0x8] sm:$0xff] %vm502, %v2902
    %2913 = vst.msk [vmem:[#allocation3 + $0x10] sm:$0xff] %vm502, %v2904
    %2914 = vst.msk [vmem:[#allocation3 + $0x18] sm:$0xff] %vm502, %v2906
    %v2915 = vld [vmem:[#allocation2 + $0x5] sm:$0xff]
    %v2916 = vld [vmem:[#allocation2 + $0xd] sm:$0xff]
    %v2917 = vld [vmem:[#allocation2 + $0x15] sm:$0xff]
    %v2918 = vld [vmem:[#allocation2 + $0x1d] sm:$0xff]
    %2923 = vrot.lane.b32.xlu0 %v2915, 16
    %v2924 = vpop.permute.xlu0 %2923
    %2925 = vrot.lane.b32.xlu0 %v2916, 16
    %v2926 = vpop.permute.xlu0 %2925
    %2927 = vrot.lane.b32.xlu0 %v2917, 16
    %v2928 = vpop.permute.xlu0 %2927
    %2929 = vrot.lane.b32.xlu0 %v2918, 16
    %v2930 = vpop.permute.xlu0 %2929
    %2935 = vst.msk [vmem:[#allocation3] sm:$0xff] %vm527, %v2924
    %2936 = vst.msk [vmem:[#allocation3 + $0x8] sm:$0xff] %vm527, %v2926
    %2937 = vst.msk [vmem:[#allocation3 + $0x10] sm:$0xff] %vm527, %v2928
    %2938 = vst.msk [vmem:[#allocation3 + $0x18] sm:$0xff] %vm527, %v2930
    %v2939 = vld [vmem:[#allocation2 + $0x6] sm:$0xff]
    %v2940 = vld [vmem:[#allocation2 + $0xe] sm:$0xff]
    %v2941 = vld [vmem:[#allocation2 + $0x16] sm:$0xff]
    %v2942 = vld [vmem:[#allocation2 + $0x1e] sm:$0xff]
    %2947 = vrot.lane.b32.xlu0 %v2939, 20
    %v2948 = vpop.permute.xlu0 %2947
    %2949 = vrot.lane.b32.xlu0 %v2940, 20
    %v2950 = vpop.permute.xlu0 %2949
    %2951 = vrot.lane.b32.xlu0 %v2941, 20
    %v2952 = vpop.permute.xlu0 %2951
    %2953 = vrot.lane.b32.xlu0 %v2942, 20
    %v2954 = vpop.permute.xlu0 %2953
    %2959 = vst.msk [vmem:[#allocation3] sm:$0xff] %vm552, %v2948
    %2960 = vst.msk [vmem:[#allocation3 + $0x8] sm:$0xff] %vm552, %v2950
    %2961 = vst.msk [vmem:[#allocation3 + $0x10] sm:$0xff] %vm552, %v2952
    %2962 = vst.msk [vmem:[#allocation3 + $0x18] sm:$0xff] %vm552, %v2954
    %v2963 = vld [vmem:[#allocation2 + $0x8] sm:$0xff]
    %v2964 = vld [vmem:[#allocation2 + $0x10] sm:$0xff]
    %v2965 = vld [vmem:[#allocation2 + $0x18] sm:$0xff]
    %v2966 = vld [vmem:[#allocation2 + $0x20] sm:$0xff]
    %2971 = vrot.lane.b32.xlu0 %v2963, 24
    %v2972 = vpop.permute.xlu0 %2971
    %2973 = vrot.lane.b32.xlu0 %v2964, 24
    %v2974 = vpop.permute.xlu0 %2973
    %2975 = vrot.lane.b32.xlu0 %v2965, 24
    %v2976 = vpop.permute.xlu0 %2975
    %2977 = vrot.lane.b32.xlu0 %v2966, 24
    %v2978 = vpop.permute.xlu0 %2977
    %2983 = vst.msk [vmem:[#allocation3] sm:$0xff] %vm577, %v2972
    %2984 = vst.msk [vmem:[#allocation3 + $0x8] sm:$0xff] %vm577, %v2974
    %2985 = vst.msk [vmem:[#allocation3 + $0x10] sm:$0xff] %vm577, %v2976
    %2986 = vst.msk [vmem:[#allocation3 + $0x18] sm:$0xff] %vm577, %v2978
    %v2987 = vld [vmem:[#allocation2 + $0x9] sm:$0xff]
    %v2988 = vld [vmem:[#allocation2 + $0x11] sm:$0xff]
    %v2989 = vld [vmem:[#allocation2 + $0x19] sm:$0xff]
    %v2990 = vld [vmem:[#allocation2 + $0x21] sm:$0xff]
    %2995 = vrot.lane.b32.xlu0 %v2987, 28
    %v2996 = vpop.permute.xlu0 %2995
    %2997 = vrot.lane.b32.xlu0 %v2988, 28
    %v2998 = vpop.permute.xlu0 %2997
    %2999 = vrot.lane.b32.xlu0 %v2989, 28
    %v3000 = vpop.permute.xlu0 %2999
    %3001 = vrot.lane.b32.xlu0 %v2990, 28
    %v3002 = vpop.permute.xlu0 %3001
    %3007 = vst.msk [vmem:[#allocation3] sm:$0xff] %vm602, %v2996
    %3008 = vst.msk [vmem:[#allocation3 + $0x8] sm:$0xff] %vm602, %v2998
    %3009 = vst.msk [vmem:[#allocation3 + $0x10] sm:$0xff] %vm602, %v3000
    %3010 = vst.msk [vmem:[#allocation3 + $0x18] sm:$0xff] %vm602, %v3002
    %v3011 = vld [vmem:[#allocation2 + $0xa] sm:$0xff]
    %v3012 = vld [vmem:[#allocation2 + $0x12] sm:$0xff]
    %v3013 = vld [vmem:[#allocation2 + $0x1a] sm:$0xff]
    %v3014 = vld [vmem:[#allocation2 + $0x22] sm:$0xff]
    %3019 = vrot.lane.b32.xlu0 %v3011, 32
    %v3020 = vpop.permute.xlu0 %3019
    %3021 = vrot.lane.b32.xlu0 %v3012, 32
    %v3022 = vpop.permute.xlu0 %3021
    %3023 = vrot.lane.b32.xlu0 %v3013, 32
    %v3024 = vpop.permute.xlu0 %3023
    %3025 = vrot.lane.b32.xlu0 %v3014, 32
    %v3026 = vpop.permute.xlu0 %3025
    %3031 = vst.msk [vmem:[#allocation3] sm:$0xff] %vm627, %v3020
    %3032 = vst.msk [vmem:[#allocation3 + $0x8] sm:$0xff] %vm627, %v3022
    %3033 = vst.msk [vmem:[#allocation3 + $0x10] sm:$0xff] %vm627, %v3024
    %3034 = vst.msk [vmem:[#allocation3 + $0x18] sm:$0xff] %vm627, %v3026
    %v3035 = vld [vmem:[#allocation3] sm:$0xff]
    %v3036 = vld [vmem:[#allocation3 + $0x8] sm:$0xff]
    %v3037 = vld [vmem:[#allocation3 + $0x10] sm:$0xff]
    %v3038 = vld [vmem:[#allocation3 + $0x18] sm:$0xff]
    %v3039 = vmul.f32 %v3035, %v158
    %v3040 = vmul.f32 %v3036, %v159
    %v3041 = vmul.f32 %v3037, %v160
    %v3042 = vmul.f32 %v3038, %v161
    %v3043 = vpack.c.bf16 %v3040, %v3039
    %v3044 = vpack.c.bf16 %v3042, %v3041
    %v3045 = vld [vmem:[%s61] sm:$0xf]
    %v3046 = vld [vmem:[%s61 + $0x4] sm:$0xf]
    %v3047 = vld [vmem:[%s61 + $0x8] sm:$0xf]
    %v3048 = vld [vmem:[%s61 + $0xc] sm:$0xf]
    %v3049 = vld [vmem:[%s61 + $0x10] sm:$0x3]
    %v3050 = vld [vmem:[%s63] sm:$0x1]
    %v3052 = vlaneseq
    %v3053 = vshrl.u32 %v3052, 7
    %v3054 = vsub.s32 0, %v3053
    %v3055 = vrot.slane %v3050, %v3054
    %v3062 = vunpack.c.l.b16 %v3045
    %v3063 = vunpack.c.l.b16 %v3046
    %v3064 = vunpack.c.l.b16 %v3047
    %v3065 = vunpack.c.l.b16 %v3048
    %v3066 = vunpack.c.l.b16 %v3049
    %v3067 = vpack.c.b16 %v3063, %v3062
    %v3068 = vpack.c.b16 %v3065, %v3064
    %v3069 = vpack.c.b16 %v3066, %v3066
    %v3073 = vsel %vm669, %v3043, 0
    %v3076 = vsel %vm669, %v3044, 0
    %v3079 = vsel %vm676, %v3069, 0
    %3081 = vmatprep.subr.bf16.mxu0 0
    %3082 = vmatpush1.bf16.msra.mxu0 %v3067
    %3083 = vmatprep.subr.bf16.mxu0 0
    %3084 = vmatpush1.bf16.msra.mxu0 %v3068
    %3085 = vmatprep.subr.bf16.mxu0 0
    %3086 = vmatpush1.bf16.msra.mxu0 %v3079
    %3087 = vmatprep.subr.bf16.mxu0 0
    %3088 = vmatpush1.bf16.msra.mxu0 0
    %3089 = vmatprep.subr.bf16.mxu0 0
    %3090 = vmatpush1.bf16.msra.mxu0 0
    %3091 = vmatprep.subr.bf16.mxu0 0
    %3092 = vmatpush1.bf16.msra.mxu0 0
    %3093 = vmatprep.subr.bf16.mxu0 0
    %3094 = vmatpush1.bf16.msra.mxu0 0
    %3095 = vmatprep.subr.bf16.mxu0 0
    %3096 = vmatpush1.bf16.msra.mxu0 0
    %3097 = vmatprep.subr.bf16.mxu0 0
    %3098 = vmatpush1.bf16.msra.mxu0 0
    %3099 = vmatprep.subr.bf16.mxu0 0
    %3100 = vmatpush1.bf16.msra.mxu0 0
    %3101 = vmatprep.subr.bf16.mxu0 0
    %3102 = vmatpush1.bf16.msra.mxu0 0
    %3103 = vmatprep.subr.bf16.mxu0 0
    %3104 = vmatpush1.bf16.msra.mxu0 0
    %3105 = vmatprep.subr.bf16.mxu0 0
    %3106 = vmatpush1.bf16.msra.mxu0 0
    %3107 = vmatprep.subr.bf16.mxu0 0
    %3108 = vmatpush1.bf16.msra.mxu0 0
    %3109 = vmatprep.subr.bf16.mxu0 0
    %3110 = vmatpush1.bf16.msra.mxu0 0
    %3111 = vmatprep.subr.bf16.mxu0 0
    %3112 = vmatpush1.bf16.msra.mxu0 0
    %3113 = vmatprep.mubr.bf16.mxu0 0
    %3114 = vmatmul.mubr.bf16.gmra.mrb[0].mxu0 %v3073
    %v3115 = vpop.f32.mrb[0].mxu0
    %v3116 = vadd.f32 %v3055, %v3115
    %v3117 = vpop.f32.mrb[0].mxu0
    %v3118 = vpop.f32.mrb[0].mxu0
    %v3119 = vadd.f32 %v3055, %v3118
    %v3120 = vpop.f32.mrb[0].mxu0
    %3121 = vmatprep.mubr.bf16.mxu0 0
    %3122 = vmatmul.mubr.bf16.gmra.mrb[0].mxu0 %v3076
    %v3123 = vpop.f32.mrb[0].mxu0
    %v3124 = vadd.f32 %v3055, %v3123
    %v3125 = vpop.f32.mrb[0].mxu0
    %v3126 = vpop.f32.mrb[0].mxu0
    %v3127 = vadd.f32 %v3055, %v3126
    %v3128 = vpop.f32.mrb[0].mxu0
    %3129 = vdwg.mxu0
    %v3130 = vmul.f32 %v3116, %v3116
    %v3131 = vmul.f32 %v3119, %v3119
    %v3132 = vmul.f32 %v3124, %v3124
    %v3133 = vmul.f32 %v3127, %v3127
    %v3134 = vmul.f32 %v3116, %v3130
    %v3135 = vmul.f32 %v3119, %v3131
    %v3136 = vmul.f32 %v3124, %v3132
    %v3137 = vmul.f32 %v3127, %v3133
    %v3138 = vmul.f32 %v3134, 0.044715
    %v3139 = vmul.f32 %v3135, 0.044715
    %v3140 = vmul.f32 %v3136, 0.044715
    %v3141 = vmul.f32 %v3137, 0.044715
    %v3142 = vadd.f32 %v3116, %v3138
    %v3143 = vadd.f32 %v3119, %v3139
    %v3144 = vadd.f32 %v3124, %v3140
    %v3145 = vadd.f32 %v3127, %v3141
    %v3146 = vmul.f32 %v3142, 0.7978846
    %v3147 = vmul.f32 %v3143, 0.7978846
    %v3148 = vmul.f32 %v3144, 0.7978846
    %v3149 = vmul.f32 %v3145, 0.7978846
    %v3150 = vtanh.pop %v3146
    %v3151 = vtanh.pop %v3147
    %v3152 = vtanh.pop %v3148
    %v3153 = vtanh.pop %v3149
    %v3154 = vadd.f32 %v3150, 1.0
    %v3155 = vadd.f32 %v3151, 1.0
    %v3156 = vadd.f32 %v3152, 1.0
    %v3157 = vadd.f32 %v3153, 1.0
    %v3158 = vmul.f32 %v3154, 0.5
    %v3159 = vmul.f32 %v3155, 0.5
    %v3160 = vmul.f32 %v3156, 0.5
    %v3161 = vmul.f32 %v3157, 0.5
    %v3162 = vmul.f32 %v3116, %v3158
    %v3163 = vmul.f32 %v3119, %v3159
    %v3164 = vmul.f32 %v3124, %v3160
    %v3165 = vmul.f32 %v3127, %v3161
    %v3166 = vpack.c.bf16 %v3163, %v3162
    %v3167 = vpack.c.bf16 %v3165, %v3164
    %v3168 = vld [vmem:[%s65] sm:$0x3]
    %v3169 = vld [vmem:[%s67] sm:$0x1]
    %v3171 = vlaneseq
    %v3172 = vshrl.u32 %v3171, 7
    %v3173 = vsub.s32 0, %v3172
    %v3174 = vrot.slane %v3169, %v3173
    %v3177 = vsel %vm150, %v3166, 0
    %v3180 = vsel %vm150, %v3167, 0
    %v3183 = vsel %vm676, %v3168, 0
    %3185 = vmatprep.subr.bf16.mxu0 0
    %3186 = vmatpush1.bf16.msra.mxu0 %v3183
    %3187 = vmatprep.subr.bf16.mxu0 0
    %3188 = vmatpush1.bf16.msra.mxu0 0
    %3189 = vmatprep.subr.bf16.mxu0 0
    %3190 = vmatpush1.bf16.msra.mxu0 0
    %3191 = vmatprep.subr.bf16.mxu0 0
    %3192 = vmatpush1.bf16.msra.mxu0 0
    %3193 = vmatprep.subr.bf16.mxu0 0
    %3194 = vmatpush1.bf16.msra.mxu0 0
    %3195 = vmatprep.subr.bf16.mxu0 0
    %3196 = vmatpush1.bf16.msra.mxu0 0
    %3197 = vmatprep.subr.bf16.mxu0 0
    %3198 = vmatpush1.bf16.msra.mxu0 0
    %3199 = vmatprep.subr.bf16.mxu0 0
    %3200 = vmatpush1.bf16.msra.mxu0 0
    %3201 = vmatprep.subr.bf16.mxu0 0
    %3202 = vmatpush1.bf16.msra.mxu0 0
    %3203 = vmatprep.subr.bf16.mxu0 0
    %3204 = vmatpush1.bf16.msra.mxu0 0
    %3205 = vmatprep.subr.bf16.mxu0 0
    %3206 = vmatpush1.bf16.msra.mxu0 0
    %3207 = vmatprep.subr.bf16.mxu0 0
    %3208 = vmatpush1.bf16.msra.mxu0 0
    %3209 = vmatprep.subr.bf16.mxu0 0
    %3210 = vmatpush1.bf16.msra.mxu0 0
    %3211 = vmatprep.subr.bf16.mxu0 0
    %3212 = vmatpush1.bf16.msra.mxu0 0
    %3213 = vmatprep.subr.bf16.mxu0 0
    %3214 = vmatpush1.bf16.msra.mxu0 0
    %3215 = vmatprep.subr.bf16.mxu0 0
    %3216 = vmatpush1.bf16.msra.mxu0 0
    %3217 = vmatprep.mubr.bf16.mxu0 0
    %3218 = vmatmul.mubr.bf16.gmra.mrb[0].mxu0 %v3177
    %v3219 = vpop.f32.mrb[0].mxu0
    %v3220 = vadd.f32 %v3174, %v3219
    %v3221 = vpop.f32.mrb[0].mxu0
    %v3222 = vpop.f32.mrb[0].mxu0
    %v3223 = vadd.f32 %v3174, %v3222
    %v3224 = vpop.f32.mrb[0].mxu0
    %3225 = vmatprep.mubr.bf16.mxu0 0
    %3226 = vmatmul.mubr.bf16.gmra.mrb[0].mxu0 %v3180
    %v3227 = vpop.f32.mrb[0].mxu0
    %v3228 = vadd.f32 %v3174, %v3227
    %v3229 = vpop.f32.mrb[0].mxu0
    %v3230 = vpop.f32.mrb[0].mxu0
    %v3231 = vadd.f32 %v3174, %v3230
    %v3232 = vpop.f32.mrb[0].mxu0
    %3233 = vdwg.mxu0
    %v3234 = vadd.f32 %v2348, %v3220
    %v3235 = vadd.f32 %v2349, %v3223
    %v3236 = vadd.f32 %v2350, %v3228
    %v3237 = vadd.f32 %v2351, %v3231
    %3238 = vst.msk [vmem:[%s69] sm:$0xff] %vm256, %v3234
    %3239 = vst.msk [vmem:[%s69 + $0x8] sm:$0xff] %vm256, %v3235
    %3240 = vst.msk [vmem:[%s69 + $0x10] sm:$0xff] %vm256, %v3236
    %3241 = vst.msk [vmem:[%s69 + $0x18] sm:$0xff] %vm256, %v3237
    // Predicated region
    $region138: #{tpu_custom_call.1} parent=1 // pred_check
      _
    $region139: #{tpu_custom_call.1} parent=1 // pred_check_branch
      %3243 = sbr.rel (0) target = $region141
    $region140: #{tpu_custom_call.1} parent=1 // pred_region
      _
    $region141: #{tpu_custom_call.1} parent=1 // pred_fallthru
      _
    // Predicated region
    $region142: #{tpu_custom_call.1} parent=1 // pred_check
      _
    $region143: #{tpu_custom_call.1} parent=1 // pred_check_branch
      %3245 = sbr.rel (0) target = $region145
    $region144: #{tpu_custom_call.1} parent=1 // pred_region
      %s3247 = ssub.s32 512, 512
      %3248 = vsyncadd [#allocation5], %s3247
      %s3249 = sshll.u32 [#allocation4], 4
      %s3250 = int_to_ptr.vmem [resolvable:$true] %s3249
      %3255 = dma.vmem_to_hbm [thread:$0]  %s3250, 512, %s71, [#allocation5], 128, 128, 8
    $region145: #{tpu_custom_call.1} parent=1 // pred_fallthru
      _
    // Predicated region
    $region146: #{tpu_custom_call.1} parent=1 // pred_check
      _
    $region147: #{tpu_custom_call.1} parent=1 // pred_check_branch
      %3257 = sbr.rel (0) target = $region149
    $region148: #{tpu_custom_call.1} parent=1 // pred_region
      %s3259 = ssub.s32 512, 512
      %3260 = vsyncadd [#allocation7], %s3259
      %s3261 = sshll.u32 [#allocation6], 4
      %s3262 = int_to_ptr.vmem [resolvable:$true] %s3261
      %3267 = dma.vmem_to_hbm [thread:$0]  %s3262, 512, %s73, [#allocation7], 128, 128, 8
    $region149: #{tpu_custom_call.1} parent=1 // pred_fallthru
      _
    // Predicated region
    $region150: #{tpu_custom_call.1} parent=1 // pred_check
      _
    $region151: #{tpu_custom_call.1} parent=1 // pred_check_branch
      %3269 = sbr.rel (0) target = $region153
    $region152: #{tpu_custom_call.1} parent=1 // pred_region
      _
    $region153: #{tpu_custom_call.1} parent=1 // pred_fallthru
      _
    // Predicated region
    $region154: #{tpu_custom_call.1} parent=1 // pred_check
      _
    $region155: #{tpu_custom_call.1} parent=1 // pred_check_branch
      %3271 = sbr.rel (0) target = $region157
    $region156: #{tpu_custom_call.1} parent=1 // pred_region
      %3272 = dma.done [#allocation5], 512
    $region157: #{tpu_custom_call.1} parent=1 // pred_fallthru
      _
    // Predicated region
    $region158: #{tpu_custom_call.1} parent=1 // pred_check
      _
    $region159: #{tpu_custom_call.1} parent=1 // pred_check_branch
      %3274 = sbr.rel (0) target = $region161
    $region160: #{tpu_custom_call.1} parent=1 // pred_region
      %3275 = dma.done [#allocation7], 512
    $region161: #{tpu_custom_call.1} parent=1 // pred_fallthru
      _
    %3276 = vsyncpa [#allocation5], 1
    %3277 = vsyncpa [#allocation7], 1

</llo_original>
